<compile_context>
chip_gen: v7x
topology: tpu7x:2x2x1
jax: 0.10.0
libtpu: 0.0.40
codegen_flags: <defaults>
</compile_context>

<pallas_src>
import functools

import numpy as np
import jax
import jax.numpy as jnp
from jax.experimental import pallas as pl
from jax.experimental.pallas import tpu as pltpu

FEAT_DIM = 512
PATCH = 7          # synthetic head pools 112x112 -> 7x7 before the FC
LANE = 128


def _round_up(x, m):
    return ((x + m - 1) // m) * m


# -----------------------------------------------------------------------------
# Host-side resampling matrices (exactly matching the PyTorch ops)
# -----------------------------------------------------------------------------
def bilinear_matrix(in_size, out_size):
    """(out, in) row matrix of F.interpolate bilinear, align_corners=True."""
    R = np.zeros((out_size, in_size), dtype=np.float32)
    if out_size == 1 or in_size == 1:
        R[:, 0] = 1.0
        return R
    scale = (in_size - 1) / (out_size - 1)
    for i in range(out_size):
        src = i * scale
        i0 = int(np.floor(src))
        i1 = min(i0 + 1, in_size - 1)
        w1 = src - i0
        R[i, i0] += 1.0 - w1
        R[i, i1] += w1
    return R


def adaptive_pool_matrix(in_size, out_size):
    """(out, in) row matrix of nn.AdaptiveAvgPool2d along one axis."""
    P = np.zeros((out_size, in_size), dtype=np.float32)
    for i in range(out_size):
        s = (i * in_size) // out_size
        e = -((-(i + 1) * in_size) // out_size)  # ceil((i+1)*in/out)
        P[i, s:e] = 1.0 / (e - s)
    return P


def composed_resample_matrices(H, W):
    """Compose resize(256) -> crop(35:223, 32:220) -> pool(112) -> pool(7)."""
    P = adaptive_pool_matrix(112, PATCH) @ adaptive_pool_matrix(188, 112)  # (7,188)
    if W != 256:  # mirrors the reference: the resize is gated on W only
        Bh = bilinear_matrix(H, 256)
        Bw = bilinear_matrix(W, 256)
    else:
        Bh = np.eye(H, dtype=np.float32)
        Bw = np.eye(W, dtype=np.float32)
    r_row = P @ Bh[35:223, :]   # (7, H): left (row / height) operator
    r_col = P @ Bw[32:220, :]   # (7, W): right (column / width) operator
    return r_row, r_col


def build_idloss_params(w_fc, b_fc, C, H, W):
    """Fold row-operator + flatten + FC into one lane-padded weight."""
    r_row, r_col = composed_resample_matrices(H, W)
    CH = C * H
    CHp = _round_up(CH, LANE)                 # pad C*H to a lane multiple (192 -> 256)

    # Column operator, padded to 8 sublanes, passed ONCE (no per-image broadcast).
    rcol8 = np.zeros((8, W), dtype=np.float32)
    rcol8[:PATCH, :] = r_col

    # Synthetic head: feats = flatten(pool7(x), order (c,i,j)) @ w_fc + b_fc.
    # w2[(j, c*H+h), f] = sum_i r_row[i, h] * w_fc[(c,i,j), f], zero-padded rows.
    wfc_r = np.asarray(w_fc).reshape(C, PATCH, PATCH, FEAT_DIM)          # [c,i,j,f]
    w2 = np.einsum("ih,cijf->jchf", r_row, wfc_r).reshape(PATCH, CH, FEAT_DIM)
    w2p = np.zeros((PATCH, CHp, FEAT_DIM), dtype=np.float32)
    w2p[:, :CH, :] = w2
    w2flat = w2p.reshape(PATCH * CHp, FEAT_DIM)                          # (7*CHp, F)

    return {
        "rcol": jnp.asarray(rcol8, dtype=jnp.bfloat16),                  # (8, W)
        "w2": jnp.asarray(w2flat, dtype=jnp.bfloat16),                   # (7*CHp, F)
        "bias": jnp.asarray(b_fc, dtype=jnp.float32).reshape(1, FEAT_DIM),
    }


# -----------------------------------------------------------------------------
# Fused Pallas kernel: resample + feature head + ID loss in one launch
# -----------------------------------------------------------------------------
def _idloss_fused_kernel(rcol_ref, x_ref, w2_ref, bias_ref, o_ref, t2_ref,
                         *, batch, chpad):
    # rcol_ref: (8, W)         bf16  composed column operator (rows 7.. are zero)
    # x_ref:    (W, 2B*CHp)    bf16  stacked [y_hat; y], lane idx = b*CHp + c*H + h
    # w2_ref:   (7*CHp, F)     bf16  row-operator + flatten + FC composed weight
    # bias_ref: (1, F)         f32
    # o_ref:    (1, 1)         f32   SMEM scalar loss
    # t2_ref:   (2B, 7*CHp)    f32   VMEM scratch for the stage-1 -> stage-2 re-tile
    n_img = 2 * batch

    # Stage 1: ONE lane-dense MXU matmul over all images (f32 accumulation).
    t = jnp.dot(rcol_ref[...], x_ref[...],
                preferred_element_type=jnp.float32)          # (8, 2B*CHp)

    # Re-tile (j on sublanes, (b, r) on lanes) -> (b on sublanes, (j, r) on lanes).
    # All slices are 128-lane aligned (CHp is a multiple of 128) so these are
    # small unmasked vreg copies; this lets stage 2 be a single matmul.
    for b in range(n_img):
        for j in range(PATCH):
            t2_ref[b:b + 1, j * chpad:(j + 1) * chpad] = \
                t[j:j + 1, b * chpad:(b + 1) * chpad]

    # Stage 2: ONE matmul (2B, 7*CHp) @ (7*CHp, F), f32 accumulation.
    # Weights stay bf16 in HBM/VMEM (a full-f32 path would double the dominant
    # w2 DMA); only the tiny (2B, 7*CHp) activation is re-rounded to bf16.
    feats = jnp.dot(t2_ref[...].astype(jnp.bfloat16), w2_ref[...],
                    preferred_element_type=jnp.float32) + bias_ref[...]   # (2B, F)

    # Stage 3: loss = mean over batch of (1 - <feat_yhat, feat_y>).
    yh = feats[:batch]
    yt = feats[batch:]
    per = jnp.sum(yh * yt, axis=1, keepdims=True)            # (B, 1)
    o_ref[0, 0] = jnp.sum(1.0 - per) * (1.0 / batch)


def id_loss_forward(y_hat, y, params):
    """loss = (1 - (feat(y_hat) * feat(y)).sum(1)).mean(), fully fused."""
    B, C, H, W = y_hat.shape
    CH = C * H
    CHp = params["w2"].shape[0] // PATCH

    # Wrapper x prep: cast to bf16 FIRST (halves relayout bytes), stack y_hat/y,
    # zero-pad the C*H axis to CHp, then do exactly ONE relayout pass into the
    # kernel's (W, 2B*CHp) layout (lane idx = b*CHp + c*H + h).
    x = jnp.concatenate([y_hat.astype(jnp.bfloat16), y.astype(jnp.bfloat16)], axis=0)
    x = x.reshape(2 * B, CH, W)
    if CHp != CH:
        x = jnp.pad(x, ((0, 0), (0, CHp - CH), (0, 0)))
    x = x.transpose(2, 0, 1).reshape(W, 2 * B * CHp)         # (W, 2B*CHp) bf16

    kernel = functools.partial(_idloss_fused_kernel, batch=B, chpad=CHp)
    loss = pl.pallas_call(
        kernel,
        out_shape=jax.ShapeDtypeStruct((1, 1), jnp.float32),
        in_specs=[
            pl.BlockSpec(memory_space=pltpu.MemorySpace.VMEM),   # rcol (8, W)
            pl.BlockSpec(memory_space=pltpu.MemorySpace.VMEM),   # x    (W, 2B*CHp)
            pl.BlockSpec(memory_space=pltpu.MemorySpace.VMEM),   # w2   (7*CHp, F)
            pl.BlockSpec(memory_space=pltpu.MemorySpace.VMEM),   # bias (1, F)
        ],
        out_specs=pl.BlockSpec(memory_space=pltpu.MemorySpace.SMEM),
        scratch_shapes=[pltpu.VMEM((2 * B, PATCH * CHp), jnp.float32)],
        # Explicit scoped-VMEM budget so the whole-array residency stays safe on
        # v5e (16 MiB default) while remaining within v7x's 64 MiB physical VMEM.
        compiler_params=pltpu.CompilerParams(vmem_limit_bytes=32 * 1024 * 1024),
    )(params["rcol"], x, params["w2"], params["bias"])
    return loss[0, 0]


# -----------------------------------------------------------------------------
if __name__ == "__main__":
    key = jax.random.PRNGKey(0)
    k_yhat, k_y, k_w, k_b = jax.random.split(key, 4)

    B, C, H, W = 2, 3, 64, 64                     # small square images
    y_hat = jax.random.uniform(k_yhat, (B, C, H, W), jnp.float32, -1.0, 1.0)
    y = jax.random.uniform(k_y, (B, C, H, W), jnp.float32, -1.0, 1.0)

    # Deterministic synthetic "facenet" head parameters (same construction as
    # the unfused stub: flatten(C*7*7) -> FC(512)).
    k_in = C * PATCH * PATCH
    w_fc = jax.random.normal(k_w, (k_in, FEAT_DIM), jnp.float32) / np.sqrt(k_in)
    b_fc = jax.random.normal(k_b, (1, FEAT_DIM), jnp.float32) * 0.01

    params = build_idloss_params(w_fc, b_fc, C, H, W)
    loss_fn = jax.jit(id_loss_forward)
    loss = loss_fn(y_hat, y, params)
    jax.block_until_ready(loss)
    assert loss.shape == () and loss.dtype == jnp.float32
    print("KERNEL_OK")
</pallas_src>

<mosaic_0001>
module attributes {stable_mosaic.version = 11 : i64} {
  func.func @_idloss_fused_kernel(%arg0: memref<8x64xbf16, #tpu.memory_space<vmem>>, %arg1: memref<64x1024xbf16, #tpu.memory_space<vmem>>, %arg2: memref<1792x512xbf16, #tpu.memory_space<vmem>>, %arg3: memref<1x512xf32, #tpu.memory_space<vmem>>, %arg4: memref<1x1xf32, #tpu.memory_space<smem>>, %arg5: memref<4x1792xf32, #tpu.memory_space<vmem>>) attributes {dimension_semantics = [], scalar_prefetch = 0 : i64, scratch_operands = 1 : i64, tpu.core_type = #tpu.core_type<tc>} {
    %c0 = arith.constant 0 : index
    %c0_0 = arith.constant 0 : index
    %0 = vector.load %arg0[%c0, %c0_0] : memref<8x64xbf16, #tpu.memory_space<vmem>>, vector<8x64xbf16>
    %c0_1 = arith.constant 0 : index
    %c0_2 = arith.constant 0 : index
    %1 = vector.load %arg1[%c0_1, %c0_2] : memref<64x1024xbf16, #tpu.memory_space<vmem>>, vector<64x1024xbf16>
    %cst = arith.constant dense<0.000000e+00> : vector<8x1024xf32>
    %2 = tpu.matmul %0, %1, %cst {dimension_numbers = #tpu.dot_dimension_numbers<[1], [0], [0], [1], [0, 0, 1, 1], [], []>} : vector<8x64xbf16>, vector<64x1024xbf16>, vector<8x1024xf32> -> vector<8x1024xf32>
    %3 = vector.extract_strided_slice %2 {offsets = [0, 0], sizes = [1, 256], strides = [1, 1]} : vector<8x1024xf32> to vector<1x256xf32>
    %c0_3 = arith.constant 0 : index
    %c0_4 = arith.constant 0 : index
    %4 = vector.load %arg5[%c0_3, %c0_4] : memref<4x1792xf32, #tpu.memory_space<vmem>>, vector<1x256xf32>
    tpu.vector_store %arg5[%c0_3, %c0_4], %3 {strides = array<i32>} : memref<4x1792xf32, #tpu.memory_space<vmem>>, vector<1x256xf32>,
    %5 = vector.extract_strided_slice %2 {offsets = [1, 0], sizes = [1, 256], strides = [1, 1]} : vector<8x1024xf32> to vector<1x256xf32>
    %c0_5 = arith.constant 0 : index
    %c256 = arith.constant 256 : index
    %6 = vector.load %arg5[%c0_5, %c256] : memref<4x1792xf32, #tpu.memory_space<vmem>>, vector<1x256xf32>
    tpu.vector_store %arg5[%c0_5, %c256], %5 {strides = array<i32>} : memref<4x1792xf32, #tpu.memory_space<vmem>>, vector<1x256xf32>,
    %7 = vector.extract_strided_slice %2 {offsets = [2, 0], sizes = [1, 256], strides = [1, 1]} : vector<8x1024xf32> to vector<1x256xf32>
    %c0_6 = arith.constant 0 : index
    %c512 = arith.constant 512 : index
    %8 = vector.load %arg5[%c0_6, %c512] : memref<4x1792xf32, #tpu.memory_space<vmem>>, vector<1x256xf32>
    tpu.vector_store %arg5[%c0_6, %c512], %7 {strides = array<i32>} : memref<4x1792xf32, #tpu.memory_space<vmem>>, vector<1x256xf32>,
    %9 = vector.extract_strided_slice %2 {offsets = [3, 0], sizes = [1, 256], strides = [1, 1]} : vector<8x1024xf32> to vector<1x256xf32>
    %c0_7 = arith.constant 0 : index
    %c768 = arith.constant 768 : index
    %10 = vector.load %arg5[%c0_7, %c768] : memref<4x1792xf32, #tpu.memory_space<vmem>>, vector<1x256xf32>
    tpu.vector_store %arg5[%c0_7, %c768], %9 {strides = array<i32>} : memref<4x1792xf32, #tpu.memory_space<vmem>>, vector<1x256xf32>,
    %11 = vector.extract_strided_slice %2 {offsets = [4, 0], sizes = [1, 256], strides = [1, 1]} : vector<8x1024xf32> to vector<1x256xf32>
    %c0_8 = arith.constant 0 : index
    %c1024 = arith.constant 1024 : index
    %12 = vector.load %arg5[%c0_8, %c1024] : memref<4x1792xf32, #tpu.memory_space<vmem>>, vector<1x256xf32>
    tpu.vector_store %arg5[%c0_8, %c1024], %11 {strides = array<i32>} : memref<4x1792xf32, #tpu.memory_space<vmem>>, vector<1x256xf32>,
    %13 = vector.extract_strided_slice %2 {offsets = [5, 0], sizes = [1, 256], strides = [1, 1]} : vector<8x1024xf32> to vector<1x256xf32>
    %c0_9 = arith.constant 0 : index
    %c1280 = arith.constant 1280 : index
    %14 = vector.load %arg5[%c0_9, %c1280] : memref<4x1792xf32, #tpu.memory_space<vmem>>, vector<1x256xf32>
    tpu.vector_store %arg5[%c0_9, %c1280], %13 {strides = array<i32>} : memref<4x1792xf32, #tpu.memory_space<vmem>>, vector<1x256xf32>,
    %15 = vector.extract_strided_slice %2 {offsets = [6, 0], sizes = [1, 256], strides = [1, 1]} : vector<8x1024xf32> to vector<1x256xf32>
    %c0_10 = arith.constant 0 : index
    %c1536 = arith.constant 1536 : index
    %16 = vector.load %arg5[%c0_10, %c1536] : memref<4x1792xf32, #tpu.memory_space<vmem>>, vector<1x256xf32>
    tpu.vector_store %arg5[%c0_10, %c1536], %15 {strides = array<i32>} : memref<4x1792xf32, #tpu.memory_space<vmem>>, vector<1x256xf32>,
    %17 = vector.extract_strided_slice %2 {offsets = [0, 256], sizes = [1, 256], strides = [1, 1]} : vector<8x1024xf32> to vector<1x256xf32>
    %c1 = arith.constant 1 : index
    %c0_11 = arith.constant 0 : index
    %18 = vector.load %arg5[%c1, %c0_11] : memref<4x1792xf32, #tpu.memory_space<vmem>>, vector<1x256xf32>
    tpu.vector_store %arg5[%c1, %c0_11], %17 {strides = array<i32>} : memref<4x1792xf32, #tpu.memory_space<vmem>>, vector<1x256xf32>,
    %19 = vector.extract_strided_slice %2 {offsets = [1, 256], sizes = [1, 256], strides = [1, 1]} : vector<8x1024xf32> to vector<1x256xf32>
    %c1_12 = arith.constant 1 : index
    %c256_13 = arith.constant 256 : index
    %20 = vector.load %arg5[%c1_12, %c256_13] : memref<4x1792xf32, #tpu.memory_space<vmem>>, vector<1x256xf32>
    tpu.vector_store %arg5[%c1_12, %c256_13], %19 {strides = array<i32>} : memref<4x1792xf32, #tpu.memory_space<vmem>>, vector<1x256xf32>,
    %21 = vector.extract_strided_slice %2 {offsets = [2, 256], sizes = [1, 256], strides = [1, 1]} : vector<8x1024xf32> to vector<1x256xf32>
    %c1_14 = arith.constant 1 : index
    %c512_15 = arith.constant 512 : index
    %22 = vector.load %arg5[%c1_14, %c512_15] : memref<4x1792xf32, #tpu.memory_space<vmem>>, vector<1x256xf32>
    tpu.vector_store %arg5[%c1_14, %c512_15], %21 {strides = array<i32>} : memref<4x1792xf32, #tpu.memory_space<vmem>>, vector<1x256xf32>,
    %23 = vector.extract_strided_slice %2 {offsets = [3, 256], sizes = [1, 256], strides = [1, 1]} : vector<8x1024xf32> to vector<1x256xf32>
    %c1_16 = arith.constant 1 : index
    %c768_17 = arith.constant 768 : index
    %24 = vector.load %arg5[%c1_16, %c768_17] : memref<4x1792xf32, #tpu.memory_space<vmem>>, vector<1x256xf32>
    tpu.vector_store %arg5[%c1_16, %c768_17], %23 {strides = array<i32>} : memref<4x1792xf32, #tpu.memory_space<vmem>>, vector<1x256xf32>,
    %25 = vector.extract_strided_slice %2 {offsets = [4, 256], sizes = [1, 256], strides = [1, 1]} : vector<8x1024xf32> to vector<1x256xf32>
    %c1_18 = arith.constant 1 : index
    %c1024_19 = arith.constant 1024 : index
    %26 = vector.load %arg5[%c1_18, %c1024_19] : memref<4x1792xf32, #tpu.memory_space<vmem>>, vector<1x256xf32>
    tpu.vector_store %arg5[%c1_18, %c1024_19], %25 {strides = array<i32>} : memref<4x1792xf32, #tpu.memory_space<vmem>>, vector<1x256xf32>,
    %27 = vector.extract_strided_slice %2 {offsets = [5, 256], sizes = [1, 256], strides = [1, 1]} : vector<8x1024xf32> to vector<1x256xf32>
    %c1_20 = arith.constant 1 : index
    %c1280_21 = arith.constant 1280 : index
    %28 = vector.load %arg5[%c1_20, %c1280_21] : memref<4x1792xf32, #tpu.memory_space<vmem>>, vector<1x256xf32>
    tpu.vector_store %arg5[%c1_20, %c1280_21], %27 {strides = array<i32>} : memref<4x1792xf32, #tpu.memory_space<vmem>>, vector<1x256xf32>,
    %29 = vector.extract_strided_slice %2 {offsets = [6, 256], sizes = [1, 256], strides = [1, 1]} : vector<8x1024xf32> to vector<1x256xf32>
    %c1_22 = arith.constant 1 : index
    %c1536_23 = arith.constant 1536 : index
    %30 = vector.load %arg5[%c1_22, %c1536_23] : memref<4x1792xf32, #tpu.memory_space<vmem>>, vector<1x256xf32>
    tpu.vector_store %arg5[%c1_22, %c1536_23], %29 {strides = array<i32>} : memref<4x1792xf32, #tpu.memory_space<vmem>>, vector<1x256xf32>,
    %31 = vector.extract_strided_slice %2 {offsets = [0, 512], sizes = [1, 256], strides = [1, 1]} : vector<8x1024xf32> to vector<1x256xf32>
    %c2 = arith.constant 2 : index
    %c0_24 = arith.constant 0 : index
    %32 = vector.load %arg5[%c2, %c0_24] : memref<4x1792xf32, #tpu.memory_space<vmem>>, vector<1x256xf32>
    tpu.vector_store %arg5[%c2, %c0_24], %31 {strides = array<i32>} : memref<4x1792xf32, #tpu.memory_space<vmem>>, vector<1x256xf32>,
    %33 = vector.extract_strided_slice %2 {offsets = [1, 512], sizes = [1, 256], strides = [1, 1]} : vector<8x1024xf32> to vector<1x256xf32>
    %c2_25 = arith.constant 2 : index
    %c256_26 = arith.constant 256 : index
    %34 = vector.load %arg5[%c2_25, %c256_26] : memref<4x1792xf32, #tpu.memory_space<vmem>>, vector<1x256xf32>
    tpu.vector_store %arg5[%c2_25, %c256_26], %33 {strides = array<i32>} : memref<4x1792xf32, #tpu.memory_space<vmem>>, vector<1x256xf32>,
    %35 = vector.extract_strided_slice %2 {offsets = [2, 512], sizes = [1, 256], strides = [1, 1]} : vector<8x1024xf32> to vector<1x256xf32>
    %c2_27 = arith.constant 2 : index
    %c512_28 = arith.constant 512 : index
    %36 = vector.load %arg5[%c2_27, %c512_28] : memref<4x1792xf32, #tpu.memory_space<vmem>>, vector<1x256xf32>
    tpu.vector_store %arg5[%c2_27, %c512_28], %35 {strides = array<i32>} : memref<4x1792xf32, #tpu.memory_space<vmem>>, vector<1x256xf32>,
    %37 = vector.extract_strided_slice %2 {offsets = [3, 512], sizes = [1, 256], strides = [1, 1]} : vector<8x1024xf32> to vector<1x256xf32>
    %c2_29 = arith.constant 2 : index
    %c768_30 = arith.constant 768 : index
    %38 = vector.load %arg5[%c2_29, %c768_30] : memref<4x1792xf32, #tpu.memory_space<vmem>>, vector<1x256xf32>
    tpu.vector_store %arg5[%c2_29, %c768_30], %37 {strides = array<i32>} : memref<4x1792xf32, #tpu.memory_space<vmem>>, vector<1x256xf32>,
    %39 = vector.extract_strided_slice %2 {offsets = [4, 512], sizes = [1, 256], strides = [1, 1]} : vector<8x1024xf32> to vector<1x256xf32>
    %c2_31 = arith.constant 2 : index
    %c1024_32 = arith.constant 1024 : index
    %40 = vector.load %arg5[%c2_31, %c1024_32] : memref<4x1792xf32, #tpu.memory_space<vmem>>, vector<1x256xf32>
    tpu.vector_store %arg5[%c2_31, %c1024_32], %39 {strides = array<i32>} : memref<4x1792xf32, #tpu.memory_space<vmem>>, vector<1x256xf32>,
    %41 = vector.extract_strided_slice %2 {offsets = [5, 512], sizes = [1, 256], strides = [1, 1]} : vector<8x1024xf32> to vector<1x256xf32>
    %c2_33 = arith.constant 2 : index
    %c1280_34 = arith.constant 1280 : index
    %42 = vector.load %arg5[%c2_33, %c1280_34] : memref<4x1792xf32, #tpu.memory_space<vmem>>, vector<1x256xf32>
    tpu.vector_store %arg5[%c2_33, %c1280_34], %41 {strides = array<i32>} : memref<4x1792xf32, #tpu.memory_space<vmem>>, vector<1x256xf32>,
    %43 = vector.extract_strided_slice %2 {offsets = [6, 512], sizes = [1, 256], strides = [1, 1]} : vector<8x1024xf32> to vector<1x256xf32>
    %c2_35 = arith.constant 2 : index
    %c1536_36 = arith.constant 1536 : index
    %44 = vector.load %arg5[%c2_35, %c1536_36] : memref<4x1792xf32, #tpu.memory_space<vmem>>, vector<1x256xf32>
    tpu.vector_store %arg5[%c2_35, %c1536_36], %43 {strides = array<i32>} : memref<4x1792xf32, #tpu.memory_space<vmem>>, vector<1x256xf32>,
    %45 = vector.extract_strided_slice %2 {offsets = [0, 768], sizes = [1, 256], strides = [1, 1]} : vector<8x1024xf32> to vector<1x256xf32>
    %c3 = arith.constant 3 : index
    %c0_37 = arith.constant 0 : index
    %46 = vector.load %arg5[%c3, %c0_37] : memref<4x1792xf32, #tpu.memory_space<vmem>>, vector<1x256xf32>
    tpu.vector_store %arg5[%c3, %c0_37], %45 {strides = array<i32>} : memref<4x1792xf32, #tpu.memory_space<vmem>>, vector<1x256xf32>,
    %47 = vector.extract_strided_slice %2 {offsets = [1, 768], sizes = [1, 256], strides = [1, 1]} : vector<8x1024xf32> to vector<1x256xf32>
    %c3_38 = arith.constant 3 : index
    %c256_39 = arith.constant 256 : index
    %48 = vector.load %arg5[%c3_38, %c256_39] : memref<4x1792xf32, #tpu.memory_space<vmem>>, vector<1x256xf32>
    tpu.vector_store %arg5[%c3_38, %c256_39], %47 {strides = array<i32>} : memref<4x1792xf32, #tpu.memory_space<vmem>>, vector<1x256xf32>,
    %49 = vector.extract_strided_slice %2 {offsets = [2, 768], sizes = [1, 256], strides = [1, 1]} : vector<8x1024xf32> to vector<1x256xf32>
    %c3_40 = arith.constant 3 : index
    %c512_41 = arith.constant 512 : index
    %50 = vector.load %arg5[%c3_40, %c512_41] : memref<4x1792xf32, #tpu.memory_space<vmem>>, vector<1x256xf32>
    tpu.vector_store %arg5[%c3_40, %c512_41], %49 {strides = array<i32>} : memref<4x1792xf32, #tpu.memory_space<vmem>>, vector<1x256xf32>,
    %51 = vector.extract_strided_slice %2 {offsets = [3, 768], sizes = [1, 256], strides = [1, 1]} : vector<8x1024xf32> to vector<1x256xf32>
    %c3_42 = arith.constant 3 : index
    %c768_43 = arith.constant 768 : index
    %52 = vector.load %arg5[%c3_42, %c768_43] : memref<4x1792xf32, #tpu.memory_space<vmem>>, vector<1x256xf32>
    tpu.vector_store %arg5[%c3_42, %c768_43], %51 {strides = array<i32>} : memref<4x1792xf32, #tpu.memory_space<vmem>>, vector<1x256xf32>,
    %53 = vector.extract_strided_slice %2 {offsets = [4, 768], sizes = [1, 256], strides = [1, 1]} : vector<8x1024xf32> to vector<1x256xf32>
    %c3_44 = arith.constant 3 : index
    %c1024_45 = arith.constant 1024 : index
    %54 = vector.load %arg5[%c3_44, %c1024_45] : memref<4x1792xf32, #tpu.memory_space<vmem>>, vector<1x256xf32>
    tpu.vector_store %arg5[%c3_44, %c1024_45], %53 {strides = array<i32>} : memref<4x1792xf32, #tpu.memory_space<vmem>>, vector<1x256xf32>,
    %55 = vector.extract_strided_slice %2 {offsets = [5, 768], sizes = [1, 256], strides = [1, 1]} : vector<8x1024xf32> to vector<1x256xf32>
    %c3_46 = arith.constant 3 : index
    %c1280_47 = arith.constant 1280 : index
    %56 = vector.load %arg5[%c3_46, %c1280_47] : memref<4x1792xf32, #tpu.memory_space<vmem>>, vector<1x256xf32>
    tpu.vector_store %arg5[%c3_46, %c1280_47], %55 {strides = array<i32>} : memref<4x1792xf32, #tpu.memory_space<vmem>>, vector<1x256xf32>,
    %57 = vector.extract_strided_slice %2 {offsets = [6, 768], sizes = [1, 256], strides = [1, 1]} : vector<8x1024xf32> to vector<1x256xf32>
    %c3_48 = arith.constant 3 : index
    %c1536_49 = arith.constant 1536 : index
    %58 = vector.load %arg5[%c3_48, %c1536_49] : memref<4x1792xf32, #tpu.memory_space<vmem>>, vector<1x256xf32>
    tpu.vector_store %arg5[%c3_48, %c1536_49], %57 {strides = array<i32>} : memref<4x1792xf32, #tpu.memory_space<vmem>>, vector<1x256xf32>,
    %c0_50 = arith.constant 0 : index
    %c0_51 = arith.constant 0 : index
    %59 = vector.load %arg5[%c0_50, %c0_51] : memref<4x1792xf32, #tpu.memory_space<vmem>>, vector<4x1792xf32>
    %60 = arith.truncf %59 : vector<4x1792xf32> to vector<4x1792xbf16>
    %c0_52 = arith.constant 0 : index
    %c0_53 = arith.constant 0 : index
    %61 = vector.load %arg2[%c0_52, %c0_53] : memref<1792x512xbf16, #tpu.memory_space<vmem>>, vector<1792x512xbf16>
    %cst_54 = arith.constant dense<0.000000e+00> : vector<4x512xf32>
    %62 = tpu.matmul %60, %61, %cst_54 {dimension_numbers = #tpu.dot_dimension_numbers<[1], [0], [0], [1], [0, 0, 1, 1], [], []>} : vector<4x1792xbf16>, vector<1792x512xbf16>, vector<4x512xf32> -> vector<4x512xf32>
    %c0_55 = arith.constant 0 : index
    %c0_56 = arith.constant 0 : index
    %63 = vector.load %arg3[%c0_55, %c0_56] : memref<1x512xf32, #tpu.memory_space<vmem>>, vector<1x512xf32>
    %64 = vector.broadcast %63 : vector<1x512xf32> to vector<4x512xf32>
    %65 = arith.addf %62, %64 : vector<4x512xf32>
    %66 = vector.extract_strided_slice %65 {offsets = [0, 0], sizes = [2, 512], strides = [1, 1]} : vector<4x512xf32> to vector<2x512xf32>
    %67 = vector.extract_strided_slice %65 {offsets = [2, 0], sizes = [2, 512], strides = [1, 1]} : vector<4x512xf32> to vector<2x512xf32>
    %68 = arith.mulf %66, %67 : vector<2x512xf32>
    %cst_57 = arith.constant dense<0.000000e+00> : vector<2xf32>
    %69 = vector.multi_reduction <add>, %68, %cst_57 [1] : vector<2x512xf32> to vector<2xf32>
    %70 = vector.shape_cast %69 : vector<2xf32> to vector<2x1xf32>
    %cst_58 = arith.constant 1.000000e+00 : f32
    %71 = vector.broadcast %cst_58 : f32 to vector<2x1xf32>
    %72 = arith.subf %71, %70 : vector<2x1xf32>
    %73 = vector.shape_cast %72 : vector<2x1xf32> to vector<1x2x1xf32>
    %cst_59 = arith.constant dense<0.000000e+00> : vector<1xf32>
    %74 = vector.multi_reduction <add>, %73, %cst_59 [1, 2] : vector<1x2x1xf32> to vector<1xf32>
    %75 = vector.shape_cast %74 : vector<1xf32> to vector<1x1x1xf32>
    %76 = vector.extract %75[0, 0, 0] : f32 from vector<1x1x1xf32>
    %cst_60 = arith.constant 5.000000e-01 : f32
    %77 = arith.mulf %76, %cst_60 : f32
    %c0_61 = arith.constant 0 : index
    %c0_62 = arith.constant 0 : index
    %78 = memref.load %arg4[%c0_61, %c0_62] : memref<1x1xf32, #tpu.memory_space<smem>>
    memref.store %77, %arg4[%c0_61, %c0_62] : memref<1x1xf32, #tpu.memory_space<smem>>
    return
  }
}

</mosaic_0001>

<llo_original>
// kernel: id_loss_forward.1
$region0: #{id_loss_forward.1}
  #allocation0 [shape = 'u32[]', space=smem, size = 0x4, offset = 0x4, fixed_abs, tag = 'smem constant byte address 0x4 - core index']
  #allocation1 [shape = 'u32[144,128]{1,0:T(1,128)}', space=vmem, size = 0x12000, scoped, tag = 'internal scratch']
  #allocation2 [shape = 'f32[4,1792]{1,0:T(4,128)}', space=vmem, size = 0x7000, scoped, tag = 'scratch operand']
  %s0 = inlined_call_operand.vmem [shape: bf16[8,64], index: 0, kind: input, shape index: {}]
  %s1 = inlined_call_operand.vmem [shape: bf16[64,1024], index: 1, kind: input, shape index: {}]
  %s2 = inlined_call_operand.vmem [shape: bf16[1792,512], index: 2, kind: input, shape index: {}]
  %s3 = inlined_call_operand.vmem [shape: f32[1,512], index: 3, kind: input, shape index: {}]
  %s4 = inlined_call_operand.hbm [shape: f32[1,1], index: 4, kind: output, shape index: {}]
  %s5 = sld [smem:[#allocation0]]
  $region26: #{id_loss_forward.1} parent=0
    _
  %s7 = ssub.s32 1, %s5
  %s8 = scalar_select 0, %s7, %s5
  $region1: #{id_loss_forward.1} parent=0
    #allocation3 [shape = 'u8[512]{0}', space=smem, size = 0x200, scoped, tag = 'output window, operand 0, single buffered']
    #allocation4 [shape = 's32[1]{0}', space=sflag, size = 0x4, scoped, tag = 'scoped memory for id_loss_forward.1']
    %9 = vsyncpa [#allocation4], 0
    // Predicated region
    $region2: #{id_loss_forward.1} parent=1 // pred_check
      _
    $region3: #{id_loss_forward.1} parent=1 // pred_check_branch
      %11 = sbr.rel (0) target = $region5
    $region4: #{id_loss_forward.1} parent=1 // pred_region
      _
    $region5: #{id_loss_forward.1} parent=1 // pred_fallthru
      _
    // Predicated region
    $region6: #{id_loss_forward.1} parent=1 // pred_check
      _
    $region7: #{id_loss_forward.1} parent=1 // pred_check_branch
      %13 = sbr.rel (0) target = $region9
    $region8: #{id_loss_forward.1} parent=1 // pred_region
      _
    $region9: #{id_loss_forward.1} parent=1 // pred_fallthru
      _
    // Predicated region
    $region10: #{id_loss_forward.1} parent=1 // pred_check
      _
    $region11: #{id_loss_forward.1} parent=1 // pred_check_branch
      %15 = sbr.rel (0) target = $region13
    $region12: #{id_loss_forward.1} parent=1 // pred_region
      _
    $region13: #{id_loss_forward.1} parent=1 // pred_fallthru
      _
    // Predicated region
    $region14: #{id_loss_forward.1} parent=1 // pred_check
      _
    $region15: #{id_loss_forward.1} parent=1 // pred_check_branch
      %17 = sbr.rel (0) target = $region17
    $region16: #{id_loss_forward.1} parent=1 // pred_region
      _
    $region17: #{id_loss_forward.1} parent=1 // pred_fallthru
      _
    %v19 = vld [vmem:[%s0] sm:$0xf]
    %v20 = vld [vmem:[%s1] sm:$0xff]
    %v21 = vld [vmem:[%s1 + $0x8] sm:$0xff]
    %v22 = vld [vmem:[%s1 + $0x10] sm:$0xff]
    %v23 = vld [vmem:[%s1 + $0x18] sm:$0xff]
    %v24 = vld [vmem:[%s1 + $0x20] sm:$0xff]
    %v25 = vld [vmem:[%s1 + $0x28] sm:$0xff]
    %v26 = vld [vmem:[%s1 + $0x30] sm:$0xff]
    %v27 = vld [vmem:[%s1 + $0x38] sm:$0xff]
    %v28 = vld [vmem:[%s1 + $0x40] sm:$0xff]
    %v29 = vld [vmem:[%s1 + $0x48] sm:$0xff]
    %v30 = vld [vmem:[%s1 + $0x50] sm:$0xff]
    %v31 = vld [vmem:[%s1 + $0x58] sm:$0xff]
    %v32 = vld [vmem:[%s1 + $0x60] sm:$0xff]
    %v33 = vld [vmem:[%s1 + $0x68] sm:$0xff]
    %v34 = vld [vmem:[%s1 + $0x70] sm:$0xff]
    %v35 = vld [vmem:[%s1 + $0x78] sm:$0xff]
    %v36 = vld [vmem:[%s1 + $0x80] sm:$0xff]
    %v37 = vld [vmem:[%s1 + $0x88] sm:$0xff]
    %v38 = vld [vmem:[%s1 + $0x90] sm:$0xff]
    %v39 = vld [vmem:[%s1 + $0x98] sm:$0xff]
    %v40 = vld [vmem:[%s1 + $0xa0] sm:$0xff]
    %v41 = vld [vmem:[%s1 + $0xa8] sm:$0xff]
    %v42 = vld [vmem:[%s1 + $0xb0] sm:$0xff]
    %v43 = vld [vmem:[%s1 + $0xb8] sm:$0xff]
    %v44 = vld [vmem:[%s1 + $0xc0] sm:$0xff]
    %v45 = vld [vmem:[%s1 + $0xc8] sm:$0xff]
    %v46 = vld [vmem:[%s1 + $0xd0] sm:$0xff]
    %v47 = vld [vmem:[%s1 + $0xd8] sm:$0xff]
    %v48 = vld [vmem:[%s1 + $0xe0] sm:$0xff]
    %v49 = vld [vmem:[%s1 + $0xe8] sm:$0xff]
    %v50 = vld [vmem:[%s1 + $0xf0] sm:$0xff]
    %v51 = vld [vmem:[%s1 + $0xf8] sm:$0xff]
    %v84 = vunpack.c.l.b16 %v20
    %v85 = vunpack.c.h.b16 %v20
    %v86 = vunpack.c.l.b16 %v21
    %v87 = vunpack.c.h.b16 %v21
    %v88 = vunpack.c.l.b16 %v22
    %v89 = vunpack.c.h.b16 %v22
    %v90 = vunpack.c.l.b16 %v23
    %v91 = vunpack.c.h.b16 %v23
    %v92 = vunpack.c.l.b16 %v24
    %v93 = vunpack.c.h.b16 %v24
    %v94 = vunpack.c.l.b16 %v25
    %v95 = vunpack.c.h.b16 %v25
    %v96 = vunpack.c.l.b16 %v26
    %v97 = vunpack.c.h.b16 %v26
    %v98 = vunpack.c.l.b16 %v27
    %v99 = vunpack.c.h.b16 %v27
    %v100 = vunpack.c.l.b16 %v28
    %v101 = vunpack.c.h.b16 %v28
    %v102 = vunpack.c.l.b16 %v29
    %v103 = vunpack.c.h.b16 %v29
    %v104 = vunpack.c.l.b16 %v30
    %v105 = vunpack.c.h.b16 %v30
    %v106 = vunpack.c.l.b16 %v31
    %v107 = vunpack.c.h.b16 %v31
    %v108 = vunpack.c.l.b16 %v32
    %v109 = vunpack.c.h.b16 %v32
    %v110 = vunpack.c.l.b16 %v33
    %v111 = vunpack.c.h.b16 %v33
    %v112 = vunpack.c.l.b16 %v34
    %v113 = vunpack.c.h.b16 %v34
    %v114 = vunpack.c.l.b16 %v35
    %v115 = vunpack.c.h.b16 %v35
    %v116 = vunpack.c.l.b16 %v36
    %v117 = vunpack.c.h.b16 %v36
    %v118 = vunpack.c.l.b16 %v37
    %v119 = vunpack.c.h.b16 %v37
    %v120 = vunpack.c.l.b16 %v38
    %v121 = vunpack.c.h.b16 %v38
    %v122 = vunpack.c.l.b16 %v39
    %v123 = vunpack.c.h.b16 %v39
    %v124 = vunpack.c.l.b16 %v40
    %v125 = vunpack.c.h.b16 %v40
    %v126 = vunpack.c.l.b16 %v41
    %v127 = vunpack.c.h.b16 %v41
    %v128 = vunpack.c.l.b16 %v42
    %v129 = vunpack.c.h.b16 %v42
    %v130 = vunpack.c.l.b16 %v43
    %v131 = vunpack.c.h.b16 %v43
    %v132 = vunpack.c.l.b16 %v44
    %v133 = vunpack.c.h.b16 %v44
    %v134 = vunpack.c.l.b16 %v45
    %v135 = vunpack.c.h.b16 %v45
    %v136 = vunpack.c.l.b16 %v46
    %v137 = vunpack.c.h.b16 %v46
    %v138 = vunpack.c.l.b16 %v47
    %v139 = vunpack.c.h.b16 %v47
    %v140 = vunpack.c.l.b16 %v48
    %v141 = vunpack.c.h.b16 %v48
    %v142 = vunpack.c.l.b16 %v49
    %v143 = vunpack.c.h.b16 %v49
    %v144 = vunpack.c.l.b16 %v50
    %v145 = vunpack.c.h.b16 %v50
    %v146 = vunpack.c.l.b16 %v51
    %v147 = vunpack.c.h.b16 %v51
    %v148 = vpack.c.b16 %v92, %v84
    %v149 = vpack.c.b16 %v93, %v85
    %v150 = vpack.c.b16 %v94, %v86
    %v151 = vpack.c.b16 %v95, %v87
    %v152 = vpack.c.b16 %v96, %v88
    %v153 = vpack.c.b16 %v97, %v89
    %v154 = vpack.c.b16 %v98, %v90
    %v155 = vpack.c.b16 %v99, %v91
    %v156 = vpack.c.b16 %v108, %v100
    %v157 = vpack.c.b16 %v109, %v101
    %v158 = vpack.c.b16 %v110, %v102
    %v159 = vpack.c.b16 %v111, %v103
    %v160 = vpack.c.b16 %v112, %v104
    %v161 = vpack.c.b16 %v113, %v105
    %v162 = vpack.c.b16 %v114, %v106
    %v163 = vpack.c.b16 %v115, %v107
    %v164 = vpack.c.b16 %v124, %v116
    %v165 = vpack.c.b16 %v125, %v117
    %v166 = vpack.c.b16 %v126, %v118
    %v167 = vpack.c.b16 %v127, %v119
    %v168 = vpack.c.b16 %v128, %v120
    %v169 = vpack.c.b16 %v129, %v121
    %v170 = vpack.c.b16 %v130, %v122
    %v171 = vpack.c.b16 %v131, %v123
    %v172 = vpack.c.b16 %v140, %v132
    %v173 = vpack.c.b16 %v141, %v133
    %v174 = vpack.c.b16 %v142, %v134
    %v175 = vpack.c.b16 %v143, %v135
    %v176 = vpack.c.b16 %v144, %v136
    %v177 = vpack.c.b16 %v145, %v137
    %v178 = vpack.c.b16 %v146, %v138
    %v179 = vpack.c.b16 %v147, %v139
    %vm212 = vcmask 523264
    %v214 = vsel %vm212, %v19, 0
    %216 = vmatprep.subr.bf16.mxu0 %v149
    %217 = vmatpush1.bf16.msra.mxu0 %v148
    %218 = vmatprep.subr.bf16.mxu0 %v157
    %219 = vmatpush1.bf16.msra.mxu0 %v156
    %220 = vmatprep.subr.bf16.mxu0 %v165
    %221 = vmatpush1.bf16.msra.mxu0 %v164
    %222 = vmatprep.subr.bf16.mxu0 %v173
    %223 = vmatpush1.bf16.msra.mxu0 %v172
    %224 = vmatprep.subr.bf16.mxu0 0
    %225 = vmatpush1.bf16.msra.mxu0 0
    %226 = vmatprep.subr.bf16.mxu0 0
    %227 = vmatpush1.bf16.msra.mxu0 0
    %228 = vmatprep.subr.bf16.mxu0 0
    %229 = vmatpush1.bf16.msra.mxu0 0
    %230 = vmatprep.subr.bf16.mxu0 0
    %231 = vmatpush1.bf16.msra.mxu0 0
    %232 = vmatprep.subr.bf16.mxu0 0
    %233 = vmatpush1.bf16.msra.mxu0 0
    %234 = vmatprep.subr.bf16.mxu0 0
    %235 = vmatpush1.bf16.msra.mxu0 0
    %236 = vmatprep.subr.bf16.mxu0 0
    %237 = vmatpush1.bf16.msra.mxu0 0
    %238 = vmatprep.subr.bf16.mxu0 0
    %239 = vmatpush1.bf16.msra.mxu0 0
    %240 = vmatprep.subr.bf16.mxu0 0
    %241 = vmatpush1.bf16.msra.mxu0 0
    %242 = vmatprep.subr.bf16.mxu0 0
    %243 = vmatpush1.bf16.msra.mxu0 0
    %244 = vmatprep.subr.bf16.mxu0 0
    %245 = vmatpush1.bf16.msra.mxu0 0
    %246 = vmatprep.subr.bf16.mxu0 0
    %247 = vmatpush1.bf16.msra.mxu0 0
    %248 = vmatprep.mubr.bf16.mxu0 0
    %249 = vmatmul.mubr.bf16.gmra.mrb[0].mxu0 %v214
    %v250 = vpop.f32.mrb[0].mxu0
    %v251 = vadd.f32 0.0, %v250
    %v252 = vpop.f32.mrb[0].mxu0
    %v253 = vadd.f32 0.0, %v252
    %v254 = vpop.f32.mrb[0].mxu0
    %v255 = vpop.f32.mrb[0].mxu0
    %256 = vdwg.mxu0
    %257 = vmatprep.subr.bf16.mxu0 %v151
    %258 = vmatpush1.bf16.msra.mxu0 %v150
    %259 = vmatprep.subr.bf16.mxu0 %v159
    %260 = vmatpush1.bf16.msra.mxu0 %v158
    %261 = vmatprep.subr.bf16.mxu0 %v167
    %262 = vmatpush1.bf16.msra.mxu0 %v166
    %263 = vmatprep.subr.bf16.mxu0 %v175
    %264 = vmatpush1.bf16.msra.mxu0 %v174
    %265 = vmatprep.subr.bf16.mxu0 0
    %266 = vmatpush1.bf16.msra.mxu0 0
    %267 = vmatprep.subr.bf16.mxu0 0
    %268 = vmatpush1.bf16.msra.mxu0 0
    %269 = vmatprep.subr.bf16.mxu0 0
    %270 = vmatpush1.bf16.msra.mxu0 0
    %271 = vmatprep.subr.bf16.mxu0 0
    %272 = vmatpush1.bf16.msra.mxu0 0
    %273 = vmatprep.subr.bf16.mxu0 0
    %274 = vmatpush1.bf16.msra.mxu0 0
    %275 = vmatprep.subr.bf16.mxu0 0
    %276 = vmatpush1.bf16.msra.mxu0 0
    %277 = vmatprep.subr.bf16.mxu0 0
    %278 = vmatpush1.bf16.msra.mxu0 0
    %279 = vmatprep.subr.bf16.mxu0 0
    %280 = vmatpush1.bf16.msra.mxu0 0
    %281 = vmatprep.subr.bf16.mxu0 0
    %282 = vmatpush1.bf16.msra.mxu0 0
    %283 = vmatprep.subr.bf16.mxu0 0
    %284 = vmatpush1.bf16.msra.mxu0 0
    %285 = vmatprep.subr.bf16.mxu0 0
    %286 = vmatpush1.bf16.msra.mxu0 0
    %287 = vmatprep.subr.bf16.mxu0 0
    %288 = vmatpush1.bf16.msra.mxu0 0
    %289 = vmatprep.mubr.bf16.mxu0 0
    %290 = vmatmul.mubr.bf16.gmra.mrb[0].mxu0 %v214
    %v291 = vpop.f32.mrb[0].mxu0
    %v292 = vadd.f32 0.0, %v291
    %v293 = vpop.f32.mrb[0].mxu0
    %v294 = vadd.f32 0.0, %v293
    %v295 = vpop.f32.mrb[0].mxu0
    %v296 = vpop.f32.mrb[0].mxu0
    %297 = vdwg.mxu0
    %298 = vmatprep.subr.bf16.mxu0 %v153
    %299 = vmatpush1.bf16.msra.mxu0 %v152
    %300 = vmatprep.subr.bf16.mxu0 %v161
    %301 = vmatpush1.bf16.msra.mxu0 %v160
    %302 = vmatprep.subr.bf16.mxu0 %v169
    %303 = vmatpush1.bf16.msra.mxu0 %v168
    %304 = vmatprep.subr.bf16.mxu0 %v177
    %305 = vmatpush1.bf16.msra.mxu0 %v176
    %306 = vmatprep.subr.bf16.mxu0 0
    %307 = vmatpush1.bf16.msra.mxu0 0
    %308 = vmatprep.subr.bf16.mxu0 0
    %309 = vmatpush1.bf16.msra.mxu0 0
    %310 = vmatprep.subr.bf16.mxu0 0
    %311 = vmatpush1.bf16.msra.mxu0 0
    %312 = vmatprep.subr.bf16.mxu0 0
    %313 = vmatpush1.bf16.msra.mxu0 0
    %314 = vmatprep.subr.bf16.mxu0 0
    %315 = vmatpush1.bf16.msra.mxu0 0
    %316 = vmatprep.subr.bf16.mxu0 0
    %317 = vmatpush1.bf16.msra.mxu0 0
    %318 = vmatprep.subr.bf16.mxu0 0
    %319 = vmatpush1.bf16.msra.mxu0 0
    %320 = vmatprep.subr.bf16.mxu0 0
    %321 = vmatpush1.bf16.msra.mxu0 0
    %322 = vmatprep.subr.bf16.mxu0 0
    %323 = vmatpush1.bf16.msra.mxu0 0
    %324 = vmatprep.subr.bf16.mxu0 0
    %325 = vmatpush1.bf16.msra.mxu0 0
    %326 = vmatprep.subr.bf16.mxu0 0
    %327 = vmatpush1.bf16.msra.mxu0 0
    %328 = vmatprep.subr.bf16.mxu0 0
    %329 = vmatpush1.bf16.msra.mxu0 0
    %330 = vmatprep.mubr.bf16.mxu0 0
    %331 = vmatmul.mubr.bf16.gmra.mrb[0].mxu0 %v214
    %v332 = vpop.f32.mrb[0].mxu0
    %v333 = vadd.f32 0.0, %v332
    %v334 = vpop.f32.mrb[0].mxu0
    %v335 = vadd.f32 0.0, %v334
    %v336 = vpop.f32.mrb[0].mxu0
    %v337 = vpop.f32.mrb[0].mxu0
    %338 = vdwg.mxu0
    %339 = vmatprep.subr.bf16.mxu0 %v155
    %340 = vmatpush1.bf16.msra.mxu0 %v154
    %341 = vmatprep.subr.bf16.mxu0 %v163
    %342 = vmatpush1.bf16.msra.mxu0 %v162
    %343 = vmatprep.subr.bf16.mxu0 %v171
    %344 = vmatpush1.bf16.msra.mxu0 %v170
    %345 = vmatprep.subr.bf16.mxu0 %v179
    %346 = vmatpush1.bf16.msra.mxu0 %v178
    %347 = vmatprep.subr.bf16.mxu0 0
    %348 = vmatpush1.bf16.msra.mxu0 0
    %349 = vmatprep.subr.bf16.mxu0 0
    %350 = vmatpush1.bf16.msra.mxu0 0
    %351 = vmatprep.subr.bf16.mxu0 0
    %352 = vmatpush1.bf16.msra.mxu0 0
    %353 = vmatprep.subr.bf16.mxu0 0
    %354 = vmatpush1.bf16.msra.mxu0 0
    %355 = vmatprep.subr.bf16.mxu0 0
    %356 = vmatpush1.bf16.msra.mxu0 0
    %357 = vmatprep.subr.bf16.mxu0 0
    %358 = vmatpush1.bf16.msra.mxu0 0
    %359 = vmatprep.subr.bf16.mxu0 0
    %360 = vmatpush1.bf16.msra.mxu0 0
    %361 = vmatprep.subr.bf16.mxu0 0
    %362 = vmatpush1.bf16.msra.mxu0 0
    %363 = vmatprep.subr.bf16.mxu0 0
    %364 = vmatpush1.bf16.msra.mxu0 0
    %365 = vmatprep.subr.bf16.mxu0 0
    %366 = vmatpush1.bf16.msra.mxu0 0
    %367 = vmatprep.subr.bf16.mxu0 0
    %368 = vmatpush1.bf16.msra.mxu0 0
    %369 = vmatprep.subr.bf16.mxu0 0
    %370 = vmatpush1.bf16.msra.mxu0 0
    %371 = vmatprep.mubr.bf16.mxu0 0
    %372 = vmatmul.mubr.bf16.gmra.mrb[0].mxu0 %v214
    %v373 = vpop.f32.mrb[0].mxu0
    %v374 = vadd.f32 0.0, %v373
    %v375 = vpop.f32.mrb[0].mxu0
    %v376 = vadd.f32 0.0, %v375
    %v377 = vpop.f32.mrb[0].mxu0
    %v378 = vpop.f32.mrb[0].mxu0
    %379 = vdwg.mxu0
    %v382 = vcombine.low %v251, %v253
    %v384 = vunpack.c.l.s4 1966171168
    %v385 = vunpack.c.0.s8 %v384
    %v386 = vlaneseq
    %v387 = vshrl.u32 %v386, 7
    %v388 = vsub.s32 %v385, %v387
    %v389 = vrot.slane %v382, %v388
    %v391 = vunpack.c.l.s4 1966171168
    %v392 = vunpack.c.0.s8 %v391
    %v393 = vlaneseq
    %v394 = vshrl.u32 %v393, 7
    %v395 = vsub.s32 %v392, %v394
    %v396 = vrot.slane %v389, %v395
    %v398 = vlaneseq
    %vm399 = vcmp.ge.s32.totalorder %v398, 0
    %vm400 = vcmp.lt.s32.totalorder %v398, 256
    %vm401 = vmand %vm399, %vm400
    %402 = vst.msk [vmem:[#allocation2] ss:$4 sm:$0x3] %vm401, %v396
    %v403 = vcombine.high %v389, %v389
    %v405 = vunpack.c.l.s4 1966171168
    %v406 = vunpack.c.0.s8 %v405
    %v407 = vlaneseq
    %v408 = vshrl.u32 %v407, 7
    %v409 = vsub.s32 %v406, %v408
    %v410 = vrot.slane %v403, %v409
    %s412 = scalar_lea.vmem [#allocation2], 8
    %413 = vst.msk [vmem:[%s412] ss:$4 sm:$0x3] %vm401, %v410
    %v414 = vcombine.high %v396, %v396
    %s416 = scalar_lea.vmem [#allocation2], 16
    %417 = vst.msk [vmem:[%s416] ss:$4 sm:$0x3] %vm401, %v414
    %v418 = vcombine.high %v410, %v410
    %s420 = scalar_lea.vmem [#allocation2], 24
    %421 = vst.msk [vmem:[%s420] ss:$4 sm:$0x3] %vm401, %v418
    %v422 = vcombine.high %v251, %v253
    %v424 = vunpack.c.l.s4 1966171168
    %v425 = vunpack.c.0.s8 %v424
    %v426 = vlaneseq
    %v427 = vshrl.u32 %v426, 7
    %v428 = vsub.s32 %v425, %v427
    %v429 = vrot.slane %v422, %v428
    %v431 = vunpack.c.l.s4 1966171168
    %v432 = vunpack.c.0.s8 %v431
    %v433 = vlaneseq
    %v434 = vshrl.u32 %v433, 7
    %v435 = vsub.s32 %v432, %v434
    %v436 = vrot.slane %v429, %v435
    %s438 = scalar_lea.vmem [#allocation2], 32
    %439 = vst.msk [vmem:[%s438] ss:$4 sm:$0x3] %vm401, %v436
    %v440 = vcombine.high %v429, %v429
    %v442 = vunpack.c.l.s4 1966171168
    %v443 = vunpack.c.0.s8 %v442
    %v444 = vlaneseq
    %v445 = vshrl.u32 %v444, 7
    %v446 = vsub.s32 %v443, %v445
    %v447 = vrot.slane %v440, %v446
    %s449 = scalar_lea.vmem [#allocation2], 40
    %450 = vst.msk [vmem:[%s449] ss:$4 sm:$0x3] %vm401, %v447
    %v451 = vcombine.high %v436, %v436
    %s453 = scalar_lea.vmem [#allocation2], 48
    %454 = vst.msk [vmem:[%s453] ss:$4 sm:$0x3] %vm401, %v451
    %v457 = vcombine.low %v292, %v294
    %v459 = vunpack.c.l.s4 1966171168
    %v460 = vunpack.c.0.s8 %v459
    %v461 = vlaneseq
    %v462 = vshrl.u32 %v461, 7
    %v463 = vsub.s32 %v460, %v462
    %v464 = vrot.slane %v457, %v463
    %v466 = vunpack.c.l.s4 1966171168
    %v467 = vunpack.c.0.s8 %v466
    %v468 = vlaneseq
    %v469 = vshrl.u32 %v468, 7
    %v470 = vsub.s32 %v467, %v469
    %v471 = vrot.slane %v464, %v470
    %s473 = scalar_lea.vmem [#allocation2], 1
    %474 = vst.msk [vmem:[%s473] ss:$4 sm:$0x3] %vm401, %v471
    %v475 = vcombine.high %v464, %v464
    %v477 = vunpack.c.l.s4 1966171168
    %v478 = vunpack.c.0.s8 %v477
    %v479 = vlaneseq
    %v480 = vshrl.u32 %v479, 7
    %v481 = vsub.s32 %v478, %v480
    %v482 = vrot.slane %v475, %v481
    %s484 = scalar_lea.vmem [#allocation2], 9
    %485 = vst.msk [vmem:[%s484] ss:$4 sm:$0x3] %vm401, %v482
    %v486 = vcombine.high %v471, %v471
    %s488 = scalar_lea.vmem [#allocation2], 17
    %489 = vst.msk [vmem:[%s488] ss:$4 sm:$0x3] %vm401, %v486
    %v490 = vcombine.high %v482, %v482
    %s492 = scalar_lea.vmem [#allocation2], 25
    %493 = vst.msk [vmem:[%s492] ss:$4 sm:$0x3] %vm401, %v490
    %v494 = vcombine.high %v292, %v294
    %v496 = vunpack.c.l.s4 1966171168
    %v497 = vunpack.c.0.s8 %v496
    %v498 = vlaneseq
    %v499 = vshrl.u32 %v498, 7
    %v500 = vsub.s32 %v497, %v499
    %v501 = vrot.slane %v494, %v500
    %v503 = vunpack.c.l.s4 1966171168
    %v504 = vunpack.c.0.s8 %v503
    %v505 = vlaneseq
    %v506 = vshrl.u32 %v505, 7
    %v507 = vsub.s32 %v504, %v506
    %v508 = vrot.slane %v501, %v507
    %s510 = scalar_lea.vmem [#allocation2], 33
    %511 = vst.msk [vmem:[%s510] ss:$4 sm:$0x3] %vm401, %v508
    %v512 = vcombine.high %v501, %v501
    %v514 = vunpack.c.l.s4 1966171168
    %v515 = vunpack.c.0.s8 %v514
    %v516 = vlaneseq
    %v517 = vshrl.u32 %v516, 7
    %v518 = vsub.s32 %v515, %v517
    %v519 = vrot.slane %v512, %v518
    %s521 = scalar_lea.vmem [#allocation2], 41
    %522 = vst.msk [vmem:[%s521] ss:$4 sm:$0x3] %vm401, %v519
    %v523 = vcombine.high %v508, %v508
    %s525 = scalar_lea.vmem [#allocation2], 49
    %526 = vst.msk [vmem:[%s525] ss:$4 sm:$0x3] %vm401, %v523
    %v529 = vcombine.low %v333, %v335
    %v531 = vunpack.c.l.s4 1966171168
    %v532 = vunpack.c.0.s8 %v531
    %v533 = vlaneseq
    %v534 = vshrl.u32 %v533, 7
    %v535 = vsub.s32 %v532, %v534
    %v536 = vrot.slane %v529, %v535
    %v538 = vunpack.c.l.s4 1966171168
    %v539 = vunpack.c.0.s8 %v538
    %v540 = vlaneseq
    %v541 = vshrl.u32 %v540, 7
    %v542 = vsub.s32 %v539, %v541
    %v543 = vrot.slane %v536, %v542
    %s545 = scalar_lea.vmem [#allocation2], 2
    %546 = vst.msk [vmem:[%s545] ss:$4 sm:$0x3] %vm401, %v543
    %v547 = vcombine.high %v536, %v536
    %v549 = vunpack.c.l.s4 1966171168
    %v550 = vunpack.c.0.s8 %v549
    %v551 = vlaneseq
    %v552 = vshrl.u32 %v551, 7
    %v553 = vsub.s32 %v550, %v552
    %v554 = vrot.slane %v547, %v553
    %s556 = scalar_lea.vmem [#allocation2], 10
    %557 = vst.msk [vmem:[%s556] ss:$4 sm:$0x3] %vm401, %v554
    %v558 = vcombine.high %v543, %v543
    %s560 = scalar_lea.vmem [#allocation2], 18
    %561 = vst.msk [vmem:[%s560] ss:$4 sm:$0x3] %vm401, %v558
    %v562 = vcombine.high %v554, %v554
    %s564 = scalar_lea.vmem [#allocation2], 26
    %565 = vst.msk [vmem:[%s564] ss:$4 sm:$0x3] %vm401, %v562
    %v566 = vcombine.high %v333, %v335
    %v568 = vunpack.c.l.s4 1966171168
    %v569 = vunpack.c.0.s8 %v568
    %v570 = vlaneseq
    %v571 = vshrl.u32 %v570, 7
    %v572 = vsub.s32 %v569, %v571
    %v573 = vrot.slane %v566, %v572
    %v575 = vunpack.c.l.s4 1966171168
    %v576 = vunpack.c.0.s8 %v575
    %v577 = vlaneseq
    %v578 = vshrl.u32 %v577, 7
    %v579 = vsub.s32 %v576, %v578
    %v580 = vrot.slane %v573, %v579
    %s582 = scalar_lea.vmem [#allocation2], 34
    %583 = vst.msk [vmem:[%s582] ss:$4 sm:$0x3] %vm401, %v580
    %v584 = vcombine.high %v573, %v573
    %v586 = vunpack.c.l.s4 1966171168
    %v587 = vunpack.c.0.s8 %v586
    %v588 = vlaneseq
    %v589 = vshrl.u32 %v588, 7
    %v590 = vsub.s32 %v587, %v589
    %v591 = vrot.slane %v584, %v590
    %s593 = scalar_lea.vmem [#allocation2], 42
    %594 = vst.msk [vmem:[%s593] ss:$4 sm:$0x3] %vm401, %v591
    %v595 = vcombine.high %v580, %v580
    %s597 = scalar_lea.vmem [#allocation2], 50
    %598 = vst.msk [vmem:[%s597] ss:$4 sm:$0x3] %vm401, %v595
    %v601 = vcombine.low %v374, %v376
    %v603 = vunpack.c.l.s4 1966171168
    %v604 = vunpack.c.0.s8 %v603
    %v605 = vlaneseq
    %v606 = vshrl.u32 %v605, 7
    %v607 = vsub.s32 %v604, %v606
    %v608 = vrot.slane %v601, %v607
    %v610 = vunpack.c.l.s4 1966171168
    %v611 = vunpack.c.0.s8 %v610
    %v612 = vlaneseq
    %v613 = vshrl.u32 %v612, 7
    %v614 = vsub.s32 %v611, %v613
    %v615 = vrot.slane %v608, %v614
    %s617 = scalar_lea.vmem [#allocation2], 3
    %618 = vst.msk [vmem:[%s617] ss:$4 sm:$0x3] %vm401, %v615
    %v619 = vcombine.high %v608, %v608
    %v621 = vunpack.c.l.s4 1966171168
    %v622 = vunpack.c.0.s8 %v621
    %v623 = vlaneseq
    %v624 = vshrl.u32 %v623, 7
    %v625 = vsub.s32 %v622, %v624
    %v626 = vrot.slane %v619, %v625
    %s628 = scalar_lea.vmem [#allocation2], 11
    %629 = vst.msk [vmem:[%s628] ss:$4 sm:$0x3] %vm401, %v626
    %v630 = vcombine.high %v615, %v615
    %s632 = scalar_lea.vmem [#allocation2], 19
    %633 = vst.msk [vmem:[%s632] ss:$4 sm:$0x3] %vm401, %v630
    %v634 = vcombine.high %v626, %v626
    %s636 = scalar_lea.vmem [#allocation2], 27
    %637 = vst.msk [vmem:[%s636] ss:$4 sm:$0x3] %vm401, %v634
    %v638 = vcombine.high %v374, %v376
    %v640 = vunpack.c.l.s4 1966171168
    %v641 = vunpack.c.0.s8 %v640
    %v642 = vlaneseq
    %v643 = vshrl.u32 %v642, 7
    %v644 = vsub.s32 %v641, %v643
    %v645 = vrot.slane %v638, %v644
    %v647 = vunpack.c.l.s4 1966171168
    %v648 = vunpack.c.0.s8 %v647
    %v649 = vlaneseq
    %v650 = vshrl.u32 %v649, 7
    %v651 = vsub.s32 %v648, %v650
    %v652 = vrot.slane %v645, %v651
    %s654 = scalar_lea.vmem [#allocation2], 35
    %655 = vst.msk [vmem:[%s654] ss:$4 sm:$0x3] %vm401, %v652
    %v656 = vcombine.high %v645, %v645
    %v658 = vunpack.c.l.s4 1966171168
    %v659 = vunpack.c.0.s8 %v658
    %v660 = vlaneseq
    %v661 = vshrl.u32 %v660, 7
    %v662 = vsub.s32 %v659, %v661
    %v663 = vrot.slane %v656, %v662
    %s665 = scalar_lea.vmem [#allocation2], 43
    %666 = vst.msk [vmem:[%s665] ss:$4 sm:$0x3] %vm401, %v663
    %v667 = vcombine.high %v652, %v652
    %s669 = scalar_lea.vmem [#allocation2], 51
    %670 = vst.msk [vmem:[%s669] ss:$4 sm:$0x3] %vm401, %v667
    %v671 = vld [vmem:[#allocation2] sm:$0xff]
    %v672 = vld [vmem:[#allocation2 + $0x8] sm:$0xff]
    %v673 = vld [vmem:[#allocation2 + $0x10] sm:$0xff]
    %v674 = vld [vmem:[#allocation2 + $0x18] sm:$0xff]
    %v675 = vld [vmem:[#allocation2 + $0x20] sm:$0xff]
    %v676 = vld [vmem:[#allocation2 + $0x28] sm:$0xff]
    %v677 = vld [vmem:[#allocation2 + $0x30] sm:$0xff]
    %v685 = vcombine.high %v671, %v671
    %v686 = vcombine.high %v672, %v672
    %v687 = vcombine.high %v673, %v673
    %v688 = vcombine.high %v674, %v674
    %v689 = vcombine.high %v675, %v675
    %v690 = vcombine.high %v676, %v676
    %v691 = vcombine.high %v677, %v677
    %v699 = vpack.c.bf16 %v671, %v671
    %v700 = vpack.c.bf16 %v685, %v685
    %v701 = vpack.c.bf16 %v672, %v672
    %v702 = vpack.c.bf16 %v686, %v686
    %v703 = vpack.c.bf16 %v673, %v673
    %v704 = vpack.c.bf16 %v687, %v687
    %v705 = vpack.c.bf16 %v674, %v674
    %v706 = vpack.c.bf16 %v688, %v688
    %v707 = vpack.c.bf16 %v675, %v675
    %v708 = vpack.c.bf16 %v689, %v689
    %v709 = vpack.c.bf16 %v676, %v676
    %v710 = vpack.c.bf16 %v690, %v690
    %v711 = vpack.c.bf16 %v677, %v677
    %v712 = vpack.c.bf16 %v691, %v691
    %v713 = vld [vmem:[%s2] sm:$0xff]
    %v714 = vld [vmem:[%s2 + $0x8] sm:$0xff]
    %v715 = vld [vmem:[%s2 + $0x10] sm:$0xff]
    %v716 = vld [vmem:[%s2 + $0x18] sm:$0xff]
    %v717 = vld [vmem:[%s2 + $0x20] sm:$0xff]
    %v718 = vld [vmem:[%s2 + $0x28] sm:$0xff]
    %v719 = vld [vmem:[%s2 + $0x30] sm:$0xff]
    %v720 = vld [vmem:[%s2 + $0x38] sm:$0xff]
    %v721 = vld [vmem:[%s2 + $0x40] sm:$0xff]
    %v722 = vld [vmem:[%s2 + $0x48] sm:$0xff]
    %v723 = vld [vmem:[%s2 + $0x50] sm:$0xff]
    %v724 = vld [vmem:[%s2 + $0x58] sm:$0xff]
    %v725 = vld [vmem:[%s2 + $0x60] sm:$0xff]
    %v726 = vld [vmem:[%s2 + $0x68] sm:$0xff]
    %v727 = vld [vmem:[%s2 + $0x70] sm:$0xff]
    %v728 = vld [vmem:[%s2 + $0x78] sm:$0xff]
    %v729 = vld [vmem:[%s2 + $0x80] sm:$0xff]
    %v730 = vld [vmem:[%s2 + $0x88] sm:$0xff]
    %v731 = vld [vmem:[%s2 + $0x90] sm:$0xff]
    %v732 = vld [vmem:[%s2 + $0x98] sm:$0xff]
    %v733 = vld [vmem:[%s2 + $0xa0] sm:$0xff]
    %v734 = vld [vmem:[%s2 + $0xa8] sm:$0xff]
    %v735 = vld [vmem:[%s2 + $0xb0] sm:$0xff]
    %v736 = vld [vmem:[%s2 + $0xb8] sm:$0xff]
    %v737 = vld [vmem:[%s2 + $0xc0] sm:$0xff]
    %v738 = vld [vmem:[%s2 + $0xc8] sm:$0xff]
    %v739 = vld [vmem:[%s2 + $0xd0] sm:$0xff]
    %v740 = vld [vmem:[%s2 + $0xd8] sm:$0xff]
    %v741 = vld [vmem:[%s2 + $0xe0] sm:$0xff]
    %v742 = vld [vmem:[%s2 + $0xe8] sm:$0xff]
    %v743 = vld [vmem:[%s2 + $0xf0] sm:$0xff]
    %v744 = vld [vmem:[%s2 + $0xf8] sm:$0xff]
    %v745 = vld [vmem:[%s2 + $0x100] sm:$0xff]
    %v746 = vld [vmem:[%s2 + $0x108] sm:$0xff]
    %v747 = vld [vmem:[%s2 + $0x110] sm:$0xff]
    %v748 = vld [vmem:[%s2 + $0x118] sm:$0xff]
    %v749 = vld [vmem:[%s2 + $0x120] sm:$0xff]
    %v750 = vld [vmem:[%s2 + $0x128] sm:$0xff]
    %v751 = vld [vmem:[%s2 + $0x130] sm:$0xff]
    %v752 = vld [vmem:[%s2 + $0x138] sm:$0xff]
    %v753 = vld [vmem:[%s2 + $0x140] sm:$0xff]
    %v754 = vld [vmem:[%s2 + $0x148] sm:$0xff]
    %v755 = vld [vmem:[%s2 + $0x150] sm:$0xff]
    %v756 = vld [vmem:[%s2 + $0x158] sm:$0xff]
    %v757 = vld [vmem:[%s2 + $0x160] sm:$0xff]
    %v758 = vld [vmem:[%s2 + $0x168] sm:$0xff]
    %v759 = vld [vmem:[%s2 + $0x170] sm:$0xff]
    %v760 = vld [vmem:[%s2 + $0x178] sm:$0xff]
    %v761 = vld [vmem:[%s2 + $0x180] sm:$0xff]
    %v762 = vld [vmem:[%s2 + $0x188] sm:$0xff]
    %v763 = vld [vmem:[%s2 + $0x190] sm:$0xff]
    %v764 = vld [vmem:[%s2 + $0x198] sm:$0xff]
    %v765 = vld [vmem:[%s2 + $0x1a0] sm:$0xff]
    %v766 = vld [vmem:[%s2 + $0x1a8] sm:$0xff]
    %v767 = vld [vmem:[%s2 + $0x1b0] sm:$0xff]
    %v768 = vld [vmem:[%s2 + $0x1b8] sm:$0xff]
    %v769 = vld [vmem:[%s2 + $0x1c0] sm:$0xff]
    %v770 = vld [vmem:[%s2 + $0x1c8] sm:$0xff]
    %v771 = vld [vmem:[%s2 + $0x1d0] sm:$0xff]
    %v772 = vld [vmem:[%s2 + $0x1d8] sm:$0xff]
    %v773 = vld [vmem:[%s2 + $0x1e0] sm:$0xff]
    %v774 = vld [vmem:[%s2 + $0x1e8] sm:$0xff]
    %v775 = vld [vmem:[%s2 + $0x1f0] sm:$0xff]
    %v776 = vld [vmem:[%s2 + $0x1f8] sm:$0xff]
    %v777 = vld [vmem:[%s2 + $0x200] sm:$0xff]
    %v778 = vld [vmem:[%s2 + $0x208] sm:$0xff]
    %v779 = vld [vmem:[%s2 + $0x210] sm:$0xff]
    %v780 = vld [vmem:[%s2 + $0x218] sm:$0xff]
    %v781 = vld [vmem:[%s2 + $0x220] sm:$0xff]
    %v782 = vld [vmem:[%s2 + $0x228] sm:$0xff]
    %v783 = vld [vmem:[%s2 + $0x230] sm:$0xff]
    %v784 = vld [vmem:[%s2 + $0x238] sm:$0xff]
    %v785 = vld [vmem:[%s2 + $0x240] sm:$0xff]
    %v786 = vld [vmem:[%s2 + $0x248] sm:$0xff]
    %v787 = vld [vmem:[%s2 + $0x250] sm:$0xff]
    %v788 = vld [vmem:[%s2 + $0x258] sm:$0xff]
    %v789 = vld [vmem:[%s2 + $0x260] sm:$0xff]
    %v790 = vld [vmem:[%s2 + $0x268] sm:$0xff]
    %v791 = vld [vmem:[%s2 + $0x270] sm:$0xff]
    %v792 = vld [vmem:[%s2 + $0x278] sm:$0xff]
    %v793 = vld [vmem:[%s2 + $0x280] sm:$0xff]
    %v794 = vld [vmem:[%s2 + $0x288] sm:$0xff]
    %v795 = vld [vmem:[%s2 + $0x290] sm:$0xff]
    %v796 = vld [vmem:[%s2 + $0x298] sm:$0xff]
    %v797 = vld [vmem:[%s2 + $0x2a0] sm:$0xff]
    %v798 = vld [vmem:[%s2 + $0x2a8] sm:$0xff]
    %v799 = vld [vmem:[%s2 + $0x2b0] sm:$0xff]
    %v800 = vld [vmem:[%s2 + $0x2b8] sm:$0xff]
    %v801 = vld [vmem:[%s2 + $0x2c0] sm:$0xff]
    %v802 = vld [vmem:[%s2 + $0x2c8] sm:$0xff]
    %v803 = vld [vmem:[%s2 + $0x2d0] sm:$0xff]
    %v804 = vld [vmem:[%s2 + $0x2d8] sm:$0xff]
    %v805 = vld [vmem:[%s2 + $0x2e0] sm:$0xff]
    %v806 = vld [vmem:[%s2 + $0x2e8] sm:$0xff]
    %v807 = vld [vmem:[%s2 + $0x2f0] sm:$0xff]
    %v808 = vld [vmem:[%s2 + $0x2f8] sm:$0xff]
    %v809 = vld [vmem:[%s2 + $0x300] sm:$0xff]
    %v810 = vld [vmem:[%s2 + $0x308] sm:$0xff]
    %v811 = vld [vmem:[%s2 + $0x310] sm:$0xff]
    %v812 = vld [vmem:[%s2 + $0x318] sm:$0xff]
    %v813 = vld [vmem:[%s2 + $0x320] sm:$0xff]
    %v814 = vld [vmem:[%s2 + $0x328] sm:$0xff]
    %v815 = vld [vmem:[%s2 + $0x330] sm:$0xff]
    %v816 = vld [vmem:[%s2 + $0x338] sm:$0xff]
    %v817 = vld [vmem:[%s2 + $0x340] sm:$0xff]
    %v818 = vld [vmem:[%s2 + $0x348] sm:$0xff]
    %v819 = vld [vmem:[%s2 + $0x350] sm:$0xff]
    %v820 = vld [vmem:[%s2 + $0x358] sm:$0xff]
    %v821 = vld [vmem:[%s2 + $0x360] sm:$0xff]
    %v822 = vld [vmem:[%s2 + $0x368] sm:$0xff]
    %v823 = vld [vmem:[%s2 + $0x370] sm:$0xff]
    %v824 = vld [vmem:[%s2 + $0x378] sm:$0xff]
    %v825 = vld [vmem:[%s2 + $0x380] sm:$0xff]
    %v826 = vld [vmem:[%s2 + $0x388] sm:$0xff]
    %v827 = vld [vmem:[%s2 + $0x390] sm:$0xff]
    %v828 = vld [vmem:[%s2 + $0x398] sm:$0xff]
    %v829 = vld [vmem:[%s2 + $0x3a0] sm:$0xff]
    %v830 = vld [vmem:[%s2 + $0x3a8] sm:$0xff]
    %v831 = vld [vmem:[%s2 + $0x3b0] sm:$0xff]
    %v832 = vld [vmem:[%s2 + $0x3b8] sm:$0xff]
    %v833 = vld [vmem:[%s2 + $0x3c0] sm:$0xff]
    %v834 = vld [vmem:[%s2 + $0x3c8] sm:$0xff]
    %v835 = vld [vmem:[%s2 + $0x3d0] sm:$0xff]
    %v836 = vld [vmem:[%s2 + $0x3d8] sm:$0xff]
    %v837 = vld [vmem:[%s2 + $0x3e0] sm:$0xff]
    %v838 = vld [vmem:[%s2 + $0x3e8] sm:$0xff]
    %v839 = vld [vmem:[%s2 + $0x3f0] sm:$0xff]
    %v840 = vld [vmem:[%s2 + $0x3f8] sm:$0xff]
    %v841 = vld [vmem:[%s2 + $0x400] sm:$0xff]
    %v842 = vld [vmem:[%s2 + $0x408] sm:$0xff]
    %v843 = vld [vmem:[%s2 + $0x410] sm:$0xff]
    %v844 = vld [vmem:[%s2 + $0x418] sm:$0xff]
    %v845 = vld [vmem:[%s2 + $0x420] sm:$0xff]
    %v846 = vld [vmem:[%s2 + $0x428] sm:$0xff]
    %v847 = vld [vmem:[%s2 + $0x430] sm:$0xff]
    %v848 = vld [vmem:[%s2 + $0x438] sm:$0xff]
    %v849 = vld [vmem:[%s2 + $0x440] sm:$0xff]
    %v850 = vld [vmem:[%s2 + $0x448] sm:$0xff]
    %v851 = vld [vmem:[%s2 + $0x450] sm:$0xff]
    %v852 = vld [vmem:[%s2 + $0x458] sm:$0xff]
    %v853 = vld [vmem:[%s2 + $0x460] sm:$0xff]
    %v854 = vld [vmem:[%s2 + $0x468] sm:$0xff]
    %v855 = vld [vmem:[%s2 + $0x470] sm:$0xff]
    %v856 = vld [vmem:[%s2 + $0x478] sm:$0xff]
    %v857 = vld [vmem:[%s2 + $0x480] sm:$0xff]
    %v858 = vld [vmem:[%s2 + $0x488] sm:$0xff]
    %v859 = vld [vmem:[%s2 + $0x490] sm:$0xff]
    %v860 = vld [vmem:[%s2 + $0x498] sm:$0xff]
    %v861 = vld [vmem:[%s2 + $0x4a0] sm:$0xff]
    %v862 = vld [vmem:[%s2 + $0x4a8] sm:$0xff]
    %v863 = vld [vmem:[%s2 + $0x4b0] sm:$0xff]
    %v864 = vld [vmem:[%s2 + $0x4b8] sm:$0xff]
    %v865 = vld [vmem:[%s2 + $0x4c0] sm:$0xff]
    %v866 = vld [vmem:[%s2 + $0x4c8] sm:$0xff]
    %v867 = vld [vmem:[%s2 + $0x4d0] sm:$0xff]
    %v868 = vld [vmem:[%s2 + $0x4d8] sm:$0xff]
    %v869 = vld [vmem:[%s2 + $0x4e0] sm:$0xff]
    %v870 = vld [vmem:[%s2 + $0x4e8] sm:$0xff]
    %v871 = vld [vmem:[%s2 + $0x4f0] sm:$0xff]
    %v872 = vld [vmem:[%s2 + $0x4f8] sm:$0xff]
    %v873 = vld [vmem:[%s2 + $0x500] sm:$0xff]
    %v874 = vld [vmem:[%s2 + $0x508] sm:$0xff]
    %v875 = vld [vmem:[%s2 + $0x510] sm:$0xff]
    %v876 = vld [vmem:[%s2 + $0x518] sm:$0xff]
    %v877 = vld [vmem:[%s2 + $0x520] sm:$0xff]
    %v878 = vld [vmem:[%s2 + $0x528] sm:$0xff]
    %v879 = vld [vmem:[%s2 + $0x530] sm:$0xff]
    %v880 = vld [vmem:[%s2 + $0x538] sm:$0xff]
    %v881 = vld [vmem:[%s2 + $0x540] sm:$0xff]
    %v882 = vld [vmem:[%s2 + $0x548] sm:$0xff]
    %v883 = vld [vmem:[%s2 + $0x550] sm:$0xff]
    %v884 = vld [vmem:[%s2 + $0x558] sm:$0xff]
    %v885 = vld [vmem:[%s2 + $0x560] sm:$0xff]
    %v886 = vld [vmem:[%s2 + $0x568] sm:$0xff]
    %v887 = vld [vmem:[%s2 + $0x570] sm:$0xff]
    %v888 = vld [vmem:[%s2 + $0x578] sm:$0xff]
    %v889 = vld [vmem:[%s2 + $0x580] sm:$0xff]
    %v890 = vld [vmem:[%s2 + $0x588] sm:$0xff]
    %v891 = vld [vmem:[%s2 + $0x590] sm:$0xff]
    %v892 = vld [vmem:[%s2 + $0x598] sm:$0xff]
    %v893 = vld [vmem:[%s2 + $0x5a0] sm:$0xff]
    %v894 = vld [vmem:[%s2 + $0x5a8] sm:$0xff]
    %v895 = vld [vmem:[%s2 + $0x5b0] sm:$0xff]
    %v896 = vld [vmem:[%s2 + $0x5b8] sm:$0xff]
    %v897 = vld [vmem:[%s2 + $0x5c0] sm:$0xff]
    %v898 = vld [vmem:[%s2 + $0x5c8] sm:$0xff]
    %v899 = vld [vmem:[%s2 + $0x5d0] sm:$0xff]
    %v900 = vld [vmem:[%s2 + $0x5d8] sm:$0xff]
    %v901 = vld [vmem:[%s2 + $0x5e0] sm:$0xff]
    %v902 = vld [vmem:[%s2 + $0x5e8] sm:$0xff]
    %v903 = vld [vmem:[%s2 + $0x5f0] sm:$0xff]
    %v904 = vld [vmem:[%s2 + $0x5f8] sm:$0xff]
    %v905 = vld [vmem:[%s2 + $0x600] sm:$0xff]
    %v906 = vld [vmem:[%s2 + $0x608] sm:$0xff]
    %v907 = vld [vmem:[%s2 + $0x610] sm:$0xff]
    %v908 = vld [vmem:[%s2 + $0x618] sm:$0xff]
    %v909 = vld [vmem:[%s2 + $0x620] sm:$0xff]
    %v910 = vld [vmem:[%s2 + $0x628] sm:$0xff]
    %v911 = vld [vmem:[%s2 + $0x630] sm:$0xff]
    %v912 = vld [vmem:[%s2 + $0x638] sm:$0xff]
    %v913 = vld [vmem:[%s2 + $0x640] sm:$0xff]
    %v914 = vld [vmem:[%s2 + $0x648] sm:$0xff]
    %v915 = vld [vmem:[%s2 + $0x650] sm:$0xff]
    %v916 = vld [vmem:[%s2 + $0x658] sm:$0xff]
    %v917 = vld [vmem:[%s2 + $0x660] sm:$0xff]
    %v918 = vld [vmem:[%s2 + $0x668] sm:$0xff]
    %v919 = vld [vmem:[%s2 + $0x670] sm:$0xff]
    %v920 = vld [vmem:[%s2 + $0x678] sm:$0xff]
    %v921 = vld [vmem:[%s2 + $0x680] sm:$0xff]
    %v922 = vld [vmem:[%s2 + $0x688] sm:$0xff]
    %v923 = vld [vmem:[%s2 + $0x690] sm:$0xff]
    %v924 = vld [vmem:[%s2 + $0x698] sm:$0xff]
    %v925 = vld [vmem:[%s2 + $0x6a0] sm:$0xff]
    %v926 = vld [vmem:[%s2 + $0x6a8] sm:$0xff]
    %v927 = vld [vmem:[%s2 + $0x6b0] sm:$0xff]
    %v928 = vld [vmem:[%s2 + $0x6b8] sm:$0xff]
    %v929 = vld [vmem:[%s2 + $0x6c0] sm:$0xff]
    %v930 = vld [vmem:[%s2 + $0x6c8] sm:$0xff]
    %v931 = vld [vmem:[%s2 + $0x6d0] sm:$0xff]
    %v932 = vld [vmem:[%s2 + $0x6d8] sm:$0xff]
    %v933 = vld [vmem:[%s2 + $0x6e0] sm:$0xff]
    %v934 = vld [vmem:[%s2 + $0x6e8] sm:$0xff]
    %v935 = vld [vmem:[%s2 + $0x6f0] sm:$0xff]
    %v936 = vld [vmem:[%s2 + $0x6f8] sm:$0xff]
    %v937 = vld [vmem:[%s2 + $0x700] sm:$0xff]
    %v938 = vld [vmem:[%s2 + $0x708] sm:$0xff]
    %v939 = vld [vmem:[%s2 + $0x710] sm:$0xff]
    %v940 = vld [vmem:[%s2 + $0x718] sm:$0xff]
    %v941 = vld [vmem:[%s2 + $0x720] sm:$0xff]
    %v942 = vld [vmem:[%s2 + $0x728] sm:$0xff]
    %v943 = vld [vmem:[%s2 + $0x730] sm:$0xff]
    %v944 = vld [vmem:[%s2 + $0x738] sm:$0xff]
    %v945 = vld [vmem:[%s2 + $0x740] sm:$0xff]
    %v946 = vld [vmem:[%s2 + $0x748] sm:$0xff]
    %v947 = vld [vmem:[%s2 + $0x750] sm:$0xff]
    %v948 = vld [vmem:[%s2 + $0x758] sm:$0xff]
    %v949 = vld [vmem:[%s2 + $0x760] sm:$0xff]
    %v950 = vld [vmem:[%s2 + $0x768] sm:$0xff]
    %v951 = vld [vmem:[%s2 + $0x770] sm:$0xff]
    %v952 = vld [vmem:[%s2 + $0x778] sm:$0xff]
    %v953 = vld [vmem:[%s2 + $0x780] sm:$0xff]
    %v954 = vld [vmem:[%s2 + $0x788] sm:$0xff]
    %v955 = vld [vmem:[%s2 + $0x790] sm:$0xff]
    %v956 = vld [vmem:[%s2 + $0x798] sm:$0xff]
    %v957 = vld [vmem:[%s2 + $0x7a0] sm:$0xff]
    %v958 = vld [vmem:[%s2 + $0x7a8] sm:$0xff]
    %v959 = vld [vmem:[%s2 + $0x7b0] sm:$0xff]
    %v960 = vld [vmem:[%s2 + $0x7b8] sm:$0xff]
    %v961 = vld [vmem:[%s2 + $0x7c0] sm:$0xff]
    %v962 = vld [vmem:[%s2 + $0x7c8] sm:$0xff]
    %v963 = vld [vmem:[%s2 + $0x7d0] sm:$0xff]
    %v964 = vld [vmem:[%s2 + $0x7d8] sm:$0xff]
    %v965 = vld [vmem:[%s2 + $0x7e0] sm:$0xff]
    %v966 = vld [vmem:[%s2 + $0x7e8] sm:$0xff]
    %v967 = vld [vmem:[%s2 + $0x7f0] sm:$0xff]
    %v968 = vld [vmem:[%s2 + $0x7f8] sm:$0xff]
    %v969 = vld [vmem:[%s2 + $0x800] sm:$0xff]
    %v970 = vld [vmem:[%s2 + $0x808] sm:$0xff]
    %v971 = vld [vmem:[%s2 + $0x810] sm:$0xff]
    %v972 = vld [vmem:[%s2 + $0x818] sm:$0xff]
    %v973 = vld [vmem:[%s2 + $0x820] sm:$0xff]
    %v974 = vld [vmem:[%s2 + $0x828] sm:$0xff]
    %v975 = vld [vmem:[%s2 + $0x830] sm:$0xff]
    %v976 = vld [vmem:[%s2 + $0x838] sm:$0xff]
    %v977 = vld [vmem:[%s2 + $0x840] sm:$0xff]
    %v978 = vld [vmem:[%s2 + $0x848] sm:$0xff]
    %v979 = vld [vmem:[%s2 + $0x850] sm:$0xff]
    %v980 = vld [vmem:[%s2 + $0x858] sm:$0xff]
    %v981 = vld [vmem:[%s2 + $0x860] sm:$0xff]
    %v982 = vld [vmem:[%s2 + $0x868] sm:$0xff]
    %v983 = vld [vmem:[%s2 + $0x870] sm:$0xff]
    %v984 = vld [vmem:[%s2 + $0x878] sm:$0xff]
    %v985 = vld [vmem:[%s2 + $0x880] sm:$0xff]
    %v986 = vld [vmem:[%s2 + $0x888] sm:$0xff]
    %v987 = vld [vmem:[%s2 + $0x890] sm:$0xff]
    %v988 = vld [vmem:[%s2 + $0x898] sm:$0xff]
    %v989 = vld [vmem:[%s2 + $0x8a0] sm:$0xff]
    %v990 = vld [vmem:[%s2 + $0x8a8] sm:$0xff]
    %v991 = vld [vmem:[%s2 + $0x8b0] sm:$0xff]
    %v992 = vld [vmem:[%s2 + $0x8b8] sm:$0xff]
    %v993 = vld [vmem:[%s2 + $0x8c0] sm:$0xff]
    %v994 = vld [vmem:[%s2 + $0x8c8] sm:$0xff]
    %v995 = vld [vmem:[%s2 + $0x8d0] sm:$0xff]
    %v996 = vld [vmem:[%s2 + $0x8d8] sm:$0xff]
    %v997 = vld [vmem:[%s2 + $0x8e0] sm:$0xff]
    %v998 = vld [vmem:[%s2 + $0x8e8] sm:$0xff]
    %v999 = vld [vmem:[%s2 + $0x8f0] sm:$0xff]
    %v1000 = vld [vmem:[%s2 + $0x8f8] sm:$0xff]
    %v1001 = vld [vmem:[%s2 + $0x900] sm:$0xff]
    %v1002 = vld [vmem:[%s2 + $0x908] sm:$0xff]
    %v1003 = vld [vmem:[%s2 + $0x910] sm:$0xff]
    %v1004 = vld [vmem:[%s2 + $0x918] sm:$0xff]
    %v1005 = vld [vmem:[%s2 + $0x920] sm:$0xff]
    %v1006 = vld [vmem:[%s2 + $0x928] sm:$0xff]
    %v1007 = vld [vmem:[%s2 + $0x930] sm:$0xff]
    %v1008 = vld [vmem:[%s2 + $0x938] sm:$0xff]
    %v1009 = vld [vmem:[%s2 + $0x940] sm:$0xff]
    %v1010 = vld [vmem:[%s2 + $0x948] sm:$0xff]
    %v1011 = vld [vmem:[%s2 + $0x950] sm:$0xff]
    %v1012 = vld [vmem:[%s2 + $0x958] sm:$0xff]
    %v1013 = vld [vmem:[%s2 + $0x960] sm:$0xff]
    %v1014 = vld [vmem:[%s2 + $0x968] sm:$0xff]
    %v1015 = vld [vmem:[%s2 + $0x970] sm:$0xff]
    %v1016 = vld [vmem:[%s2 + $0x978] sm:$0xff]
    %v1017 = vld [vmem:[%s2 + $0x980] sm:$0xff]
    %v1018 = vld [vmem:[%s2 + $0x988] sm:$0xff]
    %v1019 = vld [vmem:[%s2 + $0x990] sm:$0xff]
    %v1020 = vld [vmem:[%s2 + $0x998] sm:$0xff]
    %v1021 = vld [vmem:[%s2 + $0x9a0] sm:$0xff]
    %v1022 = vld [vmem:[%s2 + $0x9a8] sm:$0xff]
    %v1023 = vld [vmem:[%s2 + $0x9b0] sm:$0xff]
    %v1024 = vld [vmem:[%s2 + $0x9b8] sm:$0xff]
    %v1025 = vld [vmem:[%s2 + $0x9c0] sm:$0xff]
    %v1026 = vld [vmem:[%s2 + $0x9c8] sm:$0xff]
    %v1027 = vld [vmem:[%s2 + $0x9d0] sm:$0xff]
    %v1028 = vld [vmem:[%s2 + $0x9d8] sm:$0xff]
    %v1029 = vld [vmem:[%s2 + $0x9e0] sm:$0xff]
    %v1030 = vld [vmem:[%s2 + $0x9e8] sm:$0xff]
    %v1031 = vld [vmem:[%s2 + $0x9f0] sm:$0xff]
    %v1032 = vld [vmem:[%s2 + $0x9f8] sm:$0xff]
    %v1033 = vld [vmem:[%s2 + $0xa00] sm:$0xff]
    %v1034 = vld [vmem:[%s2 + $0xa08] sm:$0xff]
    %v1035 = vld [vmem:[%s2 + $0xa10] sm:$0xff]
    %v1036 = vld [vmem:[%s2 + $0xa18] sm:$0xff]
    %v1037 = vld [vmem:[%s2 + $0xa20] sm:$0xff]
    %v1038 = vld [vmem:[%s2 + $0xa28] sm:$0xff]
    %v1039 = vld [vmem:[%s2 + $0xa30] sm:$0xff]
    %v1040 = vld [vmem:[%s2 + $0xa38] sm:$0xff]
    %v1041 = vld [vmem:[%s2 + $0xa40] sm:$0xff]
    %v1042 = vld [vmem:[%s2 + $0xa48] sm:$0xff]
    %v1043 = vld [vmem:[%s2 + $0xa50] sm:$0xff]
    %v1044 = vld [vmem:[%s2 + $0xa58] sm:$0xff]
    %v1045 = vld [vmem:[%s2 + $0xa60] sm:$0xff]
    %v1046 = vld [vmem:[%s2 + $0xa68] sm:$0xff]
    %v1047 = vld [vmem:[%s2 + $0xa70] sm:$0xff]
    %v1048 = vld [vmem:[%s2 + $0xa78] sm:$0xff]
    %v1049 = vld [vmem:[%s2 + $0xa80] sm:$0xff]
    %v1050 = vld [vmem:[%s2 + $0xa88] sm:$0xff]
    %v1051 = vld [vmem:[%s2 + $0xa90] sm:$0xff]
    %v1052 = vld [vmem:[%s2 + $0xa98] sm:$0xff]
    %v1053 = vld [vmem:[%s2 + $0xaa0] sm:$0xff]
    %v1054 = vld [vmem:[%s2 + $0xaa8] sm:$0xff]
    %v1055 = vld [vmem:[%s2 + $0xab0] sm:$0xff]
    %v1056 = vld [vmem:[%s2 + $0xab8] sm:$0xff]
    %v1057 = vld [vmem:[%s2 + $0xac0] sm:$0xff]
    %v1058 = vld [vmem:[%s2 + $0xac8] sm:$0xff]
    %v1059 = vld [vmem:[%s2 + $0xad0] sm:$0xff]
    %v1060 = vld [vmem:[%s2 + $0xad8] sm:$0xff]
    %v1061 = vld [vmem:[%s2 + $0xae0] sm:$0xff]
    %v1062 = vld [vmem:[%s2 + $0xae8] sm:$0xff]
    %v1063 = vld [vmem:[%s2 + $0xaf0] sm:$0xff]
    %v1064 = vld [vmem:[%s2 + $0xaf8] sm:$0xff]
    %v1065 = vld [vmem:[%s2 + $0xb00] sm:$0xff]
    %v1066 = vld [vmem:[%s2 + $0xb08] sm:$0xff]
    %v1067 = vld [vmem:[%s2 + $0xb10] sm:$0xff]
    %v1068 = vld [vmem:[%s2 + $0xb18] sm:$0xff]
    %v1069 = vld [vmem:[%s2 + $0xb20] sm:$0xff]
    %v1070 = vld [vmem:[%s2 + $0xb28] sm:$0xff]
    %v1071 = vld [vmem:[%s2 + $0xb30] sm:$0xff]
    %v1072 = vld [vmem:[%s2 + $0xb38] sm:$0xff]
    %v1073 = vld [vmem:[%s2 + $0xb40] sm:$0xff]
    %v1074 = vld [vmem:[%s2 + $0xb48] sm:$0xff]
    %v1075 = vld [vmem:[%s2 + $0xb50] sm:$0xff]
    %v1076 = vld [vmem:[%s2 + $0xb58] sm:$0xff]
    %v1077 = vld [vmem:[%s2 + $0xb60] sm:$0xff]
    %v1078 = vld [vmem:[%s2 + $0xb68] sm:$0xff]
    %v1079 = vld [vmem:[%s2 + $0xb70] sm:$0xff]
    %v1080 = vld [vmem:[%s2 + $0xb78] sm:$0xff]
    %v1081 = vld [vmem:[%s2 + $0xb80] sm:$0xff]
    %v1082 = vld [vmem:[%s2 + $0xb88] sm:$0xff]
    %v1083 = vld [vmem:[%s2 + $0xb90] sm:$0xff]
    %v1084 = vld [vmem:[%s2 + $0xb98] sm:$0xff]
    %v1085 = vld [vmem:[%s2 + $0xba0] sm:$0xff]
    %v1086 = vld [vmem:[%s2 + $0xba8] sm:$0xff]
    %v1087 = vld [vmem:[%s2 + $0xbb0] sm:$0xff]
    %v1088 = vld [vmem:[%s2 + $0xbb8] sm:$0xff]
    %v1089 = vld [vmem:[%s2 + $0xbc0] sm:$0xff]
    %v1090 = vld [vmem:[%s2 + $0xbc8] sm:$0xff]
    %v1091 = vld [vmem:[%s2 + $0xbd0] sm:$0xff]
    %v1092 = vld [vmem:[%s2 + $0xbd8] sm:$0xff]
    %v1093 = vld [vmem:[%s2 + $0xbe0] sm:$0xff]
    %v1094 = vld [vmem:[%s2 + $0xbe8] sm:$0xff]
    %v1095 = vld [vmem:[%s2 + $0xbf0] sm:$0xff]
    %v1096 = vld [vmem:[%s2 + $0xbf8] sm:$0xff]
    %v1097 = vld [vmem:[%s2 + $0xc00] sm:$0xff]
    %v1098 = vld [vmem:[%s2 + $0xc08] sm:$0xff]
    %v1099 = vld [vmem:[%s2 + $0xc10] sm:$0xff]
    %v1100 = vld [vmem:[%s2 + $0xc18] sm:$0xff]
    %v1101 = vld [vmem:[%s2 + $0xc20] sm:$0xff]
    %v1102 = vld [vmem:[%s2 + $0xc28] sm:$0xff]
    %v1103 = vld [vmem:[%s2 + $0xc30] sm:$0xff]
    %v1104 = vld [vmem:[%s2 + $0xc38] sm:$0xff]
    %v1105 = vld [vmem:[%s2 + $0xc40] sm:$0xff]
    %v1106 = vld [vmem:[%s2 + $0xc48] sm:$0xff]
    %v1107 = vld [vmem:[%s2 + $0xc50] sm:$0xff]
    %v1108 = vld [vmem:[%s2 + $0xc58] sm:$0xff]
    %v1109 = vld [vmem:[%s2 + $0xc60] sm:$0xff]
    %v1110 = vld [vmem:[%s2 + $0xc68] sm:$0xff]
    %v1111 = vld [vmem:[%s2 + $0xc70] sm:$0xff]
    %v1112 = vld [vmem:[%s2 + $0xc78] sm:$0xff]
    %v1113 = vld [vmem:[%s2 + $0xc80] sm:$0xff]
    %v1114 = vld [vmem:[%s2 + $0xc88] sm:$0xff]
    %v1115 = vld [vmem:[%s2 + $0xc90] sm:$0xff]
    %v1116 = vld [vmem:[%s2 + $0xc98] sm:$0xff]
    %v1117 = vld [vmem:[%s2 + $0xca0] sm:$0xff]
    %v1118 = vld [vmem:[%s2 + $0xca8] sm:$0xff]
    %v1119 = vld [vmem:[%s2 + $0xcb0] sm:$0xff]
    %v1120 = vld [vmem:[%s2 + $0xcb8] sm:$0xff]
    %v1121 = vld [vmem:[%s2 + $0xcc0] sm:$0xff]
    %v1122 = vld [vmem:[%s2 + $0xcc8] sm:$0xff]
    %v1123 = vld [vmem:[%s2 + $0xcd0] sm:$0xff]
    %v1124 = vld [vmem:[%s2 + $0xcd8] sm:$0xff]
    %v1125 = vld [vmem:[%s2 + $0xce0] sm:$0xff]
    %v1126 = vld [vmem:[%s2 + $0xce8] sm:$0xff]
    %v1127 = vld [vmem:[%s2 + $0xcf0] sm:$0xff]
    %v1128 = vld [vmem:[%s2 + $0xcf8] sm:$0xff]
    %v1129 = vld [vmem:[%s2 + $0xd00] sm:$0xff]
    %v1130 = vld [vmem:[%s2 + $0xd08] sm:$0xff]
    %v1131 = vld [vmem:[%s2 + $0xd10] sm:$0xff]
    %v1132 = vld [vmem:[%s2 + $0xd18] sm:$0xff]
    %v1133 = vld [vmem:[%s2 + $0xd20] sm:$0xff]
    %v1134 = vld [vmem:[%s2 + $0xd28] sm:$0xff]
    %v1135 = vld [vmem:[%s2 + $0xd30] sm:$0xff]
    %v1136 = vld [vmem:[%s2 + $0xd38] sm:$0xff]
    %v1137 = vld [vmem:[%s2 + $0xd40] sm:$0xff]
    %v1138 = vld [vmem:[%s2 + $0xd48] sm:$0xff]
    %v1139 = vld [vmem:[%s2 + $0xd50] sm:$0xff]
    %v1140 = vld [vmem:[%s2 + $0xd58] sm:$0xff]
    %v1141 = vld [vmem:[%s2 + $0xd60] sm:$0xff]
    %v1142 = vld [vmem:[%s2 + $0xd68] sm:$0xff]
    %v1143 = vld [vmem:[%s2 + $0xd70] sm:$0xff]
    %v1144 = vld [vmem:[%s2 + $0xd78] sm:$0xff]
    %v1145 = vld [vmem:[%s2 + $0xd80] sm:$0xff]
    %v1146 = vld [vmem:[%s2 + $0xd88] sm:$0xff]
    %v1147 = vld [vmem:[%s2 + $0xd90] sm:$0xff]
    %v1148 = vld [vmem:[%s2 + $0xd98] sm:$0xff]
    %v1149 = vld [vmem:[%s2 + $0xda0] sm:$0xff]
    %v1150 = vld [vmem:[%s2 + $0xda8] sm:$0xff]
    %v1151 = vld [vmem:[%s2 + $0xdb0] sm:$0xff]
    %v1152 = vld [vmem:[%s2 + $0xdb8] sm:$0xff]
    %v1153 = vld [vmem:[%s2 + $0xdc0] sm:$0xff]
    %v1154 = vld [vmem:[%s2 + $0xdc8] sm:$0xff]
    %v1155 = vld [vmem:[%s2 + $0xdd0] sm:$0xff]
    %v1156 = vld [vmem:[%s2 + $0xdd8] sm:$0xff]
    %v1157 = vld [vmem:[%s2 + $0xde0] sm:$0xff]
    %v1158 = vld [vmem:[%s2 + $0xde8] sm:$0xff]
    %v1159 = vld [vmem:[%s2 + $0xdf0] sm:$0xff]
    %v1160 = vld [vmem:[%s2 + $0xdf8] sm:$0xff]
    %v1161 = vld [vmem:[%s3] sm:$0xf]
    %v1163 = vlaneseq
    %v1164 = vshrl.u32 %v1163, 7
    %v1165 = vsub.s32 0, %v1164
    %v1166 = vrot.slane %v1161, %v1165
    %v1167 = vlaneseq
    %v1168 = vshrl.u32 %v1167, 7
    %v1169 = vsub.s32 1, %v1168
    %v1170 = vrot.slane %v1161, %v1169
    %v1171 = vlaneseq
    %v1172 = vshrl.u32 %v1171, 7
    %v1173 = vsub.s32 2, %v1172
    %v1174 = vrot.slane %v1161, %v1173
    %v1175 = vlaneseq
    %v1176 = vshrl.u32 %v1175, 7
    %v1177 = vsub.s32 3, %v1176
    %v1178 = vrot.slane %v1161, %v1177
    %v1631 = vunpack.c.l.b16 %v713
    %v1632 = vunpack.c.h.b16 %v713
    %v1633 = vunpack.c.l.b16 %v714
    %v1634 = vunpack.c.h.b16 %v714
    %v1635 = vunpack.c.l.b16 %v715
    %v1636 = vunpack.c.h.b16 %v715
    %v1637 = vunpack.c.l.b16 %v716
    %v1638 = vunpack.c.h.b16 %v716
    %v1639 = vunpack.c.l.b16 %v717
    %v1640 = vunpack.c.h.b16 %v717
    %v1641 = vunpack.c.l.b16 %v718
    %v1642 = vunpack.c.h.b16 %v718
    %v1643 = vunpack.c.l.b16 %v719
    %v1644 = vunpack.c.h.b16 %v719
    %v1645 = vunpack.c.l.b16 %v720
    %v1646 = vunpack.c.h.b16 %v720
    %v1647 = vunpack.c.l.b16 %v721
    %v1648 = vunpack.c.h.b16 %v721
    %v1649 = vunpack.c.l.b16 %v722
    %v1650 = vunpack.c.h.b16 %v722
    %v1651 = vunpack.c.l.b16 %v723
    %v1652 = vunpack.c.h.b16 %v723
    %v1653 = vunpack.c.l.b16 %v724
    %v1654 = vunpack.c.h.b16 %v724
    %v1655 = vunpack.c.l.b16 %v725
    %v1656 = vunpack.c.h.b16 %v725
    %v1657 = vunpack.c.l.b16 %v726
    %v1658 = vunpack.c.h.b16 %v726
    %v1659 = vunpack.c.l.b16 %v727
    %v1660 = vunpack.c.h.b16 %v727
    %v1661 = vunpack.c.l.b16 %v728
    %v1662 = vunpack.c.h.b16 %v728
    %v1663 = vunpack.c.l.b16 %v729
    %v1664 = vunpack.c.h.b16 %v729
    %v1665 = vunpack.c.l.b16 %v730
    %v1666 = vunpack.c.h.b16 %v730
    %v1667 = vunpack.c.l.b16 %v731
    %v1668 = vunpack.c.h.b16 %v731
    %v1669 = vunpack.c.l.b16 %v732
    %v1670 = vunpack.c.h.b16 %v732
    %v1671 = vunpack.c.l.b16 %v733
    %v1672 = vunpack.c.h.b16 %v733
    %v1673 = vunpack.c.l.b16 %v734
    %v1674 = vunpack.c.h.b16 %v734
    %v1675 = vunpack.c.l.b16 %v735
    %v1676 = vunpack.c.h.b16 %v735
    %v1677 = vunpack.c.l.b16 %v736
    %v1678 = vunpack.c.h.b16 %v736
    %v1679 = vunpack.c.l.b16 %v737
    %v1680 = vunpack.c.h.b16 %v737
    %v1681 = vunpack.c.l.b16 %v738
    %v1682 = vunpack.c.h.b16 %v738
    %v1683 = vunpack.c.l.b16 %v739
    %v1684 = vunpack.c.h.b16 %v739
    %v1685 = vunpack.c.l.b16 %v740
    %v1686 = vunpack.c.h.b16 %v740
    %v1687 = vunpack.c.l.b16 %v741
    %v1688 = vunpack.c.h.b16 %v741
    %v1689 = vunpack.c.l.b16 %v742
    %v1690 = vunpack.c.h.b16 %v742
    %v1691 = vunpack.c.l.b16 %v743
    %v1692 = vunpack.c.h.b16 %v743
    %v1693 = vunpack.c.l.b16 %v744
    %v1694 = vunpack.c.h.b16 %v744
    %v1695 = vunpack.c.l.b16 %v745
    %v1696 = vunpack.c.h.b16 %v745
    %v1697 = vunpack.c.l.b16 %v746
    %v1698 = vunpack.c.h.b16 %v746
    %v1699 = vunpack.c.l.b16 %v747
    %v1700 = vunpack.c.h.b16 %v747
    %v1701 = vunpack.c.l.b16 %v748
    %v1702 = vunpack.c.h.b16 %v748
    %v1703 = vunpack.c.l.b16 %v749
    %v1704 = vunpack.c.h.b16 %v749
    %v1705 = vunpack.c.l.b16 %v750
    %v1706 = vunpack.c.h.b16 %v750
    %v1707 = vunpack.c.l.b16 %v751
    %v1708 = vunpack.c.h.b16 %v751
    %v1709 = vunpack.c.l.b16 %v752
    %v1710 = vunpack.c.h.b16 %v752
    %v1711 = vunpack.c.l.b16 %v753
    %v1712 = vunpack.c.h.b16 %v753
    %v1713 = vunpack.c.l.b16 %v754
    %v1714 = vunpack.c.h.b16 %v754
    %v1715 = vunpack.c.l.b16 %v755
    %v1716 = vunpack.c.h.b16 %v755
    %v1717 = vunpack.c.l.b16 %v756
    %v1718 = vunpack.c.h.b16 %v756
    %v1719 = vunpack.c.l.b16 %v757
    %v1720 = vunpack.c.h.b16 %v757
    %v1721 = vunpack.c.l.b16 %v758
    %v1722 = vunpack.c.h.b16 %v758
    %v1723 = vunpack.c.l.b16 %v759
    %v1724 = vunpack.c.h.b16 %v759
    %v1725 = vunpack.c.l.b16 %v760
    %v1726 = vunpack.c.h.b16 %v760
    %v1727 = vunpack.c.l.b16 %v761
    %v1728 = vunpack.c.h.b16 %v761
    %v1729 = vunpack.c.l.b16 %v762
    %v1730 = vunpack.c.h.b16 %v762
    %v1731 = vunpack.c.l.b16 %v763
    %v1732 = vunpack.c.h.b16 %v763
    %v1733 = vunpack.c.l.b16 %v764
    %v1734 = vunpack.c.h.b16 %v764
    %v1735 = vunpack.c.l.b16 %v765
    %v1736 = vunpack.c.h.b16 %v765
    %v1737 = vunpack.c.l.b16 %v766
    %v1738 = vunpack.c.h.b16 %v766
    %v1739 = vunpack.c.l.b16 %v767
    %v1740 = vunpack.c.h.b16 %v767
    %v1741 = vunpack.c.l.b16 %v768
    %v1742 = vunpack.c.h.b16 %v768
    %v1743 = vunpack.c.l.b16 %v769
    %v1744 = vunpack.c.h.b16 %v769
    %v1745 = vunpack.c.l.b16 %v770
    %v1746 = vunpack.c.h.b16 %v770
    %v1747 = vunpack.c.l.b16 %v771
    %v1748 = vunpack.c.h.b16 %v771
    %v1749 = vunpack.c.l.b16 %v772
    %v1750 = vunpack.c.h.b16 %v772
    %v1751 = vunpack.c.l.b16 %v773
    %v1752 = vunpack.c.h.b16 %v773
    %v1753 = vunpack.c.l.b16 %v774
    %v1754 = vunpack.c.h.b16 %v774
    %v1755 = vunpack.c.l.b16 %v775
    %v1756 = vunpack.c.h.b16 %v775
    %v1757 = vunpack.c.l.b16 %v776
    %v1758 = vunpack.c.h.b16 %v776
    %v1759 = vunpack.c.l.b16 %v777
    %v1760 = vunpack.c.h.b16 %v777
    %v1761 = vunpack.c.l.b16 %v778
    %v1762 = vunpack.c.h.b16 %v778
    %v1763 = vunpack.c.l.b16 %v779
    %v1764 = vunpack.c.h.b16 %v779
    %v1765 = vunpack.c.l.b16 %v780
    %v1766 = vunpack.c.h.b16 %v780
    %v1767 = vunpack.c.l.b16 %v781
    %v1768 = vunpack.c.h.b16 %v781
    %v1769 = vunpack.c.l.b16 %v782
    %v1770 = vunpack.c.h.b16 %v782
    %v1771 = vunpack.c.l.b16 %v783
    %v1772 = vunpack.c.h.b16 %v783
    %v1773 = vunpack.c.l.b16 %v784
    %v1774 = vunpack.c.h.b16 %v784
    %v1775 = vunpack.c.l.b16 %v785
    %v1776 = vunpack.c.h.b16 %v785
    %v1777 = vunpack.c.l.b16 %v786
    %v1778 = vunpack.c.h.b16 %v786
    %v1779 = vunpack.c.l.b16 %v787
    %v1780 = vunpack.c.h.b16 %v787
    %v1781 = vunpack.c.l.b16 %v788
    %v1782 = vunpack.c.h.b16 %v788
    %v1783 = vunpack.c.l.b16 %v789
    %v1784 = vunpack.c.h.b16 %v789
    %v1785 = vunpack.c.l.b16 %v790
    %v1786 = vunpack.c.h.b16 %v790
    %v1787 = vunpack.c.l.b16 %v791
    %v1788 = vunpack.c.h.b16 %v791
    %v1789 = vunpack.c.l.b16 %v792
    %v1790 = vunpack.c.h.b16 %v792
    %v1791 = vunpack.c.l.b16 %v793
    %v1792 = vunpack.c.h.b16 %v793
    %v1793 = vunpack.c.l.b16 %v794
    %v1794 = vunpack.c.h.b16 %v794
    %v1795 = vunpack.c.l.b16 %v795
    %v1796 = vunpack.c.h.b16 %v795
    %v1797 = vunpack.c.l.b16 %v796
    %v1798 = vunpack.c.h.b16 %v796
    %v1799 = vunpack.c.l.b16 %v797
    %v1800 = vunpack.c.h.b16 %v797
    %v1801 = vunpack.c.l.b16 %v798
    %v1802 = vunpack.c.h.b16 %v798
    %v1803 = vunpack.c.l.b16 %v799
    %v1804 = vunpack.c.h.b16 %v799
    %v1805 = vunpack.c.l.b16 %v800
    %v1806 = vunpack.c.h.b16 %v800
    %v1807 = vunpack.c.l.b16 %v801
    %v1808 = vunpack.c.h.b16 %v801
    %v1809 = vunpack.c.l.b16 %v802
    %v1810 = vunpack.c.h.b16 %v802
    %v1811 = vunpack.c.l.b16 %v803
    %v1812 = vunpack.c.h.b16 %v803
    %v1813 = vunpack.c.l.b16 %v804
    %v1814 = vunpack.c.h.b16 %v804
    %v1815 = vunpack.c.l.b16 %v805
    %v1816 = vunpack.c.h.b16 %v805
    %v1817 = vunpack.c.l.b16 %v806
    %v1818 = vunpack.c.h.b16 %v806
    %v1819 = vunpack.c.l.b16 %v807
    %v1820 = vunpack.c.h.b16 %v807
    %v1821 = vunpack.c.l.b16 %v808
    %v1822 = vunpack.c.h.b16 %v808
    %v1823 = vunpack.c.l.b16 %v809
    %v1824 = vunpack.c.h.b16 %v809
    %v1825 = vunpack.c.l.b16 %v810
    %v1826 = vunpack.c.h.b16 %v810
    %v1827 = vunpack.c.l.b16 %v811
    %v1828 = vunpack.c.h.b16 %v811
    %v1829 = vunpack.c.l.b16 %v812
    %v1830 = vunpack.c.h.b16 %v812
    %v1831 = vunpack.c.l.b16 %v813
    %v1832 = vunpack.c.h.b16 %v813
    %v1833 = vunpack.c.l.b16 %v814
    %v1834 = vunpack.c.h.b16 %v814
    %v1835 = vunpack.c.l.b16 %v815
    %v1836 = vunpack.c.h.b16 %v815
    %v1837 = vunpack.c.l.b16 %v816
    %v1838 = vunpack.c.h.b16 %v816
    %v1839 = vunpack.c.l.b16 %v817
    %v1840 = vunpack.c.h.b16 %v817
    %v1841 = vunpack.c.l.b16 %v818
    %v1842 = vunpack.c.h.b16 %v818
    %v1843 = vunpack.c.l.b16 %v819
    %v1844 = vunpack.c.h.b16 %v819
    %v1845 = vunpack.c.l.b16 %v820
    %v1846 = vunpack.c.h.b16 %v820
    %v1847 = vunpack.c.l.b16 %v821
    %v1848 = vunpack.c.h.b16 %v821
    %v1849 = vunpack.c.l.b16 %v822
    %v1850 = vunpack.c.h.b16 %v822
    %v1851 = vunpack.c.l.b16 %v823
    %v1852 = vunpack.c.h.b16 %v823
    %v1853 = vunpack.c.l.b16 %v824
    %v1854 = vunpack.c.h.b16 %v824
    %v1855 = vunpack.c.l.b16 %v825
    %v1856 = vunpack.c.h.b16 %v825
    %v1857 = vunpack.c.l.b16 %v826
    %v1858 = vunpack.c.h.b16 %v826
    %v1859 = vunpack.c.l.b16 %v827
    %v1860 = vunpack.c.h.b16 %v827
    %v1861 = vunpack.c.l.b16 %v828
    %v1862 = vunpack.c.h.b16 %v828
    %v1863 = vunpack.c.l.b16 %v829
    %v1864 = vunpack.c.h.b16 %v829
    %v1865 = vunpack.c.l.b16 %v830
    %v1866 = vunpack.c.h.b16 %v830
    %v1867 = vunpack.c.l.b16 %v831
    %v1868 = vunpack.c.h.b16 %v831
    %v1869 = vunpack.c.l.b16 %v832
    %v1870 = vunpack.c.h.b16 %v832
    %v1871 = vunpack.c.l.b16 %v833
    %v1872 = vunpack.c.h.b16 %v833
    %v1873 = vunpack.c.l.b16 %v834
    %v1874 = vunpack.c.h.b16 %v834
    %v1875 = vunpack.c.l.b16 %v835
    %v1876 = vunpack.c.h.b16 %v835
    %v1877 = vunpack.c.l.b16 %v836
    %v1878 = vunpack.c.h.b16 %v836
    %v1879 = vunpack.c.l.b16 %v837
    %v1880 = vunpack.c.h.b16 %v837
    %v1881 = vunpack.c.l.b16 %v838
    %v1882 = vunpack.c.h.b16 %v838
    %v1883 = vunpack.c.l.b16 %v839
    %v1884 = vunpack.c.h.b16 %v839
    %v1885 = vunpack.c.l.b16 %v840
    %v1886 = vunpack.c.h.b16 %v840
    %v1887 = vunpack.c.l.b16 %v841
    %v1888 = vunpack.c.h.b16 %v841
    %v1889 = vunpack.c.l.b16 %v842
    %v1890 = vunpack.c.h.b16 %v842
    %v1891 = vunpack.c.l.b16 %v843
    %v1892 = vunpack.c.h.b16 %v843
    %v1893 = vunpack.c.l.b16 %v844
    %v1894 = vunpack.c.h.b16 %v844
    %v1895 = vunpack.c.l.b16 %v845
    %v1896 = vunpack.c.h.b16 %v845
    %v1897 = vunpack.c.l.b16 %v846
    %v1898 = vunpack.c.h.b16 %v846
    %v1899 = vunpack.c.l.b16 %v847
    %v1900 = vunpack.c.h.b16 %v847
    %v1901 = vunpack.c.l.b16 %v848
    %v1902 = vunpack.c.h.b16 %v848
    %v1903 = vunpack.c.l.b16 %v849
    %v1904 = vunpack.c.h.b16 %v849
    %v1905 = vunpack.c.l.b16 %v850
    %v1906 = vunpack.c.h.b16 %v850
    %v1907 = vunpack.c.l.b16 %v851
    %v1908 = vunpack.c.h.b16 %v851
    %v1909 = vunpack.c.l.b16 %v852
    %v1910 = vunpack.c.h.b16 %v852
    %v1911 = vunpack.c.l.b16 %v853
    %v1912 = vunpack.c.h.b16 %v853
    %v1913 = vunpack.c.l.b16 %v854
    %v1914 = vunpack.c.h.b16 %v854
    %v1915 = vunpack.c.l.b16 %v855
    %v1916 = vunpack.c.h.b16 %v855
    %v1917 = vunpack.c.l.b16 %v856
    %v1918 = vunpack.c.h.b16 %v856
    %v1919 = vunpack.c.l.b16 %v857
    %v1920 = vunpack.c.h.b16 %v857
    %v1921 = vunpack.c.l.b16 %v858
    %v1922 = vunpack.c.h.b16 %v858
    %v1923 = vunpack.c.l.b16 %v859
    %v1924 = vunpack.c.h.b16 %v859
    %v1925 = vunpack.c.l.b16 %v860
    %v1926 = vunpack.c.h.b16 %v860
    %v1927 = vunpack.c.l.b16 %v861
    %v1928 = vunpack.c.h.b16 %v861
    %v1929 = vunpack.c.l.b16 %v862
    %v1930 = vunpack.c.h.b16 %v862
    %v1931 = vunpack.c.l.b16 %v863
    %v1932 = vunpack.c.h.b16 %v863
    %v1933 = vunpack.c.l.b16 %v864
    %v1934 = vunpack.c.h.b16 %v864
    %v1935 = vunpack.c.l.b16 %v865
    %v1936 = vunpack.c.h.b16 %v865
    %v1937 = vunpack.c.l.b16 %v866
    %v1938 = vunpack.c.h.b16 %v866
    %v1939 = vunpack.c.l.b16 %v867
    %v1940 = vunpack.c.h.b16 %v867
    %v1941 = vunpack.c.l.b16 %v868
    %v1942 = vunpack.c.h.b16 %v868
    %v1943 = vunpack.c.l.b16 %v869
    %v1944 = vunpack.c.h.b16 %v869
    %v1945 = vunpack.c.l.b16 %v870
    %v1946 = vunpack.c.h.b16 %v870
    %v1947 = vunpack.c.l.b16 %v871
    %v1948 = vunpack.c.h.b16 %v871
    %v1949 = vunpack.c.l.b16 %v872
    %v1950 = vunpack.c.h.b16 %v872
    %v1951 = vunpack.c.l.b16 %v873
    %v1952 = vunpack.c.h.b16 %v873
    %v1953 = vunpack.c.l.b16 %v874
    %v1954 = vunpack.c.h.b16 %v874
    %v1955 = vunpack.c.l.b16 %v875
    %v1956 = vunpack.c.h.b16 %v875
    %v1957 = vunpack.c.l.b16 %v876
    %v1958 = vunpack.c.h.b16 %v876
    %v1959 = vunpack.c.l.b16 %v877
    %v1960 = vunpack.c.h.b16 %v877
    %v1961 = vunpack.c.l.b16 %v878
    %v1962 = vunpack.c.h.b16 %v878
    %v1963 = vunpack.c.l.b16 %v879
    %v1964 = vunpack.c.h.b16 %v879
    %v1965 = vunpack.c.l.b16 %v880
    %v1966 = vunpack.c.h.b16 %v880
    %v1967 = vunpack.c.l.b16 %v881
    %v1968 = vunpack.c.h.b16 %v881
    %v1969 = vunpack.c.l.b16 %v882
    %v1970 = vunpack.c.h.b16 %v882
    %v1971 = vunpack.c.l.b16 %v883
    %v1972 = vunpack.c.h.b16 %v883
    %v1973 = vunpack.c.l.b16 %v884
    %v1974 = vunpack.c.h.b16 %v884
    %v1975 = vunpack.c.l.b16 %v885
    %v1976 = vunpack.c.h.b16 %v885
    %v1977 = vunpack.c.l.b16 %v886
    %v1978 = vunpack.c.h.b16 %v886
    %v1979 = vunpack.c.l.b16 %v887
    %v1980 = vunpack.c.h.b16 %v887
    %v1981 = vunpack.c.l.b16 %v888
    %v1982 = vunpack.c.h.b16 %v888
    %v1983 = vunpack.c.l.b16 %v889
    %v1984 = vunpack.c.h.b16 %v889
    %v1985 = vunpack.c.l.b16 %v890
    %v1986 = vunpack.c.h.b16 %v890
    %v1987 = vunpack.c.l.b16 %v891
    %v1988 = vunpack.c.h.b16 %v891
    %v1989 = vunpack.c.l.b16 %v892
    %v1990 = vunpack.c.h.b16 %v892
    %v1991 = vunpack.c.l.b16 %v893
    %v1992 = vunpack.c.h.b16 %v893
    %v1993 = vunpack.c.l.b16 %v894
    %v1994 = vunpack.c.h.b16 %v894
    %v1995 = vunpack.c.l.b16 %v895
    %v1996 = vunpack.c.h.b16 %v895
    %v1997 = vunpack.c.l.b16 %v896
    %v1998 = vunpack.c.h.b16 %v896
    %v1999 = vunpack.c.l.b16 %v897
    %v2000 = vunpack.c.h.b16 %v897
    %v2001 = vunpack.c.l.b16 %v898
    %v2002 = vunpack.c.h.b16 %v898
    %v2003 = vunpack.c.l.b16 %v899
    %v2004 = vunpack.c.h.b16 %v899
    %v2005 = vunpack.c.l.b16 %v900
    %v2006 = vunpack.c.h.b16 %v900
    %v2007 = vunpack.c.l.b16 %v901
    %v2008 = vunpack.c.h.b16 %v901
    %v2009 = vunpack.c.l.b16 %v902
    %v2010 = vunpack.c.h.b16 %v902
    %v2011 = vunpack.c.l.b16 %v903
    %v2012 = vunpack.c.h.b16 %v903
    %v2013 = vunpack.c.l.b16 %v904
    %v2014 = vunpack.c.h.b16 %v904
    %v2015 = vunpack.c.l.b16 %v905
    %v2016 = vunpack.c.h.b16 %v905
    %v2017 = vunpack.c.l.b16 %v906
    %v2018 = vunpack.c.h.b16 %v906
    %v2019 = vunpack.c.l.b16 %v907
    %v2020 = vunpack.c.h.b16 %v907
    %v2021 = vunpack.c.l.b16 %v908
    %v2022 = vunpack.c.h.b16 %v908
    %v2023 = vunpack.c.l.b16 %v909
    %v2024 = vunpack.c.h.b16 %v909
    %v2025 = vunpack.c.l.b16 %v910
    %v2026 = vunpack.c.h.b16 %v910
    %v2027 = vunpack.c.l.b16 %v911
    %v2028 = vunpack.c.h.b16 %v911
    %v2029 = vunpack.c.l.b16 %v912
    %v2030 = vunpack.c.h.b16 %v912
    %v2031 = vunpack.c.l.b16 %v913
    %v2032 = vunpack.c.h.b16 %v913
    %v2033 = vunpack.c.l.b16 %v914
    %v2034 = vunpack.c.h.b16 %v914
    %v2035 = vunpack.c.l.b16 %v915
    %v2036 = vunpack.c.h.b16 %v915
    %v2037 = vunpack.c.l.b16 %v916
    %v2038 = vunpack.c.h.b16 %v916
    %v2039 = vunpack.c.l.b16 %v917
    %v2040 = vunpack.c.h.b16 %v917
    %v2041 = vunpack.c.l.b16 %v918
    %v2042 = vunpack.c.h.b16 %v918
    %v2043 = vunpack.c.l.b16 %v919
    %v2044 = vunpack.c.h.b16 %v919
    %v2045 = vunpack.c.l.b16 %v920
    %v2046 = vunpack.c.h.b16 %v920
    %v2047 = vunpack.c.l.b16 %v921
    %v2048 = vunpack.c.h.b16 %v921
    %v2049 = vunpack.c.l.b16 %v922
    %v2050 = vunpack.c.h.b16 %v922
    %v2051 = vunpack.c.l.b16 %v923
    %v2052 = vunpack.c.h.b16 %v923
    %v2053 = vunpack.c.l.b16 %v924
    %v2054 = vunpack.c.h.b16 %v924
    %v2055 = vunpack.c.l.b16 %v925
    %v2056 = vunpack.c.h.b16 %v925
    %v2057 = vunpack.c.l.b16 %v926
    %v2058 = vunpack.c.h.b16 %v926
    %v2059 = vunpack.c.l.b16 %v927
    %v2060 = vunpack.c.h.b16 %v927
    %v2061 = vunpack.c.l.b16 %v928
    %v2062 = vunpack.c.h.b16 %v928
    %v2063 = vunpack.c.l.b16 %v929
    %v2064 = vunpack.c.h.b16 %v929
    %v2065 = vunpack.c.l.b16 %v930
    %v2066 = vunpack.c.h.b16 %v930
    %v2067 = vunpack.c.l.b16 %v931
    %v2068 = vunpack.c.h.b16 %v931
    %v2069 = vunpack.c.l.b16 %v932
    %v2070 = vunpack.c.h.b16 %v932
    %v2071 = vunpack.c.l.b16 %v933
    %v2072 = vunpack.c.h.b16 %v933
    %v2073 = vunpack.c.l.b16 %v934
    %v2074 = vunpack.c.h.b16 %v934
    %v2075 = vunpack.c.l.b16 %v935
    %v2076 = vunpack.c.h.b16 %v935
    %v2077 = vunpack.c.l.b16 %v936
    %v2078 = vunpack.c.h.b16 %v936
    %v2079 = vunpack.c.l.b16 %v937
    %v2080 = vunpack.c.h.b16 %v937
    %v2081 = vunpack.c.l.b16 %v938
    %v2082 = vunpack.c.h.b16 %v938
    %v2083 = vunpack.c.l.b16 %v939
    %v2084 = vunpack.c.h.b16 %v939
    %v2085 = vunpack.c.l.b16 %v940
    %v2086 = vunpack.c.h.b16 %v940
    %v2087 = vunpack.c.l.b16 %v941
    %v2088 = vunpack.c.h.b16 %v941
    %v2089 = vunpack.c.l.b16 %v942
    %v2090 = vunpack.c.h.b16 %v942
    %v2091 = vunpack.c.l.b16 %v943
    %v2092 = vunpack.c.h.b16 %v943
    %v2093 = vunpack.c.l.b16 %v944
    %v2094 = vunpack.c.h.b16 %v944
    %v2095 = vunpack.c.l.b16 %v945
    %v2096 = vunpack.c.h.b16 %v945
    %v2097 = vunpack.c.l.b16 %v946
    %v2098 = vunpack.c.h.b16 %v946
    %v2099 = vunpack.c.l.b16 %v947
    %v2100 = vunpack.c.h.b16 %v947
    %v2101 = vunpack.c.l.b16 %v948
    %v2102 = vunpack.c.h.b16 %v948
    %v2103 = vunpack.c.l.b16 %v949
    %v2104 = vunpack.c.h.b16 %v949
    %v2105 = vunpack.c.l.b16 %v950
    %v2106 = vunpack.c.h.b16 %v950
    %v2107 = vunpack.c.l.b16 %v951
    %v2108 = vunpack.c.h.b16 %v951
    %v2109 = vunpack.c.l.b16 %v952
    %v2110 = vunpack.c.h.b16 %v952
    %v2111 = vunpack.c.l.b16 %v953
    %v2112 = vunpack.c.h.b16 %v953
    %v2113 = vunpack.c.l.b16 %v954
    %v2114 = vunpack.c.h.b16 %v954
    %v2115 = vunpack.c.l.b16 %v955
    %v2116 = vunpack.c.h.b16 %v955
    %v2117 = vunpack.c.l.b16 %v956
    %v2118 = vunpack.c.h.b16 %v956
    %v2119 = vunpack.c.l.b16 %v957
    %v2120 = vunpack.c.h.b16 %v957
    %v2121 = vunpack.c.l.b16 %v958
    %v2122 = vunpack.c.h.b16 %v958
    %v2123 = vunpack.c.l.b16 %v959
    %v2124 = vunpack.c.h.b16 %v959
    %v2125 = vunpack.c.l.b16 %v960
    %v2126 = vunpack.c.h.b16 %v960
    %v2127 = vunpack.c.l.b16 %v961
    %v2128 = vunpack.c.h.b16 %v961
    %v2129 = vunpack.c.l.b16 %v962
    %v2130 = vunpack.c.h.b16 %v962
    %v2131 = vunpack.c.l.b16 %v963
    %v2132 = vunpack.c.h.b16 %v963
    %v2133 = vunpack.c.l.b16 %v964
    %v2134 = vunpack.c.h.b16 %v964
    %v2135 = vunpack.c.l.b16 %v965
    %v2136 = vunpack.c.h.b16 %v965
    %v2137 = vunpack.c.l.b16 %v966
    %v2138 = vunpack.c.h.b16 %v966
    %v2139 = vunpack.c.l.b16 %v967
    %v2140 = vunpack.c.h.b16 %v967
    %v2141 = vunpack.c.l.b16 %v968
    %v2142 = vunpack.c.h.b16 %v968
    %v2143 = vunpack.c.l.b16 %v969
    %v2144 = vunpack.c.h.b16 %v969
    %v2145 = vunpack.c.l.b16 %v970
    %v2146 = vunpack.c.h.b16 %v970
    %v2147 = vunpack.c.l.b16 %v971
    %v2148 = vunpack.c.h.b16 %v971
    %v2149 = vunpack.c.l.b16 %v972
    %v2150 = vunpack.c.h.b16 %v972
    %v2151 = vunpack.c.l.b16 %v973
    %v2152 = vunpack.c.h.b16 %v973
    %v2153 = vunpack.c.l.b16 %v974
    %v2154 = vunpack.c.h.b16 %v974
    %v2155 = vunpack.c.l.b16 %v975
    %v2156 = vunpack.c.h.b16 %v975
    %v2157 = vunpack.c.l.b16 %v976
    %v2158 = vunpack.c.h.b16 %v976
    %v2159 = vunpack.c.l.b16 %v977
    %v2160 = vunpack.c.h.b16 %v977
    %v2161 = vunpack.c.l.b16 %v978
    %v2162 = vunpack.c.h.b16 %v978
    %v2163 = vunpack.c.l.b16 %v979
    %v2164 = vunpack.c.h.b16 %v979
    %v2165 = vunpack.c.l.b16 %v980
    %v2166 = vunpack.c.h.b16 %v980
    %v2167 = vunpack.c.l.b16 %v981
    %v2168 = vunpack.c.h.b16 %v981
    %v2169 = vunpack.c.l.b16 %v982
    %v2170 = vunpack.c.h.b16 %v982
    %v2171 = vunpack.c.l.b16 %v983
    %v2172 = vunpack.c.h.b16 %v983
    %v2173 = vunpack.c.l.b16 %v984
    %v2174 = vunpack.c.h.b16 %v984
    %v2175 = vunpack.c.l.b16 %v985
    %v2176 = vunpack.c.h.b16 %v985
    %v2177 = vunpack.c.l.b16 %v986
    %v2178 = vunpack.c.h.b16 %v986
    %v2179 = vunpack.c.l.b16 %v987
    %v2180 = vunpack.c.h.b16 %v987
    %v2181 = vunpack.c.l.b16 %v988
    %v2182 = vunpack.c.h.b16 %v988
    %v2183 = vunpack.c.l.b16 %v989
    %v2184 = vunpack.c.h.b16 %v989
    %v2185 = vunpack.c.l.b16 %v990
    %v2186 = vunpack.c.h.b16 %v990
    %v2187 = vunpack.c.l.b16 %v991
    %v2188 = vunpack.c.h.b16 %v991
    %v2189 = vunpack.c.l.b16 %v992
    %v2190 = vunpack.c.h.b16 %v992
    %v2191 = vunpack.c.l.b16 %v993
    %v2192 = vunpack.c.h.b16 %v993
    %v2193 = vunpack.c.l.b16 %v994
    %v2194 = vunpack.c.h.b16 %v994
    %v2195 = vunpack.c.l.b16 %v995
    %v2196 = vunpack.c.h.b16 %v995
    %v2197 = vunpack.c.l.b16 %v996
    %v2198 = vunpack.c.h.b16 %v996
    %v2199 = vunpack.c.l.b16 %v997
    %v2200 = vunpack.c.h.b16 %v997
    %v2201 = vunpack.c.l.b16 %v998
    %v2202 = vunpack.c.h.b16 %v998
    %v2203 = vunpack.c.l.b16 %v999
    %v2204 = vunpack.c.h.b16 %v999
    %v2205 = vunpack.c.l.b16 %v1000
    %v2206 = vunpack.c.h.b16 %v1000
    %v2207 = vunpack.c.l.b16 %v1001
    %v2208 = vunpack.c.h.b16 %v1001
    %v2209 = vunpack.c.l.b16 %v1002
    %v2210 = vunpack.c.h.b16 %v1002
    %v2211 = vunpack.c.l.b16 %v1003
    %v2212 = vunpack.c.h.b16 %v1003
    %v2213 = vunpack.c.l.b16 %v1004
    %v2214 = vunpack.c.h.b16 %v1004
    %v2215 = vunpack.c.l.b16 %v1005
    %v2216 = vunpack.c.h.b16 %v1005
    %v2217 = vunpack.c.l.b16 %v1006
    %v2218 = vunpack.c.h.b16 %v1006
    %v2219 = vunpack.c.l.b16 %v1007
    %v2220 = vunpack.c.h.b16 %v1007
    %v2221 = vunpack.c.l.b16 %v1008
    %v2222 = vunpack.c.h.b16 %v1008
    %v2223 = vunpack.c.l.b16 %v1009
    %v2224 = vunpack.c.h.b16 %v1009
    %v2225 = vunpack.c.l.b16 %v1010
    %v2226 = vunpack.c.h.b16 %v1010
    %v2227 = vunpack.c.l.b16 %v1011
    %v2228 = vunpack.c.h.b16 %v1011
    %v2229 = vunpack.c.l.b16 %v1012
    %v2230 = vunpack.c.h.b16 %v1012
    %v2231 = vunpack.c.l.b16 %v1013
    %v2232 = vunpack.c.h.b16 %v1013
    %v2233 = vunpack.c.l.b16 %v1014
    %v2234 = vunpack.c.h.b16 %v1014
    %v2235 = vunpack.c.l.b16 %v1015
    %v2236 = vunpack.c.h.b16 %v1015
    %v2237 = vunpack.c.l.b16 %v1016
    %v2238 = vunpack.c.h.b16 %v1016
    %v2239 = vunpack.c.l.b16 %v1017
    %v2240 = vunpack.c.h.b16 %v1017
    %v2241 = vunpack.c.l.b16 %v1018
    %v2242 = vunpack.c.h.b16 %v1018
    %v2243 = vunpack.c.l.b16 %v1019
    %v2244 = vunpack.c.h.b16 %v1019
    %v2245 = vunpack.c.l.b16 %v1020
    %v2246 = vunpack.c.h.b16 %v1020
    %v2247 = vunpack.c.l.b16 %v1021
    %v2248 = vunpack.c.h.b16 %v1021
    %v2249 = vunpack.c.l.b16 %v1022
    %v2250 = vunpack.c.h.b16 %v1022
    %v2251 = vunpack.c.l.b16 %v1023
    %v2252 = vunpack.c.h.b16 %v1023
    %v2253 = vunpack.c.l.b16 %v1024
    %v2254 = vunpack.c.h.b16 %v1024
    %v2255 = vunpack.c.l.b16 %v1025
    %v2256 = vunpack.c.h.b16 %v1025
    %v2257 = vunpack.c.l.b16 %v1026
    %v2258 = vunpack.c.h.b16 %v1026
    %v2259 = vunpack.c.l.b16 %v1027
    %v2260 = vunpack.c.h.b16 %v1027
    %v2261 = vunpack.c.l.b16 %v1028
    %v2262 = vunpack.c.h.b16 %v1028
    %v2263 = vunpack.c.l.b16 %v1029
    %v2264 = vunpack.c.h.b16 %v1029
    %v2265 = vunpack.c.l.b16 %v1030
    %v2266 = vunpack.c.h.b16 %v1030
    %v2267 = vunpack.c.l.b16 %v1031
    %v2268 = vunpack.c.h.b16 %v1031
    %v2269 = vunpack.c.l.b16 %v1032
    %v2270 = vunpack.c.h.b16 %v1032
    %v2271 = vunpack.c.l.b16 %v1033
    %v2272 = vunpack.c.h.b16 %v1033
    %v2273 = vunpack.c.l.b16 %v1034
    %v2274 = vunpack.c.h.b16 %v1034
    %v2275 = vunpack.c.l.b16 %v1035
    %v2276 = vunpack.c.h.b16 %v1035
    %v2277 = vunpack.c.l.b16 %v1036
    %v2278 = vunpack.c.h.b16 %v1036
    %v2279 = vunpack.c.l.b16 %v1037
    %v2280 = vunpack.c.h.b16 %v1037
    %v2281 = vunpack.c.l.b16 %v1038
    %v2282 = vunpack.c.h.b16 %v1038
    %v2283 = vunpack.c.l.b16 %v1039
    %v2284 = vunpack.c.h.b16 %v1039
    %v2285 = vunpack.c.l.b16 %v1040
    %v2286 = vunpack.c.h.b16 %v1040
    %v2287 = vunpack.c.l.b16 %v1041
    %v2288 = vunpack.c.h.b16 %v1041
    %v2289 = vunpack.c.l.b16 %v1042
    %v2290 = vunpack.c.h.b16 %v1042
    %v2291 = vunpack.c.l.b16 %v1043
    %v2292 = vunpack.c.h.b16 %v1043
    %v2293 = vunpack.c.l.b16 %v1044
    %v2294 = vunpack.c.h.b16 %v1044
    %v2295 = vunpack.c.l.b16 %v1045
    %v2296 = vunpack.c.h.b16 %v1045
    %v2297 = vunpack.c.l.b16 %v1046
    %v2298 = vunpack.c.h.b16 %v1046
    %v2299 = vunpack.c.l.b16 %v1047
    %v2300 = vunpack.c.h.b16 %v1047
    %v2301 = vunpack.c.l.b16 %v1048
    %v2302 = vunpack.c.h.b16 %v1048
    %v2303 = vunpack.c.l.b16 %v1049
    %v2304 = vunpack.c.h.b16 %v1049
    %v2305 = vunpack.c.l.b16 %v1050
    %v2306 = vunpack.c.h.b16 %v1050
    %v2307 = vunpack.c.l.b16 %v1051
    %v2308 = vunpack.c.h.b16 %v1051
    %v2309 = vunpack.c.l.b16 %v1052
    %v2310 = vunpack.c.h.b16 %v1052
    %v2311 = vunpack.c.l.b16 %v1053
    %v2312 = vunpack.c.h.b16 %v1053
    %v2313 = vunpack.c.l.b16 %v1054
    %v2314 = vunpack.c.h.b16 %v1054
    %v2315 = vunpack.c.l.b16 %v1055
    %v2316 = vunpack.c.h.b16 %v1055
    %v2317 = vunpack.c.l.b16 %v1056
    %v2318 = vunpack.c.h.b16 %v1056
    %v2319 = vunpack.c.l.b16 %v1057
    %v2320 = vunpack.c.h.b16 %v1057
    %v2321 = vunpack.c.l.b16 %v1058
    %v2322 = vunpack.c.h.b16 %v1058
    %v2323 = vunpack.c.l.b16 %v1059
    %v2324 = vunpack.c.h.b16 %v1059
    %v2325 = vunpack.c.l.b16 %v1060
    %v2326 = vunpack.c.h.b16 %v1060
    %v2327 = vunpack.c.l.b16 %v1061
    %v2328 = vunpack.c.h.b16 %v1061
    %v2329 = vunpack.c.l.b16 %v1062
    %v2330 = vunpack.c.h.b16 %v1062
    %v2331 = vunpack.c.l.b16 %v1063
    %v2332 = vunpack.c.h.b16 %v1063
    %v2333 = vunpack.c.l.b16 %v1064
    %v2334 = vunpack.c.h.b16 %v1064
    %v2335 = vunpack.c.l.b16 %v1065
    %v2336 = vunpack.c.h.b16 %v1065
    %v2337 = vunpack.c.l.b16 %v1066
    %v2338 = vunpack.c.h.b16 %v1066
    %v2339 = vunpack.c.l.b16 %v1067
    %v2340 = vunpack.c.h.b16 %v1067
    %v2341 = vunpack.c.l.b16 %v1068
    %v2342 = vunpack.c.h.b16 %v1068
    %v2343 = vunpack.c.l.b16 %v1069
    %v2344 = vunpack.c.h.b16 %v1069
    %v2345 = vunpack.c.l.b16 %v1070
    %v2346 = vunpack.c.h.b16 %v1070
    %v2347 = vunpack.c.l.b16 %v1071
    %v2348 = vunpack.c.h.b16 %v1071
    %v2349 = vunpack.c.l.b16 %v1072
    %v2350 = vunpack.c.h.b16 %v1072
    %v2351 = vunpack.c.l.b16 %v1073
    %v2352 = vunpack.c.h.b16 %v1073
    %v2353 = vunpack.c.l.b16 %v1074
    %v2354 = vunpack.c.h.b16 %v1074
    %v2355 = vunpack.c.l.b16 %v1075
    %v2356 = vunpack.c.h.b16 %v1075
    %v2357 = vunpack.c.l.b16 %v1076
    %v2358 = vunpack.c.h.b16 %v1076
    %v2359 = vunpack.c.l.b16 %v1077
    %v2360 = vunpack.c.h.b16 %v1077
    %v2361 = vunpack.c.l.b16 %v1078
    %v2362 = vunpack.c.h.b16 %v1078
    %v2363 = vunpack.c.l.b16 %v1079
    %v2364 = vunpack.c.h.b16 %v1079
    %v2365 = vunpack.c.l.b16 %v1080
    %v2366 = vunpack.c.h.b16 %v1080
    %v2367 = vunpack.c.l.b16 %v1081
    %v2368 = vunpack.c.h.b16 %v1081
    %v2369 = vunpack.c.l.b16 %v1082
    %v2370 = vunpack.c.h.b16 %v1082
    %v2371 = vunpack.c.l.b16 %v1083
    %v2372 = vunpack.c.h.b16 %v1083
    %v2373 = vunpack.c.l.b16 %v1084
    %v2374 = vunpack.c.h.b16 %v1084
    %v2375 = vunpack.c.l.b16 %v1085
    %v2376 = vunpack.c.h.b16 %v1085
    %v2377 = vunpack.c.l.b16 %v1086
    %v2378 = vunpack.c.h.b16 %v1086
    %v2379 = vunpack.c.l.b16 %v1087
    %v2380 = vunpack.c.h.b16 %v1087
    %v2381 = vunpack.c.l.b16 %v1088
    %v2382 = vunpack.c.h.b16 %v1088
    %v2383 = vunpack.c.l.b16 %v1089
    %v2384 = vunpack.c.h.b16 %v1089
    %v2385 = vunpack.c.l.b16 %v1090
    %v2386 = vunpack.c.h.b16 %v1090
    %v2387 = vunpack.c.l.b16 %v1091
    %v2388 = vunpack.c.h.b16 %v1091
    %v2389 = vunpack.c.l.b16 %v1092
    %v2390 = vunpack.c.h.b16 %v1092
    %v2391 = vunpack.c.l.b16 %v1093
    %v2392 = vunpack.c.h.b16 %v1093
    %v2393 = vunpack.c.l.b16 %v1094
    %v2394 = vunpack.c.h.b16 %v1094
    %v2395 = vunpack.c.l.b16 %v1095
    %v2396 = vunpack.c.h.b16 %v1095
    %v2397 = vunpack.c.l.b16 %v1096
    %v2398 = vunpack.c.h.b16 %v1096
    %v2399 = vunpack.c.l.b16 %v1097
    %v2400 = vunpack.c.h.b16 %v1097
    %v2401 = vunpack.c.l.b16 %v1098
    %v2402 = vunpack.c.h.b16 %v1098
    %v2403 = vunpack.c.l.b16 %v1099
    %v2404 = vunpack.c.h.b16 %v1099
    %v2405 = vunpack.c.l.b16 %v1100
    %v2406 = vunpack.c.h.b16 %v1100
    %v2407 = vunpack.c.l.b16 %v1101
    %v2408 = vunpack.c.h.b16 %v1101
    %v2409 = vunpack.c.l.b16 %v1102
    %v2410 = vunpack.c.h.b16 %v1102
    %v2411 = vunpack.c.l.b16 %v1103
    %v2412 = vunpack.c.h.b16 %v1103
    %v2413 = vunpack.c.l.b16 %v1104
    %v2414 = vunpack.c.h.b16 %v1104
    %v2415 = vunpack.c.l.b16 %v1105
    %v2416 = vunpack.c.h.b16 %v1105
    %v2417 = vunpack.c.l.b16 %v1106
    %v2418 = vunpack.c.h.b16 %v1106
    %v2419 = vunpack.c.l.b16 %v1107
    %v2420 = vunpack.c.h.b16 %v1107
    %v2421 = vunpack.c.l.b16 %v1108
    %v2422 = vunpack.c.h.b16 %v1108
    %v2423 = vunpack.c.l.b16 %v1109
    %v2424 = vunpack.c.h.b16 %v1109
    %v2425 = vunpack.c.l.b16 %v1110
    %v2426 = vunpack.c.h.b16 %v1110
    %v2427 = vunpack.c.l.b16 %v1111
    %v2428 = vunpack.c.h.b16 %v1111
    %v2429 = vunpack.c.l.b16 %v1112
    %v2430 = vunpack.c.h.b16 %v1112
    %v2431 = vunpack.c.l.b16 %v1113
    %v2432 = vunpack.c.h.b16 %v1113
    %v2433 = vunpack.c.l.b16 %v1114
    %v2434 = vunpack.c.h.b16 %v1114
    %v2435 = vunpack.c.l.b16 %v1115
    %v2436 = vunpack.c.h.b16 %v1115
    %v2437 = vunpack.c.l.b16 %v1116
    %v2438 = vunpack.c.h.b16 %v1116
    %v2439 = vunpack.c.l.b16 %v1117
    %v2440 = vunpack.c.h.b16 %v1117
    %v2441 = vunpack.c.l.b16 %v1118
    %v2442 = vunpack.c.h.b16 %v1118
    %v2443 = vunpack.c.l.b16 %v1119
    %v2444 = vunpack.c.h.b16 %v1119
    %v2445 = vunpack.c.l.b16 %v1120
    %v2446 = vunpack.c.h.b16 %v1120
    %v2447 = vunpack.c.l.b16 %v1121
    %v2448 = vunpack.c.h.b16 %v1121
    %v2449 = vunpack.c.l.b16 %v1122
    %v2450 = vunpack.c.h.b16 %v1122
    %v2451 = vunpack.c.l.b16 %v1123
    %v2452 = vunpack.c.h.b16 %v1123
    %v2453 = vunpack.c.l.b16 %v1124
    %v2454 = vunpack.c.h.b16 %v1124
    %v2455 = vunpack.c.l.b16 %v1125
    %v2456 = vunpack.c.h.b16 %v1125
    %v2457 = vunpack.c.l.b16 %v1126
    %v2458 = vunpack.c.h.b16 %v1126
    %v2459 = vunpack.c.l.b16 %v1127
    %v2460 = vunpack.c.h.b16 %v1127
    %v2461 = vunpack.c.l.b16 %v1128
    %v2462 = vunpack.c.h.b16 %v1128
    %v2463 = vunpack.c.l.b16 %v1129
    %v2464 = vunpack.c.h.b16 %v1129
    %v2465 = vunpack.c.l.b16 %v1130
    %v2466 = vunpack.c.h.b16 %v1130
    %v2467 = vunpack.c.l.b16 %v1131
    %v2468 = vunpack.c.h.b16 %v1131
    %v2469 = vunpack.c.l.b16 %v1132
    %v2470 = vunpack.c.h.b16 %v1132
    %v2471 = vunpack.c.l.b16 %v1133
    %v2472 = vunpack.c.h.b16 %v1133
    %v2473 = vunpack.c.l.b16 %v1134
    %v2474 = vunpack.c.h.b16 %v1134
    %v2475 = vunpack.c.l.b16 %v1135
    %v2476 = vunpack.c.h.b16 %v1135
    %v2477 = vunpack.c.l.b16 %v1136
    %v2478 = vunpack.c.h.b16 %v1136
    %v2479 = vunpack.c.l.b16 %v1137
    %v2480 = vunpack.c.h.b16 %v1137
    %v2481 = vunpack.c.l.b16 %v1138
    %v2482 = vunpack.c.h.b16 %v1138
    %v2483 = vunpack.c.l.b16 %v1139
    %v2484 = vunpack.c.h.b16 %v1139
    %v2485 = vunpack.c.l.b16 %v1140
    %v2486 = vunpack.c.h.b16 %v1140
    %v2487 = vunpack.c.l.b16 %v1141
    %v2488 = vunpack.c.h.b16 %v1141
    %v2489 = vunpack.c.l.b16 %v1142
    %v2490 = vunpack.c.h.b16 %v1142
    %v2491 = vunpack.c.l.b16 %v1143
    %v2492 = vunpack.c.h.b16 %v1143
    %v2493 = vunpack.c.l.b16 %v1144
    %v2494 = vunpack.c.h.b16 %v1144
    %v2495 = vunpack.c.l.b16 %v1145
    %v2496 = vunpack.c.h.b16 %v1145
    %v2497 = vunpack.c.l.b16 %v1146
    %v2498 = vunpack.c.h.b16 %v1146
    %v2499 = vunpack.c.l.b16 %v1147
    %v2500 = vunpack.c.h.b16 %v1147
    %v2501 = vunpack.c.l.b16 %v1148
    %v2502 = vunpack.c.h.b16 %v1148
    %v2503 = vunpack.c.l.b16 %v1149
    %v2504 = vunpack.c.h.b16 %v1149
    %v2505 = vunpack.c.l.b16 %v1150
    %v2506 = vunpack.c.h.b16 %v1150
    %v2507 = vunpack.c.l.b16 %v1151
    %v2508 = vunpack.c.h.b16 %v1151
    %v2509 = vunpack.c.l.b16 %v1152
    %v2510 = vunpack.c.h.b16 %v1152
    %v2511 = vunpack.c.l.b16 %v1153
    %v2512 = vunpack.c.h.b16 %v1153
    %v2513 = vunpack.c.l.b16 %v1154
    %v2514 = vunpack.c.h.b16 %v1154
    %v2515 = vunpack.c.l.b16 %v1155
    %v2516 = vunpack.c.h.b16 %v1155
    %v2517 = vunpack.c.l.b16 %v1156
    %v2518 = vunpack.c.h.b16 %v1156
    %v2519 = vunpack.c.l.b16 %v1157
    %v2520 = vunpack.c.h.b16 %v1157
    %v2521 = vunpack.c.l.b16 %v1158
    %v2522 = vunpack.c.h.b16 %v1158
    %v2523 = vunpack.c.l.b16 %v1159
    %v2524 = vunpack.c.h.b16 %v1159
    %v2525 = vunpack.c.l.b16 %v1160
    %v2526 = vunpack.c.h.b16 %v1160
    %v2527 = vpack.c.b16 %v1635, %v1631
    %v2528 = vpack.c.b16 %v1636, %v1632
    %v2529 = vpack.c.b16 %v1637, %v1633
    %v2530 = vpack.c.b16 %v1638, %v1634
    %v2531 = vpack.c.b16 %v1643, %v1639
    %v2532 = vpack.c.b16 %v1644, %v1640
    %v2533 = vpack.c.b16 %v1645, %v1641
    %v2534 = vpack.c.b16 %v1646, %v1642
    %v2535 = vpack.c.b16 %v1651, %v1647
    %v2536 = vpack.c.b16 %v1652, %v1648
    %v2537 = vpack.c.b16 %v1653, %v1649
    %v2538 = vpack.c.b16 %v1654, %v1650
    %v2539 = vpack.c.b16 %v1659, %v1655
    %v2540 = vpack.c.b16 %v1660, %v1656
    %v2541 = vpack.c.b16 %v1661, %v1657
    %v2542 = vpack.c.b16 %v1662, %v1658
    %v2543 = vpack.c.b16 %v1667, %v1663
    %v2544 = vpack.c.b16 %v1668, %v1664
    %v2545 = vpack.c.b16 %v1669, %v1665
    %v2546 = vpack.c.b16 %v1670, %v1666
    %v2547 = vpack.c.b16 %v1675, %v1671
    %v2548 = vpack.c.b16 %v1676, %v1672
    %v2549 = vpack.c.b16 %v1677, %v1673
    %v2550 = vpack.c.b16 %v1678, %v1674
    %v2551 = vpack.c.b16 %v1683, %v1679
    %v2552 = vpack.c.b16 %v1684, %v1680
    %v2553 = vpack.c.b16 %v1685, %v1681
    %v2554 = vpack.c.b16 %v1686, %v1682
    %v2555 = vpack.c.b16 %v1691, %v1687
    %v2556 = vpack.c.b16 %v1692, %v1688
    %v2557 = vpack.c.b16 %v1693, %v1689
    %v2558 = vpack.c.b16 %v1694, %v1690
    %v2559 = vpack.c.b16 %v1699, %v1695
    %v2560 = vpack.c.b16 %v1700, %v1696
    %v2561 = vpack.c.b16 %v1701, %v1697
    %v2562 = vpack.c.b16 %v1702, %v1698
    %v2563 = vpack.c.b16 %v1707, %v1703
    %v2564 = vpack.c.b16 %v1708, %v1704
    %v2565 = vpack.c.b16 %v1709, %v1705
    %v2566 = vpack.c.b16 %v1710, %v1706
    %v2567 = vpack.c.b16 %v1715, %v1711
    %v2568 = vpack.c.b16 %v1716, %v1712
    %v2569 = vpack.c.b16 %v1717, %v1713
    %v2570 = vpack.c.b16 %v1718, %v1714
    %v2571 = vpack.c.b16 %v1723, %v1719
    %v2572 = vpack.c.b16 %v1724, %v1720
    %v2573 = vpack.c.b16 %v1725, %v1721
    %v2574 = vpack.c.b16 %v1726, %v1722
    %v2575 = vpack.c.b16 %v1731, %v1727
    %v2576 = vpack.c.b16 %v1732, %v1728
    %v2577 = vpack.c.b16 %v1733, %v1729
    %v2578 = vpack.c.b16 %v1734, %v1730
    %v2579 = vpack.c.b16 %v1739, %v1735
    %v2580 = vpack.c.b16 %v1740, %v1736
    %v2581 = vpack.c.b16 %v1741, %v1737
    %v2582 = vpack.c.b16 %v1742, %v1738
    %v2583 = vpack.c.b16 %v1747, %v1743
    %v2584 = vpack.c.b16 %v1748, %v1744
    %v2585 = vpack.c.b16 %v1749, %v1745
    %v2586 = vpack.c.b16 %v1750, %v1746
    %v2587 = vpack.c.b16 %v1755, %v1751
    %v2588 = vpack.c.b16 %v1756, %v1752
    %v2589 = vpack.c.b16 %v1757, %v1753
    %v2590 = vpack.c.b16 %v1758, %v1754
    %v2591 = vpack.c.b16 %v1763, %v1759
    %v2592 = vpack.c.b16 %v1764, %v1760
    %v2593 = vpack.c.b16 %v1765, %v1761
    %v2594 = vpack.c.b16 %v1766, %v1762
    %v2595 = vpack.c.b16 %v1771, %v1767
    %v2596 = vpack.c.b16 %v1772, %v1768
    %v2597 = vpack.c.b16 %v1773, %v1769
    %v2598 = vpack.c.b16 %v1774, %v1770
    %v2599 = vpack.c.b16 %v1779, %v1775
    %v2600 = vpack.c.b16 %v1780, %v1776
    %v2601 = vpack.c.b16 %v1781, %v1777
    %v2602 = vpack.c.b16 %v1782, %v1778
    %v2603 = vpack.c.b16 %v1787, %v1783
    %v2604 = vpack.c.b16 %v1788, %v1784
    %v2605 = vpack.c.b16 %v1789, %v1785
    %v2606 = vpack.c.b16 %v1790, %v1786
    %v2607 = vpack.c.b16 %v1795, %v1791
    %v2608 = vpack.c.b16 %v1796, %v1792
    %v2609 = vpack.c.b16 %v1797, %v1793
    %v2610 = vpack.c.b16 %v1798, %v1794
    %v2611 = vpack.c.b16 %v1803, %v1799
    %v2612 = vpack.c.b16 %v1804, %v1800
    %v2613 = vpack.c.b16 %v1805, %v1801
    %v2614 = vpack.c.b16 %v1806, %v1802
    %v2615 = vpack.c.b16 %v1811, %v1807
    %v2616 = vpack.c.b16 %v1812, %v1808
    %v2617 = vpack.c.b16 %v1813, %v1809
    %v2618 = vpack.c.b16 %v1814, %v1810
    %v2619 = vpack.c.b16 %v1819, %v1815
    %v2620 = vpack.c.b16 %v1820, %v1816
    %v2621 = vpack.c.b16 %v1821, %v1817
    %v2622 = vpack.c.b16 %v1822, %v1818
    %v2623 = vpack.c.b16 %v1827, %v1823
    %v2624 = vpack.c.b16 %v1828, %v1824
    %v2625 = vpack.c.b16 %v1829, %v1825
    %v2626 = vpack.c.b16 %v1830, %v1826
    %v2627 = vpack.c.b16 %v1835, %v1831
    %v2628 = vpack.c.b16 %v1836, %v1832
    %v2629 = vpack.c.b16 %v1837, %v1833
    %v2630 = vpack.c.b16 %v1838, %v1834
    %v2631 = vpack.c.b16 %v1843, %v1839
    %v2632 = vpack.c.b16 %v1844, %v1840
    %v2633 = vpack.c.b16 %v1845, %v1841
    %v2634 = vpack.c.b16 %v1846, %v1842
    %v2635 = vpack.c.b16 %v1851, %v1847
    %v2636 = vpack.c.b16 %v1852, %v1848
    %v2637 = vpack.c.b16 %v1853, %v1849
    %v2638 = vpack.c.b16 %v1854, %v1850
    %v2639 = vpack.c.b16 %v1859, %v1855
    %v2640 = vpack.c.b16 %v1860, %v1856
    %v2641 = vpack.c.b16 %v1861, %v1857
    %v2642 = vpack.c.b16 %v1862, %v1858
    %v2643 = vpack.c.b16 %v1867, %v1863
    %v2644 = vpack.c.b16 %v1868, %v1864
    %v2645 = vpack.c.b16 %v1869, %v1865
    %v2646 = vpack.c.b16 %v1870, %v1866
    %v2647 = vpack.c.b16 %v1875, %v1871
    %v2648 = vpack.c.b16 %v1876, %v1872
    %v2649 = vpack.c.b16 %v1877, %v1873
    %v2650 = vpack.c.b16 %v1878, %v1874
    %v2651 = vpack.c.b16 %v1883, %v1879
    %v2652 = vpack.c.b16 %v1884, %v1880
    %v2653 = vpack.c.b16 %v1885, %v1881
    %v2654 = vpack.c.b16 %v1886, %v1882
    %v2655 = vpack.c.b16 %v1891, %v1887
    %v2656 = vpack.c.b16 %v1892, %v1888
    %v2657 = vpack.c.b16 %v1893, %v1889
    %v2658 = vpack.c.b16 %v1894, %v1890
    %v2659 = vpack.c.b16 %v1899, %v1895
    %v2660 = vpack.c.b16 %v1900, %v1896
    %v2661 = vpack.c.b16 %v1901, %v1897
    %v2662 = vpack.c.b16 %v1902, %v1898
    %v2663 = vpack.c.b16 %v1907, %v1903
    %v2664 = vpack.c.b16 %v1908, %v1904
    %v2665 = vpack.c.b16 %v1909, %v1905
    %v2666 = vpack.c.b16 %v1910, %v1906
    %v2667 = vpack.c.b16 %v1915, %v1911
    %v2668 = vpack.c.b16 %v1916, %v1912
    %v2669 = vpack.c.b16 %v1917, %v1913
    %v2670 = vpack.c.b16 %v1918, %v1914
    %v2671 = vpack.c.b16 %v1923, %v1919
    %v2672 = vpack.c.b16 %v1924, %v1920
    %v2673 = vpack.c.b16 %v1925, %v1921
    %v2674 = vpack.c.b16 %v1926, %v1922
    %v2675 = vpack.c.b16 %v1931, %v1927
    %v2676 = vpack.c.b16 %v1932, %v1928
    %v2677 = vpack.c.b16 %v1933, %v1929
    %v2678 = vpack.c.b16 %v1934, %v1930
    %v2679 = vpack.c.b16 %v1939, %v1935
    %v2680 = vpack.c.b16 %v1940, %v1936
    %v2681 = vpack.c.b16 %v1941, %v1937
    %v2682 = vpack.c.b16 %v1942, %v1938
    %v2683 = vpack.c.b16 %v1947, %v1943
    %v2684 = vpack.c.b16 %v1948, %v1944
    %v2685 = vpack.c.b16 %v1949, %v1945
    %v2686 = vpack.c.b16 %v1950, %v1946
    %v2687 = vpack.c.b16 %v1955, %v1951
    %v2688 = vpack.c.b16 %v1956, %v1952
    %v2689 = vpack.c.b16 %v1957, %v1953
    %v2690 = vpack.c.b16 %v1958, %v1954
    %v2691 = vpack.c.b16 %v1963, %v1959
    %v2692 = vpack.c.b16 %v1964, %v1960
    %v2693 = vpack.c.b16 %v1965, %v1961
    %v2694 = vpack.c.b16 %v1966, %v1962
    %v2695 = vpack.c.b16 %v1971, %v1967
    %v2696 = vpack.c.b16 %v1972, %v1968
    %v2697 = vpack.c.b16 %v1973, %v1969
    %v2698 = vpack.c.b16 %v1974, %v1970
    %v2699 = vpack.c.b16 %v1979, %v1975
    %v2700 = vpack.c.b16 %v1980, %v1976
    %v2701 = vpack.c.b16 %v1981, %v1977
    %v2702 = vpack.c.b16 %v1982, %v1978
    %v2703 = vpack.c.b16 %v1987, %v1983
    %v2704 = vpack.c.b16 %v1988, %v1984
    %v2705 = vpack.c.b16 %v1989, %v1985
    %v2706 = vpack.c.b16 %v1990, %v1986
    %v2707 = vpack.c.b16 %v1995, %v1991
    %v2708 = vpack.c.b16 %v1996, %v1992
    %v2709 = vpack.c.b16 %v1997, %v1993
    %v2710 = vpack.c.b16 %v1998, %v1994
    %v2711 = vpack.c.b16 %v2003, %v1999
    %v2712 = vpack.c.b16 %v2004, %v2000
    %v2713 = vpack.c.b16 %v2005, %v2001
    %v2714 = vpack.c.b16 %v2006, %v2002
    %v2715 = vpack.c.b16 %v2011, %v2007
    %v2716 = vpack.c.b16 %v2012, %v2008
    %v2717 = vpack.c.b16 %v2013, %v2009
    %v2718 = vpack.c.b16 %v2014, %v2010
    %v2719 = vpack.c.b16 %v2019, %v2015
    %v2720 = vpack.c.b16 %v2020, %v2016
    %v2721 = vpack.c.b16 %v2021, %v2017
    %v2722 = vpack.c.b16 %v2022, %v2018
    %v2723 = vpack.c.b16 %v2027, %v2023
    %v2724 = vpack.c.b16 %v2028, %v2024
    %v2725 = vpack.c.b16 %v2029, %v2025
    %v2726 = vpack.c.b16 %v2030, %v2026
    %v2727 = vpack.c.b16 %v2035, %v2031
    %v2728 = vpack.c.b16 %v2036, %v2032
    %v2729 = vpack.c.b16 %v2037, %v2033
    %v2730 = vpack.c.b16 %v2038, %v2034
    %v2731 = vpack.c.b16 %v2043, %v2039
    %v2732 = vpack.c.b16 %v2044, %v2040
    %v2733 = vpack.c.b16 %v2045, %v2041
    %v2734 = vpack.c.b16 %v2046, %v2042
    %v2735 = vpack.c.b16 %v2051, %v2047
    %v2736 = vpack.c.b16 %v2052, %v2048
    %v2737 = vpack.c.b16 %v2053, %v2049
    %v2738 = vpack.c.b16 %v2054, %v2050
    %v2739 = vpack.c.b16 %v2059, %v2055
    %v2740 = vpack.c.b16 %v2060, %v2056
    %v2741 = vpack.c.b16 %v2061, %v2057
    %v2742 = vpack.c.b16 %v2062, %v2058
    %v2743 = vpack.c.b16 %v2067, %v2063
    %v2744 = vpack.c.b16 %v2068, %v2064
    %v2745 = vpack.c.b16 %v2069, %v2065
    %v2746 = vpack.c.b16 %v2070, %v2066
    %v2747 = vpack.c.b16 %v2075, %v2071
    %v2748 = vpack.c.b16 %v2076, %v2072
    %v2749 = vpack.c.b16 %v2077, %v2073
    %v2750 = vpack.c.b16 %v2078, %v2074
    %v2751 = vpack.c.b16 %v2083, %v2079
    %v2752 = vpack.c.b16 %v2084, %v2080
    %v2753 = vpack.c.b16 %v2085, %v2081
    %v2754 = vpack.c.b16 %v2086, %v2082
    %v2755 = vpack.c.b16 %v2091, %v2087
    %v2756 = vpack.c.b16 %v2092, %v2088
    %v2757 = vpack.c.b16 %v2093, %v2089
    %v2758 = vpack.c.b16 %v2094, %v2090
    %v2759 = vpack.c.b16 %v2099, %v2095
    %v2760 = vpack.c.b16 %v2100, %v2096
    %v2761 = vpack.c.b16 %v2101, %v2097
    %v2762 = vpack.c.b16 %v2102, %v2098
    %v2763 = vpack.c.b16 %v2107, %v2103
    %v2764 = vpack.c.b16 %v2108, %v2104
    %v2765 = vpack.c.b16 %v2109, %v2105
    %v2766 = vpack.c.b16 %v2110, %v2106
    %v2767 = vpack.c.b16 %v2115, %v2111
    %v2768 = vpack.c.b16 %v2116, %v2112
    %v2769 = vpack.c.b16 %v2117, %v2113
    %v2770 = vpack.c.b16 %v2118, %v2114
    %v2771 = vpack.c.b16 %v2123, %v2119
    %v2772 = vpack.c.b16 %v2124, %v2120
    %v2773 = vpack.c.b16 %v2125, %v2121
    %v2774 = vpack.c.b16 %v2126, %v2122
    %v2775 = vpack.c.b16 %v2131, %v2127
    %v2776 = vpack.c.b16 %v2132, %v2128
    %v2777 = vpack.c.b16 %v2133, %v2129
    %v2778 = vpack.c.b16 %v2134, %v2130
    %v2779 = vpack.c.b16 %v2139, %v2135
    %v2780 = vpack.c.b16 %v2140, %v2136
    %v2781 = vpack.c.b16 %v2141, %v2137
    %v2782 = vpack.c.b16 %v2142, %v2138
    %v2783 = vpack.c.b16 %v2147, %v2143
    %v2784 = vpack.c.b16 %v2148, %v2144
    %v2785 = vpack.c.b16 %v2149, %v2145
    %v2786 = vpack.c.b16 %v2150, %v2146
    %v2787 = vpack.c.b16 %v2155, %v2151
    %v2788 = vpack.c.b16 %v2156, %v2152
    %v2789 = vpack.c.b16 %v2157, %v2153
    %v2790 = vpack.c.b16 %v2158, %v2154
    %v2791 = vpack.c.b16 %v2163, %v2159
    %v2792 = vpack.c.b16 %v2164, %v2160
    %v2793 = vpack.c.b16 %v2165, %v2161
    %v2794 = vpack.c.b16 %v2166, %v2162
    %v2795 = vpack.c.b16 %v2171, %v2167
    %v2796 = vpack.c.b16 %v2172, %v2168
    %v2797 = vpack.c.b16 %v2173, %v2169
    %v2798 = vpack.c.b16 %v2174, %v2170
    %v2799 = vpack.c.b16 %v2179, %v2175
    %v2800 = vpack.c.b16 %v2180, %v2176
    %v2801 = vpack.c.b16 %v2181, %v2177
    %v2802 = vpack.c.b16 %v2182, %v2178
    %v2803 = vpack.c.b16 %v2187, %v2183
    %v2804 = vpack.c.b16 %v2188, %v2184
    %v2805 = vpack.c.b16 %v2189, %v2185
    %v2806 = vpack.c.b16 %v2190, %v2186
    %v2807 = vpack.c.b16 %v2195, %v2191
    %v2808 = vpack.c.b16 %v2196, %v2192
    %v2809 = vpack.c.b16 %v2197, %v2193
    %v2810 = vpack.c.b16 %v2198, %v2194
    %v2811 = vpack.c.b16 %v2203, %v2199
    %v2812 = vpack.c.b16 %v2204, %v2200
    %v2813 = vpack.c.b16 %v2205, %v2201
    %v2814 = vpack.c.b16 %v2206, %v2202
    %v2815 = vpack.c.b16 %v2211, %v2207
    %v2816 = vpack.c.b16 %v2212, %v2208
    %v2817 = vpack.c.b16 %v2213, %v2209
    %v2818 = vpack.c.b16 %v2214, %v2210
    %v2819 = vpack.c.b16 %v2219, %v2215
    %v2820 = vpack.c.b16 %v2220, %v2216
    %v2821 = vpack.c.b16 %v2221, %v2217
    %v2822 = vpack.c.b16 %v2222, %v2218
    %v2823 = vpack.c.b16 %v2227, %v2223
    %v2824 = vpack.c.b16 %v2228, %v2224
    %v2825 = vpack.c.b16 %v2229, %v2225
    %v2826 = vpack.c.b16 %v2230, %v2226
    %v2827 = vpack.c.b16 %v2235, %v2231
    %v2828 = vpack.c.b16 %v2236, %v2232
    %v2829 = vpack.c.b16 %v2237, %v2233
    %v2830 = vpack.c.b16 %v2238, %v2234
    %v2831 = vpack.c.b16 %v2243, %v2239
    %v2832 = vpack.c.b16 %v2244, %v2240
    %v2833 = vpack.c.b16 %v2245, %v2241
    %v2834 = vpack.c.b16 %v2246, %v2242
    %v2835 = vpack.c.b16 %v2251, %v2247
    %v2836 = vpack.c.b16 %v2252, %v2248
    %v2837 = vpack.c.b16 %v2253, %v2249
    %v2838 = vpack.c.b16 %v2254, %v2250
    %v2839 = vpack.c.b16 %v2259, %v2255
    %v2840 = vpack.c.b16 %v2260, %v2256
    %v2841 = vpack.c.b16 %v2261, %v2257
    %v2842 = vpack.c.b16 %v2262, %v2258
    %v2843 = vpack.c.b16 %v2267, %v2263
    %v2844 = vpack.c.b16 %v2268, %v2264
    %v2845 = vpack.c.b16 %v2269, %v2265
    %v2846 = vpack.c.b16 %v2270, %v2266
    %v2847 = vpack.c.b16 %v2275, %v2271
    %v2848 = vpack.c.b16 %v2276, %v2272
    %v2849 = vpack.c.b16 %v2277, %v2273
    %v2850 = vpack.c.b16 %v2278, %v2274
    %v2851 = vpack.c.b16 %v2283, %v2279
    %v2852 = vpack.c.b16 %v2284, %v2280
    %v2853 = vpack.c.b16 %v2285, %v2281
    %v2854 = vpack.c.b16 %v2286, %v2282
    %v2855 = vpack.c.b16 %v2291, %v2287
    %v2856 = vpack.c.b16 %v2292, %v2288
    %v2857 = vpack.c.b16 %v2293, %v2289
    %v2858 = vpack.c.b16 %v2294, %v2290
    %v2859 = vpack.c.b16 %v2299, %v2295
    %v2860 = vpack.c.b16 %v2300, %v2296
    %v2861 = vpack.c.b16 %v2301, %v2297
    %v2862 = vpack.c.b16 %v2302, %v2298
    %v2863 = vpack.c.b16 %v2307, %v2303
    %v2864 = vpack.c.b16 %v2308, %v2304
    %v2865 = vpack.c.b16 %v2309, %v2305
    %v2866 = vpack.c.b16 %v2310, %v2306
    %v2867 = vpack.c.b16 %v2315, %v2311
    %v2868 = vpack.c.b16 %v2316, %v2312
    %v2869 = vpack.c.b16 %v2317, %v2313
    %v2870 = vpack.c.b16 %v2318, %v2314
    %v2871 = vpack.c.b16 %v2323, %v2319
    %v2872 = vpack.c.b16 %v2324, %v2320
    %v2873 = vpack.c.b16 %v2325, %v2321
    %v2874 = vpack.c.b16 %v2326, %v2322
    %v2875 = vpack.c.b16 %v2331, %v2327
    %v2876 = vpack.c.b16 %v2332, %v2328
    %v2877 = vpack.c.b16 %v2333, %v2329
    %v2878 = vpack.c.b16 %v2334, %v2330
    %v2879 = vpack.c.b16 %v2339, %v2335
    %v2880 = vpack.c.b16 %v2340, %v2336
    %v2881 = vpack.c.b16 %v2341, %v2337
    %v2882 = vpack.c.b16 %v2342, %v2338
    %v2883 = vpack.c.b16 %v2347, %v2343
    %v2884 = vpack.c.b16 %v2348, %v2344
    %v2885 = vpack.c.b16 %v2349, %v2345
    %v2886 = vpack.c.b16 %v2350, %v2346
    %v2887 = vpack.c.b16 %v2355, %v2351
    %v2888 = vpack.c.b16 %v2356, %v2352
    %v2889 = vpack.c.b16 %v2357, %v2353
    %v2890 = vpack.c.b16 %v2358, %v2354
    %v2891 = vpack.c.b16 %v2363, %v2359
    %v2892 = vpack.c.b16 %v2364, %v2360
    %v2893 = vpack.c.b16 %v2365, %v2361
    %v2894 = vpack.c.b16 %v2366, %v2362
    %v2895 = vpack.c.b16 %v2371, %v2367
    %v2896 = vpack.c.b16 %v2372, %v2368
    %v2897 = vpack.c.b16 %v2373, %v2369
    %v2898 = vpack.c.b16 %v2374, %v2370
    %v2899 = vpack.c.b16 %v2379, %v2375
    %v2900 = vpack.c.b16 %v2380, %v2376
    %v2901 = vpack.c.b16 %v2381, %v2377
    %v2902 = vpack.c.b16 %v2382, %v2378
    %v2903 = vpack.c.b16 %v2387, %v2383
    %v2904 = vpack.c.b16 %v2388, %v2384
    %v2905 = vpack.c.b16 %v2389, %v2385
    %v2906 = vpack.c.b16 %v2390, %v2386
    %v2907 = vpack.c.b16 %v2395, %v2391
    %v2908 = vpack.c.b16 %v2396, %v2392
    %v2909 = vpack.c.b16 %v2397, %v2393
    %v2910 = vpack.c.b16 %v2398, %v2394
    %v2911 = vpack.c.b16 %v2403, %v2399
    %v2912 = vpack.c.b16 %v2404, %v2400
    %v2913 = vpack.c.b16 %v2405, %v2401
    %v2914 = vpack.c.b16 %v2406, %v2402
    %v2915 = vpack.c.b16 %v2411, %v2407
    %v2916 = vpack.c.b16 %v2412, %v2408
    %v2917 = vpack.c.b16 %v2413, %v2409
    %v2918 = vpack.c.b16 %v2414, %v2410
    %v2919 = vpack.c.b16 %v2419, %v2415
    %v2920 = vpack.c.b16 %v2420, %v2416
    %v2921 = vpack.c.b16 %v2421, %v2417
    %v2922 = vpack.c.b16 %v2422, %v2418
    %v2923 = vpack.c.b16 %v2427, %v2423
    %v2924 = vpack.c.b16 %v2428, %v2424
    %v2925 = vpack.c.b16 %v2429, %v2425
    %v2926 = vpack.c.b16 %v2430, %v2426
    %v2927 = vpack.c.b16 %v2435, %v2431
    %v2928 = vpack.c.b16 %v2436, %v2432
    %v2929 = vpack.c.b16 %v2437, %v2433
    %v2930 = vpack.c.b16 %v2438, %v2434
    %v2931 = vpack.c.b16 %v2443, %v2439
    %v2932 = vpack.c.b16 %v2444, %v2440
    %v2933 = vpack.c.b16 %v2445, %v2441
    %v2934 = vpack.c.b16 %v2446, %v2442
    %v2935 = vpack.c.b16 %v2451, %v2447
    %v2936 = vpack.c.b16 %v2452, %v2448
    %v2937 = vpack.c.b16 %v2453, %v2449
    %v2938 = vpack.c.b16 %v2454, %v2450
    %v2939 = vpack.c.b16 %v2459, %v2455
    %v2940 = vpack.c.b16 %v2460, %v2456
    %v2941 = vpack.c.b16 %v2461, %v2457
    %v2942 = vpack.c.b16 %v2462, %v2458
    %v2943 = vpack.c.b16 %v2467, %v2463
    %v2944 = vpack.c.b16 %v2468, %v2464
    %v2945 = vpack.c.b16 %v2469, %v2465
    %v2946 = vpack.c.b16 %v2470, %v2466
    %v2947 = vpack.c.b16 %v2475, %v2471
    %v2948 = vpack.c.b16 %v2476, %v2472
    %v2949 = vpack.c.b16 %v2477, %v2473
    %v2950 = vpack.c.b16 %v2478, %v2474
    %v2951 = vpack.c.b16 %v2483, %v2479
    %v2952 = vpack.c.b16 %v2484, %v2480
    %v2953 = vpack.c.b16 %v2485, %v2481
    %v2954 = vpack.c.b16 %v2486, %v2482
    %v2955 = vpack.c.b16 %v2491, %v2487
    %v2956 = vpack.c.b16 %v2492, %v2488
    %v2957 = vpack.c.b16 %v2493, %v2489
    %v2958 = vpack.c.b16 %v2494, %v2490
    %v2959 = vpack.c.b16 %v2499, %v2495
    %v2960 = vpack.c.b16 %v2500, %v2496
    %v2961 = vpack.c.b16 %v2501, %v2497
    %v2962 = vpack.c.b16 %v2502, %v2498
    %v2963 = vpack.c.b16 %v2507, %v2503
    %v2964 = vpack.c.b16 %v2508, %v2504
    %v2965 = vpack.c.b16 %v2509, %v2505
    %v2966 = vpack.c.b16 %v2510, %v2506
    %v2967 = vpack.c.b16 %v2515, %v2511
    %v2968 = vpack.c.b16 %v2516, %v2512
    %v2969 = vpack.c.b16 %v2517, %v2513
    %v2970 = vpack.c.b16 %v2518, %v2514
    %v2971 = vpack.c.b16 %v2523, %v2519
    %v2972 = vpack.c.b16 %v2524, %v2520
    %v2973 = vpack.c.b16 %v2525, %v2521
    %v2974 = vpack.c.b16 %v2526, %v2522
    %3423 = vmatprep.subr.bf16.mxu0 %v2528
    %3424 = vmatpush1.bf16.msra.mxu0 %v2527
    %3425 = vmatprep.subr.bf16.mxu0 %v2532
    %3426 = vmatpush1.bf16.msra.mxu0 %v2531
    %3427 = vmatprep.subr.bf16.mxu0 %v2536
    %3428 = vmatpush1.bf16.msra.mxu0 %v2535
    %3429 = vmatprep.subr.bf16.mxu0 %v2540
    %3430 = vmatpush1.bf16.msra.mxu0 %v2539
    %3431 = vmatprep.subr.bf16.mxu0 %v2544
    %3432 = vmatpush1.bf16.msra.mxu0 %v2543
    %3433 = vmatprep.subr.bf16.mxu0 %v2548
    %3434 = vmatpush1.bf16.msra.mxu0 %v2547
    %3435 = vmatprep.subr.bf16.mxu0 %v2552
    %3436 = vmatpush1.bf16.msra.mxu0 %v2551
    %3437 = vmatprep.subr.bf16.mxu0 %v2556
    %3438 = vmatpush1.bf16.msra.mxu0 %v2555
    %3439 = vmatprep.subr.bf16.mxu0 %v2560
    %3440 = vmatpush1.bf16.msra.mxu0 %v2559
    %3441 = vmatprep.subr.bf16.mxu0 %v2564
    %3442 = vmatpush1.bf16.msra.mxu0 %v2563
    %3443 = vmatprep.subr.bf16.mxu0 %v2568
    %3444 = vmatpush1.bf16.msra.mxu0 %v2567
    %3445 = vmatprep.subr.bf16.mxu0 %v2572
    %3446 = vmatpush1.bf16.msra.mxu0 %v2571
    %3447 = vmatprep.subr.bf16.mxu0 %v2576
    %3448 = vmatpush1.bf16.msra.mxu0 %v2575
    %3449 = vmatprep.subr.bf16.mxu0 %v2580
    %3450 = vmatpush1.bf16.msra.mxu0 %v2579
    %3451 = vmatprep.subr.bf16.mxu0 %v2584
    %3452 = vmatpush1.bf16.msra.mxu0 %v2583
    %3453 = vmatprep.subr.bf16.mxu0 %v2588
    %3454 = vmatpush1.bf16.msra.mxu0 %v2587
    %3455 = vmatprep.mubr.bf16.mxu0 %v700
    %3456 = vmatmul.mubr.bf16.gmra.mrb[0].mxu0 %v699
    %v3457 = vpop.f32.mrb[0].mxu0
    %v3458 = vadd.f32 %v1166, %v3457
    %v3459 = vpop.f32.mrb[0].mxu0
    %v3460 = vadd.f32 %v1170, %v3459
    %v3461 = vpop.f32.mrb[0].mxu0
    %v3462 = vpop.f32.mrb[0].mxu0
    %3463 = vdwg.mxu0
    %3464 = vmatprep.subr.bf16.mxu0 %v2592
    %3465 = vmatpush1.bf16.msra.mxu0 %v2591
    %3466 = vmatprep.subr.bf16.mxu0 %v2596
    %3467 = vmatpush1.bf16.msra.mxu0 %v2595
    %3468 = vmatprep.subr.bf16.mxu0 %v2600
    %3469 = vmatpush1.bf16.msra.mxu0 %v2599
    %3470 = vmatprep.subr.bf16.mxu0 %v2604
    %3471 = vmatpush1.bf16.msra.mxu0 %v2603
    %3472 = vmatprep.subr.bf16.mxu0 %v2608
    %3473 = vmatpush1.bf16.msra.mxu0 %v2607
    %3474 = vmatprep.subr.bf16.mxu0 %v2612
    %3475 = vmatpush1.bf16.msra.mxu0 %v2611
    %3476 = vmatprep.subr.bf16.mxu0 %v2616
    %3477 = vmatpush1.bf16.msra.mxu0 %v2615
    %3478 = vmatprep.subr.bf16.mxu0 %v2620
    %3479 = vmatpush1.bf16.msra.mxu0 %v2619
    %3480 = vmatprep.subr.bf16.mxu0 %v2624
    %3481 = vmatpush1.bf16.msra.mxu0 %v2623
    %3482 = vmatprep.subr.bf16.mxu0 %v2628
    %3483 = vmatpush1.bf16.msra.mxu0 %v2627
    %3484 = vmatprep.subr.bf16.mxu0 %v2632
    %3485 = vmatpush1.bf16.msra.mxu0 %v2631
    %3486 = vmatprep.subr.bf16.mxu0 %v2636
    %3487 = vmatpush1.bf16.msra.mxu0 %v2635
    %3488 = vmatprep.subr.bf16.mxu0 %v2640
    %3489 = vmatpush1.bf16.msra.mxu0 %v2639
    %3490 = vmatprep.subr.bf16.mxu0 %v2644
    %3491 = vmatpush1.bf16.msra.mxu0 %v2643
    %3492 = vmatprep.subr.bf16.mxu0 %v2648
    %3493 = vmatpush1.bf16.msra.mxu0 %v2647
    %3494 = vmatprep.subr.bf16.mxu0 %v2652
    %3495 = vmatpush1.bf16.msra.mxu0 %v2651
    %3496 = vmatprep.mubr.bf16.mxu0 %v702
    %3497 = vmatmul.mubr.bf16.gmra.mrb[0].mxu0 %v701
    %v3498 = vpop.f32.mrb[0].mxu0
    %v3499 = vadd.f32 %v3458, %v3498
    %v3500 = vpop.f32.mrb[0].mxu0
    %v3501 = vadd.f32 %v3460, %v3500
    %v3502 = vpop.f32.mrb[0].mxu0
    %v3503 = vpop.f32.mrb[0].mxu0
    %3504 = vdwg.mxu0
    %3505 = vmatprep.subr.bf16.mxu0 %v2656
    %3506 = vmatpush1.bf16.msra.mxu0 %v2655
    %3507 = vmatprep.subr.bf16.mxu0 %v2660
    %3508 = vmatpush1.bf16.msra.mxu0 %v2659
    %3509 = vmatprep.subr.bf16.mxu0 %v2664
    %3510 = vmatpush1.bf16.msra.mxu0 %v2663
    %3511 = vmatprep.subr.bf16.mxu0 %v2668
    %3512 = vmatpush1.bf16.msra.mxu0 %v2667
    %3513 = vmatprep.subr.bf16.mxu0 %v2672
    %3514 = vmatpush1.bf16.msra.mxu0 %v2671
    %3515 = vmatprep.subr.bf16.mxu0 %v2676
    %3516 = vmatpush1.bf16.msra.mxu0 %v2675
    %3517 = vmatprep.subr.bf16.mxu0 %v2680
    %3518 = vmatpush1.bf16.msra.mxu0 %v2679
    %3519 = vmatprep.subr.bf16.mxu0 %v2684
    %3520 = vmatpush1.bf16.msra.mxu0 %v2683
    %3521 = vmatprep.subr.bf16.mxu0 %v2688
    %3522 = vmatpush1.bf16.msra.mxu0 %v2687
    %3523 = vmatprep.subr.bf16.mxu0 %v2692
    %3524 = vmatpush1.bf16.msra.mxu0 %v2691
    %3525 = vmatprep.subr.bf16.mxu0 %v2696
    %3526 = vmatpush1.bf16.msra.mxu0 %v2695
    %3527 = vmatprep.subr.bf16.mxu0 %v2700
    %3528 = vmatpush1.bf16.msra.mxu0 %v2699
    %3529 = vmatprep.subr.bf16.mxu0 %v2704
    %3530 = vmatpush1.bf16.msra.mxu0 %v2703
    %3531 = vmatprep.subr.bf16.mxu0 %v2708
    %3532 = vmatpush1.bf16.msra.mxu0 %v2707
    %3533 = vmatprep.subr.bf16.mxu0 %v2712
    %3534 = vmatpush1.bf16.msra.mxu0 %v2711
    %3535 = vmatprep.subr.bf16.mxu0 %v2716
    %3536 = vmatpush1.bf16.msra.mxu0 %v2715
    %3537 = vmatprep.mubr.bf16.mxu0 %v704
    %3538 = vmatmul.mubr.bf16.gmra.mrb[0].mxu0 %v703
    %v3539 = vpop.f32.mrb[0].mxu0
    %v3540 = vadd.f32 %v3499, %v3539
    %v3541 = vpop.f32.mrb[0].mxu0
    %v3542 = vadd.f32 %v3501, %v3541
    %v3543 = vpop.f32.mrb[0].mxu0
    %v3544 = vpop.f32.mrb[0].mxu0
    %3545 = vdwg.mxu0
    %3546 = vmatprep.subr.bf16.mxu0 %v2720
    %3547 = vmatpush1.bf16.msra.mxu0 %v2719
    %3548 = vmatprep.subr.bf16.mxu0 %v2724
    %3549 = vmatpush1.bf16.msra.mxu0 %v2723
    %3550 = vmatprep.subr.bf16.mxu0 %v2728
    %3551 = vmatpush1.bf16.msra.mxu0 %v2727
    %3552 = vmatprep.subr.bf16.mxu0 %v2732
    %3553 = vmatpush1.bf16.msra.mxu0 %v2731
    %3554 = vmatprep.subr.bf16.mxu0 %v2736
    %3555 = vmatpush1.bf16.msra.mxu0 %v2735
    %3556 = vmatprep.subr.bf16.mxu0 %v2740
    %3557 = vmatpush1.bf16.msra.mxu0 %v2739
    %3558 = vmatprep.subr.bf16.mxu0 %v2744
    %3559 = vmatpush1.bf16.msra.mxu0 %v2743
    %3560 = vmatprep.subr.bf16.mxu0 %v2748
    %3561 = vmatpush1.bf16.msra.mxu0 %v2747
    %3562 = vmatprep.subr.bf16.mxu0 %v2752
    %3563 = vmatpush1.bf16.msra.mxu0 %v2751
    %3564 = vmatprep.subr.bf16.mxu0 %v2756
    %3565 = vmatpush1.bf16.msra.mxu0 %v2755
    %3566 = vmatprep.subr.bf16.mxu0 %v2760
    %3567 = vmatpush1.bf16.msra.mxu0 %v2759
    %3568 = vmatprep.subr.bf16.mxu0 %v2764
    %3569 = vmatpush1.bf16.msra.mxu0 %v2763
    %3570 = vmatprep.subr.bf16.mxu0 %v2768
    %3571 = vmatpush1.bf16.msra.mxu0 %v2767
    %3572 = vmatprep.subr.bf16.mxu0 %v2772
    %3573 = vmatpush1.bf16.msra.mxu0 %v2771
    %3574 = vmatprep.subr.bf16.mxu0 %v2776
    %3575 = vmatpush1.bf16.msra.mxu0 %v2775
    %3576 = vmatprep.subr.bf16.mxu0 %v2780
    %3577 = vmatpush1.bf16.msra.mxu0 %v2779
    %3578 = vmatprep.mubr.bf16.mxu0 %v706
    %3579 = vmatmul.mubr.bf16.gmra.mrb[0].mxu0 %v705
    %v3580 = vpop.f32.mrb[0].mxu0
    %v3581 = vadd.f32 %v3540, %v3580
    %v3582 = vpop.f32.mrb[0].mxu0
    %v3583 = vadd.f32 %v3542, %v3582
    %v3584 = vpop.f32.mrb[0].mxu0
    %v3585 = vpop.f32.mrb[0].mxu0
    %3586 = vdwg.mxu0
    %3587 = vmatprep.subr.bf16.mxu0 %v2784
    %3588 = vmatpush1.bf16.msra.mxu0 %v2783
    %3589 = vmatprep.subr.bf16.mxu0 %v2788
    %3590 = vmatpush1.bf16.msra.mxu0 %v2787
    %3591 = vmatprep.subr.bf16.mxu0 %v2792
    %3592 = vmatpush1.bf16.msra.mxu0 %v2791
    %3593 = vmatprep.subr.bf16.mxu0 %v2796
    %3594 = vmatpush1.bf16.msra.mxu0 %v2795
    %3595 = vmatprep.subr.bf16.mxu0 %v2800
    %3596 = vmatpush1.bf16.msra.mxu0 %v2799
    %3597 = vmatprep.subr.bf16.mxu0 %v2804
    %3598 = vmatpush1.bf16.msra.mxu0 %v2803
    %3599 = vmatprep.subr.bf16.mxu0 %v2808
    %3600 = vmatpush1.bf16.msra.mxu0 %v2807
    %3601 = vmatprep.subr.bf16.mxu0 %v2812
    %3602 = vmatpush1.bf16.msra.mxu0 %v2811
    %3603 = vmatprep.subr.bf16.mxu0 %v2816
    %3604 = vmatpush1.bf16.msra.mxu0 %v2815
    %3605 = vmatprep.subr.bf16.mxu0 %v2820
    %3606 = vmatpush1.bf16.msra.mxu0 %v2819
    %3607 = vmatprep.subr.bf16.mxu0 %v2824
    %3608 = vmatpush1.bf16.msra.mxu0 %v2823
    %3609 = vmatprep.subr.bf16.mxu0 %v2828
    %3610 = vmatpush1.bf16.msra.mxu0 %v2827
    %3611 = vmatprep.subr.bf16.mxu0 %v2832
    %3612 = vmatpush1.bf16.msra.mxu0 %v2831
    %3613 = vmatprep.subr.bf16.mxu0 %v2836
    %3614 = vmatpush1.bf16.msra.mxu0 %v2835
    %3615 = vmatprep.subr.bf16.mxu0 %v2840
    %3616 = vmatpush1.bf16.msra.mxu0 %v2839
    %3617 = vmatprep.subr.bf16.mxu0 %v2844
    %3618 = vmatpush1.bf16.msra.mxu0 %v2843
    %3619 = vmatprep.mubr.bf16.mxu0 %v708
    %3620 = vmatmul.mubr.bf16.gmra.mrb[0].mxu0 %v707
    %v3621 = vpop.f32.mrb[0].mxu0
    %v3622 = vadd.f32 %v3581, %v3621
    %v3623 = vpop.f32.mrb[0].mxu0
    %v3624 = vadd.f32 %v3583, %v3623
    %v3625 = vpop.f32.mrb[0].mxu0
    %v3626 = vpop.f32.mrb[0].mxu0
    %3627 = vdwg.mxu0
    %3628 = vmatprep.subr.bf16.mxu0 %v2848
    %3629 = vmatpush1.bf16.msra.mxu0 %v2847
    %3630 = vmatprep.subr.bf16.mxu0 %v2852
    %3631 = vmatpush1.bf16.msra.mxu0 %v2851
    %3632 = vmatprep.subr.bf16.mxu0 %v2856
    %3633 = vmatpush1.bf16.msra.mxu0 %v2855
    %3634 = vmatprep.subr.bf16.mxu0 %v2860
    %3635 = vmatpush1.bf16.msra.mxu0 %v2859
    %3636 = vmatprep.subr.bf16.mxu0 %v2864
    %3637 = vmatpush1.bf16.msra.mxu0 %v2863
    %3638 = vmatprep.subr.bf16.mxu0 %v2868
    %3639 = vmatpush1.bf16.msra.mxu0 %v2867
    %3640 = vmatprep.subr.bf16.mxu0 %v2872
    %3641 = vmatpush1.bf16.msra.mxu0 %v2871
    %3642 = vmatprep.subr.bf16.mxu0 %v2876
    %3643 = vmatpush1.bf16.msra.mxu0 %v2875
    %3644 = vmatprep.subr.bf16.mxu0 %v2880
    %3645 = vmatpush1.bf16.msra.mxu0 %v2879
    %3646 = vmatprep.subr.bf16.mxu0 %v2884
    %3647 = vmatpush1.bf16.msra.mxu0 %v2883
    %3648 = vmatprep.subr.bf16.mxu0 %v2888
    %3649 = vmatpush1.bf16.msra.mxu0 %v2887
    %3650 = vmatprep.subr.bf16.mxu0 %v2892
    %3651 = vmatpush1.bf16.msra.mxu0 %v2891
    %3652 = vmatprep.subr.bf16.mxu0 %v2896
    %3653 = vmatpush1.bf16.msra.mxu0 %v2895
    %3654 = vmatprep.subr.bf16.mxu0 %v2900
    %3655 = vmatpush1.bf16.msra.mxu0 %v2899
    %3656 = vmatprep.subr.bf16.mxu0 %v2904
    %3657 = vmatpush1.bf16.msra.mxu0 %v2903
    %3658 = vmatprep.subr.bf16.mxu0 %v2908
    %3659 = vmatpush1.bf16.msra.mxu0 %v2907
    %3660 = vmatprep.mubr.bf16.mxu0 %v710
    %3661 = vmatmul.mubr.bf16.gmra.mrb[0].mxu0 %v709
    %v3662 = vpop.f32.mrb[0].mxu0
    %v3663 = vadd.f32 %v3622, %v3662
    %v3664 = vpop.f32.mrb[0].mxu0
    %v3665 = vadd.f32 %v3624, %v3664
    %v3666 = vpop.f32.mrb[0].mxu0
    %v3667 = vpop.f32.mrb[0].mxu0
    %3668 = vdwg.mxu0
    %3669 = vmatprep.subr.bf16.mxu0 %v2912
    %3670 = vmatpush1.bf16.msra.mxu0 %v2911
    %3671 = vmatprep.subr.bf16.mxu0 %v2916
    %3672 = vmatpush1.bf16.msra.mxu0 %v2915
    %3673 = vmatprep.subr.bf16.mxu0 %v2920
    %3674 = vmatpush1.bf16.msra.mxu0 %v2919
    %3675 = vmatprep.subr.bf16.mxu0 %v2924
    %3676 = vmatpush1.bf16.msra.mxu0 %v2923
    %3677 = vmatprep.subr.bf16.mxu0 %v2928
    %3678 = vmatpush1.bf16.msra.mxu0 %v2927
    %3679 = vmatprep.subr.bf16.mxu0 %v2932
    %3680 = vmatpush1.bf16.msra.mxu0 %v2931
    %3681 = vmatprep.subr.bf16.mxu0 %v2936
    %3682 = vmatpush1.bf16.msra.mxu0 %v2935
    %3683 = vmatprep.subr.bf16.mxu0 %v2940
    %3684 = vmatpush1.bf16.msra.mxu0 %v2939
    %3685 = vmatprep.subr.bf16.mxu0 %v2944
    %3686 = vmatpush1.bf16.msra.mxu0 %v2943
    %3687 = vmatprep.subr.bf16.mxu0 %v2948
    %3688 = vmatpush1.bf16.msra.mxu0 %v2947
    %3689 = vmatprep.subr.bf16.mxu0 %v2952
    %3690 = vmatpush1.bf16.msra.mxu0 %v2951
    %3691 = vmatprep.subr.bf16.mxu0 %v2956
    %3692 = vmatpush1.bf16.msra.mxu0 %v2955
    %3693 = vmatprep.subr.bf16.mxu0 %v2960
    %3694 = vmatpush1.bf16.msra.mxu0 %v2959
    %3695 = vmatprep.subr.bf16.mxu0 %v2964
    %3696 = vmatpush1.bf16.msra.mxu0 %v2963
    %3697 = vmatprep.subr.bf16.mxu0 %v2968
    %3698 = vmatpush1.bf16.msra.mxu0 %v2967
    %3699 = vmatprep.subr.bf16.mxu0 %v2972
    %3700 = vmatpush1.bf16.msra.mxu0 %v2971
    %3701 = vmatprep.mubr.bf16.mxu0 %v712
    %3702 = vmatmul.mubr.bf16.gmra.mrb[0].mxu0 %v711
    %v3703 = vpop.f32.mrb[0].mxu0
    %v3704 = vadd.f32 %v3663, %v3703
    %v3705 = vpop.f32.mrb[0].mxu0
    %v3706 = vadd.f32 %v3665, %v3705
    %v3707 = vpop.f32.mrb[0].mxu0
    %v3708 = vpop.f32.mrb[0].mxu0
    %3709 = vdwg.mxu0
    %3710 = vmatprep.subr.bf16.mxu0 %v2530
    %3711 = vmatpush1.bf16.msra.mxu0 %v2529
    %3712 = vmatprep.subr.bf16.mxu0 %v2534
    %3713 = vmatpush1.bf16.msra.mxu0 %v2533
    %3714 = vmatprep.subr.bf16.mxu0 %v2538
    %3715 = vmatpush1.bf16.msra.mxu0 %v2537
    %3716 = vmatprep.subr.bf16.mxu0 %v2542
    %3717 = vmatpush1.bf16.msra.mxu0 %v2541
    %3718 = vmatprep.subr.bf16.mxu0 %v2546
    %3719 = vmatpush1.bf16.msra.mxu0 %v2545
    %3720 = vmatprep.subr.bf16.mxu0 %v2550
    %3721 = vmatpush1.bf16.msra.mxu0 %v2549
    %3722 = vmatprep.subr.bf16.mxu0 %v2554
    %3723 = vmatpush1.bf16.msra.mxu0 %v2553
    %3724 = vmatprep.subr.bf16.mxu0 %v2558
    %3725 = vmatpush1.bf16.msra.mxu0 %v2557
    %3726 = vmatprep.subr.bf16.mxu0 %v2562
    %3727 = vmatpush1.bf16.msra.mxu0 %v2561
    %3728 = vmatprep.subr.bf16.mxu0 %v2566
    %3729 = vmatpush1.bf16.msra.mxu0 %v2565
    %3730 = vmatprep.subr.bf16.mxu0 %v2570
    %3731 = vmatpush1.bf16.msra.mxu0 %v2569
    %3732 = vmatprep.subr.bf16.mxu0 %v2574
    %3733 = vmatpush1.bf16.msra.mxu0 %v2573
    %3734 = vmatprep.subr.bf16.mxu0 %v2578
    %3735 = vmatpush1.bf16.msra.mxu0 %v2577
    %3736 = vmatprep.subr.bf16.mxu0 %v2582
    %3737 = vmatpush1.bf16.msra.mxu0 %v2581
    %3738 = vmatprep.subr.bf16.mxu0 %v2586
    %3739 = vmatpush1.bf16.msra.mxu0 %v2585
    %3740 = vmatprep.subr.bf16.mxu0 %v2590
    %3741 = vmatpush1.bf16.msra.mxu0 %v2589
    %3742 = vmatprep.mubr.bf16.mxu0 %v700
    %3743 = vmatmul.mubr.bf16.gmra.mrb[0].mxu0 %v699
    %v3744 = vpop.f32.mrb[0].mxu0
    %v3745 = vadd.f32 %v1174, %v3744
    %v3746 = vpop.f32.mrb[0].mxu0
    %v3747 = vadd.f32 %v1178, %v3746
    %v3748 = vpop.f32.mrb[0].mxu0
    %v3749 = vpop.f32.mrb[0].mxu0
    %3750 = vdwg.mxu0
    %3751 = vmatprep.subr.bf16.mxu0 %v2594
    %3752 = vmatpush1.bf16.msra.mxu0 %v2593
    %3753 = vmatprep.subr.bf16.mxu0 %v2598
    %3754 = vmatpush1.bf16.msra.mxu0 %v2597
    %3755 = vmatprep.subr.bf16.mxu0 %v2602
    %3756 = vmatpush1.bf16.msra.mxu0 %v2601
    %3757 = vmatprep.subr.bf16.mxu0 %v2606
    %3758 = vmatpush1.bf16.msra.mxu0 %v2605
    %3759 = vmatprep.subr.bf16.mxu0 %v2610
    %3760 = vmatpush1.bf16.msra.mxu0 %v2609
    %3761 = vmatprep.subr.bf16.mxu0 %v2614
    %3762 = vmatpush1.bf16.msra.mxu0 %v2613
    %3763 = vmatprep.subr.bf16.mxu0 %v2618
    %3764 = vmatpush1.bf16.msra.mxu0 %v2617
    %3765 = vmatprep.subr.bf16.mxu0 %v2622
    %3766 = vmatpush1.bf16.msra.mxu0 %v2621
    %3767 = vmatprep.subr.bf16.mxu0 %v2626
    %3768 = vmatpush1.bf16.msra.mxu0 %v2625
    %3769 = vmatprep.subr.bf16.mxu0 %v2630
    %3770 = vmatpush1.bf16.msra.mxu0 %v2629
    %3771 = vmatprep.subr.bf16.mxu0 %v2634
    %3772 = vmatpush1.bf16.msra.mxu0 %v2633
    %3773 = vmatprep.subr.bf16.mxu0 %v2638
    %3774 = vmatpush1.bf16.msra.mxu0 %v2637
    %3775 = vmatprep.subr.bf16.mxu0 %v2642
    %3776 = vmatpush1.bf16.msra.mxu0 %v2641
    %3777 = vmatprep.subr.bf16.mxu0 %v2646
    %3778 = vmatpush1.bf16.msra.mxu0 %v2645
    %3779 = vmatprep.subr.bf16.mxu0 %v2650
    %3780 = vmatpush1.bf16.msra.mxu0 %v2649
    %3781 = vmatprep.subr.bf16.mxu0 %v2654
    %3782 = vmatpush1.bf16.msra.mxu0 %v2653
    %3783 = vmatprep.mubr.bf16.mxu0 %v702
    %3784 = vmatmul.mubr.bf16.gmra.mrb[0].mxu0 %v701
    %v3785 = vpop.f32.mrb[0].mxu0
    %v3786 = vadd.f32 %v3745, %v3785
    %v3787 = vpop.f32.mrb[0].mxu0
    %v3788 = vadd.f32 %v3747, %v3787
    %v3789 = vpop.f32.mrb[0].mxu0
    %v3790 = vpop.f32.mrb[0].mxu0
    %3791 = vdwg.mxu0
    %3792 = vmatprep.subr.bf16.mxu0 %v2658
    %3793 = vmatpush1.bf16.msra.mxu0 %v2657
    %3794 = vmatprep.subr.bf16.mxu0 %v2662
    %3795 = vmatpush1.bf16.msra.mxu0 %v2661
    %3796 = vmatprep.subr.bf16.mxu0 %v2666
    %3797 = vmatpush1.bf16.msra.mxu0 %v2665
    %3798 = vmatprep.subr.bf16.mxu0 %v2670
    %3799 = vmatpush1.bf16.msra.mxu0 %v2669
    %3800 = vmatprep.subr.bf16.mxu0 %v2674
    %3801 = vmatpush1.bf16.msra.mxu0 %v2673
    %3802 = vmatprep.subr.bf16.mxu0 %v2678
    %3803 = vmatpush1.bf16.msra.mxu0 %v2677
    %3804 = vmatprep.subr.bf16.mxu0 %v2682
    %3805 = vmatpush1.bf16.msra.mxu0 %v2681
    %3806 = vmatprep.subr.bf16.mxu0 %v2686
    %3807 = vmatpush1.bf16.msra.mxu0 %v2685
    %3808 = vmatprep.subr.bf16.mxu0 %v2690
    %3809 = vmatpush1.bf16.msra.mxu0 %v2689
    %3810 = vmatprep.subr.bf16.mxu0 %v2694
    %3811 = vmatpush1.bf16.msra.mxu0 %v2693
    %3812 = vmatprep.subr.bf16.mxu0 %v2698
    %3813 = vmatpush1.bf16.msra.mxu0 %v2697
    %3814 = vmatprep.subr.bf16.mxu0 %v2702
    %3815 = vmatpush1.bf16.msra.mxu0 %v2701
    %3816 = vmatprep.subr.bf16.mxu0 %v2706
    %3817 = vmatpush1.bf16.msra.mxu0 %v2705
    %3818 = vmatprep.subr.bf16.mxu0 %v2710
    %3819 = vmatpush1.bf16.msra.mxu0 %v2709
    %3820 = vmatprep.subr.bf16.mxu0 %v2714
    %3821 = vmatpush1.bf16.msra.mxu0 %v2713
    %3822 = vmatprep.subr.bf16.mxu0 %v2718
    %3823 = vmatpush1.bf16.msra.mxu0 %v2717
    %3824 = vmatprep.mubr.bf16.mxu0 %v704
    %3825 = vmatmul.mubr.bf16.gmra.mrb[0].mxu0 %v703
    %v3826 = vpop.f32.mrb[0].mxu0
    %v3827 = vadd.f32 %v3786, %v3826
    %v3828 = vpop.f32.mrb[0].mxu0
    %v3829 = vadd.f32 %v3788, %v3828
    %v3830 = vpop.f32.mrb[0].mxu0
    %v3831 = vpop.f32.mrb[0].mxu0
    %3832 = vdwg.mxu0
    %3833 = vmatprep.subr.bf16.mxu0 %v2722
    %3834 = vmatpush1.bf16.msra.mxu0 %v2721
    %3835 = vmatprep.subr.bf16.mxu0 %v2726
    %3836 = vmatpush1.bf16.msra.mxu0 %v2725
    %3837 = vmatprep.subr.bf16.mxu0 %v2730
    %3838 = vmatpush1.bf16.msra.mxu0 %v2729
    %3839 = vmatprep.subr.bf16.mxu0 %v2734
    %3840 = vmatpush1.bf16.msra.mxu0 %v2733
    %3841 = vmatprep.subr.bf16.mxu0 %v2738
    %3842 = vmatpush1.bf16.msra.mxu0 %v2737
    %3843 = vmatprep.subr.bf16.mxu0 %v2742
    %3844 = vmatpush1.bf16.msra.mxu0 %v2741
    %3845 = vmatprep.subr.bf16.mxu0 %v2746
    %3846 = vmatpush1.bf16.msra.mxu0 %v2745
    %3847 = vmatprep.subr.bf16.mxu0 %v2750
    %3848 = vmatpush1.bf16.msra.mxu0 %v2749
    %3849 = vmatprep.subr.bf16.mxu0 %v2754
    %3850 = vmatpush1.bf16.msra.mxu0 %v2753
    %3851 = vmatprep.subr.bf16.mxu0 %v2758
    %3852 = vmatpush1.bf16.msra.mxu0 %v2757
    %3853 = vmatprep.subr.bf16.mxu0 %v2762
    %3854 = vmatpush1.bf16.msra.mxu0 %v2761
    %3855 = vmatprep.subr.bf16.mxu0 %v2766
    %3856 = vmatpush1.bf16.msra.mxu0 %v2765
    %3857 = vmatprep.subr.bf16.mxu0 %v2770
    %3858 = vmatpush1.bf16.msra.mxu0 %v2769
    %3859 = vmatprep.subr.bf16.mxu0 %v2774
    %3860 = vmatpush1.bf16.msra.mxu0 %v2773
    %3861 = vmatprep.subr.bf16.mxu0 %v2778
    %3862 = vmatpush1.bf16.msra.mxu0 %v2777
    %3863 = vmatprep.subr.bf16.mxu0 %v2782
    %3864 = vmatpush1.bf16.msra.mxu0 %v2781
    %3865 = vmatprep.mubr.bf16.mxu0 %v706
    %3866 = vmatmul.mubr.bf16.gmra.mrb[0].mxu0 %v705
    %v3867 = vpop.f32.mrb[0].mxu0
    %v3868 = vadd.f32 %v3827, %v3867
    %v3869 = vpop.f32.mrb[0].mxu0
    %v3870 = vadd.f32 %v3829, %v3869
    %v3871 = vpop.f32.mrb[0].mxu0
    %v3872 = vpop.f32.mrb[0].mxu0
    %3873 = vdwg.mxu0
    %3874 = vmatprep.subr.bf16.mxu0 %v2786
    %3875 = vmatpush1.bf16.msra.mxu0 %v2785
    %3876 = vmatprep.subr.bf16.mxu0 %v2790
    %3877 = vmatpush1.bf16.msra.mxu0 %v2789
    %3878 = vmatprep.subr.bf16.mxu0 %v2794
    %3879 = vmatpush1.bf16.msra.mxu0 %v2793
    %3880 = vmatprep.subr.bf16.mxu0 %v2798
    %3881 = vmatpush1.bf16.msra.mxu0 %v2797
    %3882 = vmatprep.subr.bf16.mxu0 %v2802
    %3883 = vmatpush1.bf16.msra.mxu0 %v2801
    %3884 = vmatprep.subr.bf16.mxu0 %v2806
    %3885 = vmatpush1.bf16.msra.mxu0 %v2805
    %3886 = vmatprep.subr.bf16.mxu0 %v2810
    %3887 = vmatpush1.bf16.msra.mxu0 %v2809
    %3888 = vmatprep.subr.bf16.mxu0 %v2814
    %3889 = vmatpush1.bf16.msra.mxu0 %v2813
    %3890 = vmatprep.subr.bf16.mxu0 %v2818
    %3891 = vmatpush1.bf16.msra.mxu0 %v2817
    %3892 = vmatprep.subr.bf16.mxu0 %v2822
    %3893 = vmatpush1.bf16.msra.mxu0 %v2821
    %3894 = vmatprep.subr.bf16.mxu0 %v2826
    %3895 = vmatpush1.bf16.msra.mxu0 %v2825
    %3896 = vmatprep.subr.bf16.mxu0 %v2830
    %3897 = vmatpush1.bf16.msra.mxu0 %v2829
    %3898 = vmatprep.subr.bf16.mxu0 %v2834
    %3899 = vmatpush1.bf16.msra.mxu0 %v2833
    %3900 = vmatprep.subr.bf16.mxu0 %v2838
    %3901 = vmatpush1.bf16.msra.mxu0 %v2837
    %3902 = vmatprep.subr.bf16.mxu0 %v2842
    %3903 = vmatpush1.bf16.msra.mxu0 %v2841
    %3904 = vmatprep.subr.bf16.mxu0 %v2846
    %3905 = vmatpush1.bf16.msra.mxu0 %v2845
    %3906 = vmatprep.mubr.bf16.mxu0 %v708
    %3907 = vmatmul.mubr.bf16.gmra.mrb[0].mxu0 %v707
    %v3908 = vpop.f32.mrb[0].mxu0
    %v3909 = vadd.f32 %v3868, %v3908
    %v3910 = vpop.f32.mrb[0].mxu0
    %v3911 = vadd.f32 %v3870, %v3910
    %v3912 = vpop.f32.mrb[0].mxu0
    %v3913 = vpop.f32.mrb[0].mxu0
    %3914 = vdwg.mxu0
    %3915 = vmatprep.subr.bf16.mxu0 %v2850
    %3916 = vmatpush1.bf16.msra.mxu0 %v2849
    %3917 = vmatprep.subr.bf16.mxu0 %v2854
    %3918 = vmatpush1.bf16.msra.mxu0 %v2853
    %3919 = vmatprep.subr.bf16.mxu0 %v2858
    %3920 = vmatpush1.bf16.msra.mxu0 %v2857
    %3921 = vmatprep.subr.bf16.mxu0 %v2862
    %3922 = vmatpush1.bf16.msra.mxu0 %v2861
    %3923 = vmatprep.subr.bf16.mxu0 %v2866
    %3924 = vmatpush1.bf16.msra.mxu0 %v2865
    %3925 = vmatprep.subr.bf16.mxu0 %v2870
    %3926 = vmatpush1.bf16.msra.mxu0 %v2869
    %3927 = vmatprep.subr.bf16.mxu0 %v2874
    %3928 = vmatpush1.bf16.msra.mxu0 %v2873
    %3929 = vmatprep.subr.bf16.mxu0 %v2878
    %3930 = vmatpush1.bf16.msra.mxu0 %v2877
    %3931 = vmatprep.subr.bf16.mxu0 %v2882
    %3932 = vmatpush1.bf16.msra.mxu0 %v2881
    %3933 = vmatprep.subr.bf16.mxu0 %v2886
    %3934 = vmatpush1.bf16.msra.mxu0 %v2885
    %3935 = vmatprep.subr.bf16.mxu0 %v2890
    %3936 = vmatpush1.bf16.msra.mxu0 %v2889
    %3937 = vmatprep.subr.bf16.mxu0 %v2894
    %3938 = vmatpush1.bf16.msra.mxu0 %v2893
    %3939 = vmatprep.subr.bf16.mxu0 %v2898
    %3940 = vmatpush1.bf16.msra.mxu0 %v2897
    %3941 = vmatprep.subr.bf16.mxu0 %v2902
    %3942 = vmatpush1.bf16.msra.mxu0 %v2901
    %3943 = vmatprep.subr.bf16.mxu0 %v2906
    %3944 = vmatpush1.bf16.msra.mxu0 %v2905
    %3945 = vmatprep.subr.bf16.mxu0 %v2910
    %3946 = vmatpush1.bf16.msra.mxu0 %v2909
    %3947 = vmatprep.mubr.bf16.mxu0 %v710
    %3948 = vmatmul.mubr.bf16.gmra.mrb[0].mxu0 %v709
    %v3949 = vpop.f32.mrb[0].mxu0
    %v3950 = vadd.f32 %v3909, %v3949
    %v3951 = vpop.f32.mrb[0].mxu0
    %v3952 = vadd.f32 %v3911, %v3951
    %v3953 = vpop.f32.mrb[0].mxu0
    %v3954 = vpop.f32.mrb[0].mxu0
    %3955 = vdwg.mxu0
    %3956 = vmatprep.subr.bf16.mxu0 %v2914
    %3957 = vmatpush1.bf16.msra.mxu0 %v2913
    %3958 = vmatprep.subr.bf16.mxu0 %v2918
    %3959 = vmatpush1.bf16.msra.mxu0 %v2917
    %3960 = vmatprep.subr.bf16.mxu0 %v2922
    %3961 = vmatpush1.bf16.msra.mxu0 %v2921
    %3962 = vmatprep.subr.bf16.mxu0 %v2926
    %3963 = vmatpush1.bf16.msra.mxu0 %v2925
    %3964 = vmatprep.subr.bf16.mxu0 %v2930
    %3965 = vmatpush1.bf16.msra.mxu0 %v2929
    %3966 = vmatprep.subr.bf16.mxu0 %v2934
    %3967 = vmatpush1.bf16.msra.mxu0 %v2933
    %3968 = vmatprep.subr.bf16.mxu0 %v2938
    %3969 = vmatpush1.bf16.msra.mxu0 %v2937
    %3970 = vmatprep.subr.bf16.mxu0 %v2942
    %3971 = vmatpush1.bf16.msra.mxu0 %v2941
    %3972 = vmatprep.subr.bf16.mxu0 %v2946
    %3973 = vmatpush1.bf16.msra.mxu0 %v2945
    %3974 = vmatprep.subr.bf16.mxu0 %v2950
    %3975 = vmatpush1.bf16.msra.mxu0 %v2949
    %3976 = vmatprep.subr.bf16.mxu0 %v2954
    %3977 = vmatpush1.bf16.msra.mxu0 %v2953
    %3978 = vmatprep.subr.bf16.mxu0 %v2958
    %3979 = vmatpush1.bf16.msra.mxu0 %v2957
    %3980 = vmatprep.subr.bf16.mxu0 %v2962
    %3981 = vmatpush1.bf16.msra.mxu0 %v2961
    %3982 = vmatprep.subr.bf16.mxu0 %v2966
    %3983 = vmatpush1.bf16.msra.mxu0 %v2965
    %3984 = vmatprep.subr.bf16.mxu0 %v2970
    %3985 = vmatpush1.bf16.msra.mxu0 %v2969
    %3986 = vmatprep.subr.bf16.mxu0 %v2974
    %3987 = vmatpush1.bf16.msra.mxu0 %v2973
    %3988 = vmatprep.mubr.bf16.mxu0 %v712
    %3989 = vmatmul.mubr.bf16.gmra.mrb[0].mxu0 %v711
    %v3990 = vpop.f32.mrb[0].mxu0
    %v3991 = vadd.f32 %v3950, %v3990
    %v3992 = vpop.f32.mrb[0].mxu0
    %v3993 = vadd.f32 %v3952, %v3992
    %v3994 = vpop.f32.mrb[0].mxu0
    %v3995 = vpop.f32.mrb[0].mxu0
    %3996 = vdwg.mxu0
    %v4001 = vrot.slane %v3704, 2
    %v4002 = vrot.slane %v3706, 2
    %v4003 = vrot.slane %v3991, 2
    %v4004 = vrot.slane %v3993, 2
    %v4009 = vmul.f32 %v3704, %v4001
    %v4010 = vmul.f32 %v3706, %v4002
    %v4011 = vmul.f32 %v3991, %v4003
    %v4012 = vmul.f32 %v3993, %v4004
    %vm4013 = vcmask 1041408
    %v4014 = vsel %vm4013, %v4009, 0.0
    %v4015 = vsel %vm4013, %v4010, 0.0
    %v4016 = vadd.f32 %v4014, %v4015
    %v4017 = vsel %vm4013, %v4011, 0.0
    %v4018 = vadd.f32 %v4016, %v4017
    %v4019 = vsel %vm4013, %v4012, 0.0
    %v4020 = vadd.f32 %v4018, %v4019
    %4021 = vadd.xlane.f32.xlu0 %v4020
    %v4022 = vpop.xlane.xlu0 %4021
    %v4023 = vsub.f32 1.0, %v4022
    %vm4024 = vcmask 1024
    %v4025 = vsel %vm4024, %v4023, 0.0
    %4026 = vadd.xlane.f32.xlu0 %v4025
    %v4027 = vpop.xlane.xlu0 %4026
    %v4028 = vrot.slane %v4027, 4
    %v4029 = vadd.f32 %v4027, %v4028
    %v4030 = vrot.slane %v4029, 2
    %v4031 = vadd.f32 %v4029, %v4030
    %v4032 = vrot.slane %v4031, 1
    %v4033 = vadd.f32 %v4031, %v4032
    %s4034 = vtos %v4033
    %s4035 = smul.f32 %s4034, 0.5
    %s4036 = scalar_lea.smem [#allocation3], 0
    %4037 = sst [smem:[%s4036]] %s4035
    // Predicated region
    $region18: #{id_loss_forward.1} parent=1 // pred_check
      _
    $region19: #{id_loss_forward.1} parent=1 // pred_check_branch
      %4039 = sbr.rel (0) target = $region21
    $region20: #{id_loss_forward.1} parent=1 // pred_region
      %s4041 = ssub.s32 16, 16
      %4042 = vsyncadd [#allocation4], %s4041
      %4045 = dma.smem_to_hbm [#allocation3], 16, %s4, [#allocation4]
    $region21: #{id_loss_forward.1} parent=1 // pred_fallthru
      _
    // Predicated region
    $region22: #{id_loss_forward.1} parent=1 // pred_check
      _
    $region23: #{id_loss_forward.1} parent=1 // pred_check_branch
      %4047 = sbr.rel (0) target = $region25
    $region24: #{id_loss_forward.1} parent=1 // pred_region
      %4048 = dma.done [#allocation4], 16
    $region25: #{id_loss_forward.1} parent=1 // pred_fallthru
      _
    %4049 = sfence
    %4050 = vsyncpa [#allocation4], 1

</llo_original>
